<compile_context>
chip_gen: v6e
topology: v6e:2x2x1
jax: 0.10.0
libtpu: 0.0.40
codegen_flags: <defaults>
</compile_context>

<pallas_src>
import functools

import jax
import jax.numpy as jnp
from jax.experimental import pallas as pl
from jax.experimental.pallas import tpu as pltpu

EMB_DIM = 50
DICT_SIZE = 53 + 3 + 16      # 72 vocabulary entries
DICT_PAD = 128               # per-token one-hot block, padded to one lane group
LANE = 128
MAX_BATCH_TILE = 512


def _round_up(x, m):
    return (x + m - 1) // m * m


def _pick_batch_tile(batch):
    """Batch tile up to 512 rows; always >= 2 grid steps once padded batch > 128
    so v7x's two TensorCores both get work on the 'parallel' batch axis."""
    b_ceil = _round_up(max(batch, 1), 128)
    tile = min(MAX_BATCH_TILE, max(128, (b_ceil // 2 // 128) * 128))
    b_pad = _round_up(b_ceil, tile)
    return tile, b_pad


def dqn_kernel(idx_ref,
               m_ref, b1_ref,
               w2_ref, b2_ref,
               w3_ref, b3_ref,
               w4_ref, b4_ref,
               w5_ref, b5_ref,
               wo_ref, bo_ref,
               out_ref,
               oh_ref):
    """Fused embedding + residual MLP for one batch tile (all matmuls on the MXU)."""
    bt = idx_ref.shape[0]          # batch-tile rows
    n_tok = idx_ref.shape[1]       # input_size (static, small)

    # ---- Fused embedding lookup ------------------------------------------------
    # Flat one-hot: lane j = p*128 + d is 1 iff idx[b, p] == d.  A single matmul of
    # this (bt, n_tok*128) one-hot against the flattened folded matrix
    # m[p*128 + d, :] = emb[d] @ W1[p*EMB:(p+1)*EMB, :] is exactly
    # gather(emb, idx) -> flatten -> @ W1, done as ONE K = n_tok*128 contraction.
    idx = idx_ref[...]                                                   # (bt, n_tok) i32
    tok_iota = jax.lax.broadcasted_iota(jnp.int32, (bt, DICT_PAD), 1)    # (bt, 128)
    for p in range(n_tok):                                               # static & tiny
        oh_ref[:, pl.ds(p * DICT_PAD, DICT_PAD)] = jnp.where(
            tok_iota == idx[:, p:p + 1], 1.0, 0.0).astype(jnp.bfloat16)

    acc = jnp.dot(oh_ref[...], m_ref[...], preferred_element_type=jnp.float32)

    def lin(h_bf16, w_ref, b_ref):
        # bf16 operands into the MXU, f32 accumulation, bias add in f32.
        return jnp.dot(h_bf16, w_ref[...],
                       preferred_element_type=jnp.float32) + b_ref[...]

    x1 = jnp.maximum(acc + b1_ref[...], 0.0)                  # (bt, 256) f32
    x1b = x1.astype(jnp.bfloat16)                              # single bf16 copy: MXU op + residual
    x2 = jnp.maximum(lin(x1b, w2_ref, b2_ref), 0.0)            # (bt, 128) f32
    x2b = x2.astype(jnp.bfloat16)
    x3 = jnp.maximum(lin(x2b, w3_ref, b3_ref), 0.0)            # (bt, 128)
    x4 = jnp.maximum(lin(x3.astype(jnp.bfloat16), w4_ref, b4_ref) + x2b, 0.0)
    x5 = jnp.maximum(lin(x4.astype(jnp.bfloat16), w5_ref, b5_ref) + x1b, 0.0)
    out_ref[...] = lin(x5.astype(jnp.bfloat16), wo_ref, bo_ref)   # (bt, 128) lane-dense


def init_params(key, input_size, hidden_size=60, output_size=52):
    """Deterministic synthetic f32 parameters (shapes match the PyTorch module)."""
    layer_dims = [
        (input_size * EMB_DIM, hidden_size * 4),   # hidden_layer1
        (hidden_size * 4,       hidden_size * 2),  # hidden_layer2
        (hidden_size * 2,       hidden_size),      # hidden_layer3
        (hidden_size,           hidden_size * 2),  # hidden_layer4
        (hidden_size * 2,       hidden_size * 4),  # hidden_layer5
        (hidden_size * 4,       output_size),      # output_layer
    ]
    keys = jax.random.split(key, 1 + 2 * len(layer_dims))
    emb_table = jax.random.normal(keys[0], (DICT_SIZE, EMB_DIM), jnp.float32)
    params = []
    for i, (fan_in, fan_out) in enumerate(layer_dims):
        bound = 1.0 / (fan_in ** 0.5)
        w = jax.random.uniform(keys[1 + 2 * i], (fan_in, fan_out), jnp.float32,
                               minval=-bound, maxval=bound)
        b = jax.random.uniform(keys[2 + 2 * i], (1, fan_out), jnp.float32,
                               minval=-bound, maxval=bound)
        params += [w, b]
    return emb_table, params


def prepare_params(emb_table, params, input_size):
    """One-time repack: fold embedding into layer 1 (f32), flatten to a single
    (input_size*128, hidden*4) matrix, pad everything to lane multiples, bf16 weights."""
    (w1, b1, w2, b2, w3, b3, w4, b4, w5, b5, wo, bo) = params
    assert DICT_SIZE <= DICT_PAD, "token ids must fit the 128-wide one-hot block"

    def pad_w(w):
        r = _round_up(w.shape[0], LANE)
        c = _round_up(w.shape[1], LANE)
        return jnp.pad(w, ((0, r - w.shape[0]), (0, c - w.shape[1]))).astype(jnp.bfloat16)

    def pad_b(b):
        c = _round_up(b.shape[1], LANE)
        return jnp.pad(b, ((0, 0), (0, c - b.shape[1])))           # biases stay f32

    h1 = w1.shape[1]
    h1p = _round_up(h1, LANE)
    w1_r = w1.reshape(input_size, EMB_DIM, h1)
    m = jnp.einsum("de,leh->ldh", emb_table, w1_r)                  # (L, 72, 240), folded in f32
    m = jnp.pad(m, ((0, 0), (0, DICT_PAD - DICT_SIZE), (0, h1p - h1)))
    m_flat = m.reshape(input_size * DICT_PAD, h1p).astype(jnp.bfloat16)

    return (m_flat, pad_b(b1),
            pad_w(w2), pad_b(b2),
            pad_w(w3), pad_b(b3),
            pad_w(w4), pad_b(b4),
            pad_w(w5), pad_b(b5),
            pad_w(wo), pad_b(bo))


@functools.partial(jax.jit, static_argnames=("output_size",))
def dqn_forward(x_idx, prepared, output_size=52):
    (m, b1, w2, b2, w3, b3, w4, b4, w5, b5, wo, bo) = prepared
    x_idx = x_idx.astype(jnp.int32)
    B, L = x_idx.shape
    tile, b_pad = _pick_batch_tile(B)
    idx_padded = jnp.pad(x_idx, ((0, b_pad - B), (0, 0)))
    out_pad = wo.shape[1]

    def const_spec(shape):
        return pl.BlockSpec(shape, lambda i, _n=len(shape): (0,) * _n)

    in_specs = [
        pl.BlockSpec((tile, L), lambda i: (i, 0)),            # token indices per tile
        const_spec(m.shape), const_spec(b1.shape),            # weights/biases VMEM-resident
        const_spec(w2.shape), const_spec(b2.shape),
        const_spec(w3.shape), const_spec(b3.shape),
        const_spec(w4.shape), const_spec(b4.shape),
        const_spec(w5.shape), const_spec(b5.shape),
        const_spec(wo.shape), const_spec(bo.shape),
    ]

    out = pl.pallas_call(
        dqn_kernel,
        out_shape=jax.ShapeDtypeStruct((b_pad, out_pad), jnp.float32),
        grid_spec=pltpu.PrefetchScalarGridSpec(
            num_scalar_prefetch=0,
            grid=(b_pad // tile,),
            in_specs=in_specs,
            out_specs=pl.BlockSpec((tile, out_pad), lambda i: (i, 0)),
            scratch_shapes=[pltpu.VMEM((tile, L * DICT_PAD), jnp.bfloat16)],
        ),
        compiler_params=pltpu.CompilerParams(
            dimension_semantics=("parallel",)),                # batch tiles -> 2 TCs on v7x
    )(idx_padded, m, b1, w2, b2, w3, b3, w4, b4, w5, b5, wo, bo)
    return out[:B, :output_size]


def dqn_reference_prepared(x_idx, prepared, output_size):
    """Plain-JAX mirror of the kernel math (bf16 weights/residuals, f32 accumulation)."""
    (m, b1, w2, b2, w3, b3, w4, b4, w5, b5, wo, bo) = prepared
    x_idx = x_idx.astype(jnp.int32)
    B, L = x_idx.shape
    flat_idx = x_idx + jnp.arange(L, dtype=jnp.int32)[None, :] * DICT_PAD
    oh = jax.nn.one_hot(flat_idx, L * DICT_PAD, dtype=jnp.float32).sum(axis=1)
    oh = oh.astype(jnp.bfloat16)

    def lin(h_bf16, w, b):
        return jnp.dot(h_bf16, w, preferred_element_type=jnp.float32) + b

    x1 = jax.nn.relu(jnp.dot(oh, m, preferred_element_type=jnp.float32) + b1)
    x1b = x1.astype(jnp.bfloat16)
    x2 = jax.nn.relu(lin(x1b, w2, b2))
    x2b = x2.astype(jnp.bfloat16)
    x3 = jax.nn.relu(lin(x2b, w3, b3))
    x4 = jax.nn.relu(lin(x3.astype(jnp.bfloat16), w4, b4) + x2b)
    x5 = jax.nn.relu(lin(x4.astype(jnp.bfloat16), w5, b5) + x1b)
    return lin(x5.astype(jnp.bfloat16), wo, bo)[:, :output_size]


def dqn_reference_f32(x_idx, emb_table, params):
    """Pure-f32 JAX mirror of the PyTorch forward (gather + matmuls)."""
    x_idx = x_idx.astype(jnp.int32)
    B = x_idx.shape[0]
    x0 = jnp.take(emb_table, x_idx, axis=0).reshape(B, -1)
    (w1, b1, w2, b2, w3, b3, w4, b4, w5, b5, wo, bo) = params
    x1 = jax.nn.relu(x0 @ w1 + b1)
    x2 = jax.nn.relu(x1 @ w2 + b2)
    x3 = jax.nn.relu(x2 @ w3 + b3)
    x4 = jax.nn.relu(x3 @ w4 + b4 + x2)
    x5 = jax.nn.relu(x4 @ w5 + b5 + x1)
    return x5 @ wo + bo


if __name__ == "__main__":
    batch = 2
    input_size = 8          # integer tokens per example
    hidden_size = 60
    output_size = 52

    root = jax.random.PRNGKey(0)
    k_params, k_x, k_x2 = jax.random.split(root, 3)

    emb_table, params = init_params(k_params, input_size, hidden_size, output_size)
    prepared = prepare_params(emb_table, params, input_size)
    x_idx = jax.random.randint(k_x, (batch, input_size), 0, DICT_SIZE, dtype=jnp.int32)

    out = dqn_forward(x_idx, prepared, output_size=output_size)
    out = jax.block_until_ready(out)
    assert out.shape == (batch, output_size)

    # Tight check against a reference doing the same bf16-weight / f32-accum math.
    ref_kernel_math = dqn_reference_prepared(x_idx, prepared, output_size)
    assert jnp.allclose(out, ref_kernel_math, rtol=1e-2, atol=1e-2), \
        "kernel mismatch vs bf16-consistent reference"

    # Looser check against the original f32 PyTorch semantics (difference = bf16
    # weight/activation-residual quantization only).
    ref_f32 = dqn_reference_f32(x_idx, emb_table, params)
    assert jnp.allclose(out, ref_f32, rtol=5e-2, atol=5e-2), \
        "kernel mismatch vs f32 PyTorch-semantics reference"

    # Exercise the multi-tile grid path (still small): batch 300 -> 3 batch tiles.
    x_big = jax.random.randint(k_x2, (300, input_size), 0, DICT_SIZE, dtype=jnp.int32)
    out_big = jax.block_until_ready(dqn_forward(x_big, prepared, output_size=output_size))
    ref_big = dqn_reference_f32(x_big, emb_table, params)
    assert out_big.shape == (300, output_size)
    assert jnp.allclose(out_big, ref_big, rtol=5e-2, atol=5e-2), \
        "multi-tile kernel mismatch vs f32 reference"

    print("KERNEL_OK")
</pallas_src>

<mosaic_0001>
module attributes {stable_mosaic.version = 11 : i64} {
  func.func @dqn_kernel(%arg0: i32, %arg1: memref<128x8xi32, #tpu.memory_space<vmem>>, %arg2: memref<1024x256xbf16, #tpu.memory_space<vmem>>, %arg3: memref<1x256xf32, #tpu.memory_space<vmem>>, %arg4: memref<256x128xbf16, #tpu.memory_space<vmem>>, %arg5: memref<1x128xf32, #tpu.memory_space<vmem>>, %arg6: memref<128x128xbf16, #tpu.memory_space<vmem>>, %arg7: memref<1x128xf32, #tpu.memory_space<vmem>>, %arg8: memref<128x128xbf16, #tpu.memory_space<vmem>>, %arg9: memref<1x128xf32, #tpu.memory_space<vmem>>, %arg10: memref<128x256xbf16, #tpu.memory_space<vmem>>, %arg11: memref<1x256xf32, #tpu.memory_space<vmem>>, %arg12: memref<256x128xbf16, #tpu.memory_space<vmem>>, %arg13: memref<1x128xf32, #tpu.memory_space<vmem>>, %arg14: memref<128x128xf32, #tpu.memory_space<vmem>>, %arg15: memref<128x1024xbf16, #tpu.memory_space<vmem>>) attributes {dimension_semantics = [#tpu.dimension_semantics<parallel>], iteration_bounds = array<i64: 1>, scalar_prefetch = 0 : i64, scratch_operands = 1 : i64, tpu.core_type = #tpu.core_type<tc>, window_params = [{transform_indices = @transform_0, window_bounds = array<i64: 128, 8>}, {pipeline_mode = #tpu.pipeline_mode<synchronous>, transform_indices = @transform_1, window_bounds = array<i64: 1024, 256>}, {pipeline_mode = #tpu.pipeline_mode<synchronous>, transform_indices = @transform_2, window_bounds = array<i64: 1, 256>}, {pipeline_mode = #tpu.pipeline_mode<synchronous>, transform_indices = @transform_3, window_bounds = array<i64: 256, 128>}, {pipeline_mode = #tpu.pipeline_mode<synchronous>, transform_indices = @transform_4, window_bounds = array<i64: 1, 128>}, {pipeline_mode = #tpu.pipeline_mode<synchronous>, transform_indices = @transform_5, window_bounds = array<i64: 128, 128>}, {pipeline_mode = #tpu.pipeline_mode<synchronous>, transform_indices = @transform_6, window_bounds = array<i64: 1, 128>}, {pipeline_mode = #tpu.pipeline_mode<synchronous>, transform_indices = @transform_7, window_bounds = array<i64: 128, 128>}, {pipeline_mode = #tpu.pipeline_mode<synchronous>, transform_indices = @transform_8, window_bounds = array<i64: 1, 128>}, {pipeline_mode = #tpu.pipeline_mode<synchronous>, transform_indices = @transform_9, window_bounds = array<i64: 128, 256>}, {pipeline_mode = #tpu.pipeline_mode<synchronous>, transform_indices = @transform_10, window_bounds = array<i64: 1, 256>}, {pipeline_mode = #tpu.pipeline_mode<synchronous>, transform_indices = @transform_11, window_bounds = array<i64: 256, 128>}, {pipeline_mode = #tpu.pipeline_mode<synchronous>, transform_indices = @transform_12, window_bounds = array<i64: 1, 128>}, {transform_indices = @transform_13, window_bounds = array<i64: 128, 128>}]} {
    %c0 = arith.constant 0 : index
    %c0_0 = arith.constant 0 : index
    %0 = vector.load %arg1[%c0, %c0_0] : memref<128x8xi32, #tpu.memory_space<vmem>>, vector<128x8xi32>
    %1 = tpu.iota {dimensions = array<i32: 1>} : vector<128x128xi32>
    %2 = vector.extract_strided_slice %0 {offsets = [0, 0], sizes = [128, 1], strides = [1, 1]} : vector<128x8xi32> to vector<128x1xi32>
    %3 = vector.broadcast %2 : vector<128x1xi32> to vector<128x128xi32>
    %4 = arith.cmpi eq, %1, %3 : vector<128x128xi32>
    %cst = arith.constant 1.000000e+00 : f32
    %cst_1 = arith.constant 0.000000e+00 : f32
    %5 = vector.broadcast %cst : f32 to vector<128x128xf32>
    %6 = vector.broadcast %cst_1 : f32 to vector<128x128xf32>
    %7 = arith.select %4, %5, %6 : vector<128x128xi1>, vector<128x128xf32>
    %8 = arith.truncf %7 : vector<128x128xf32> to vector<128x128xbf16>
    %c0_2 = arith.constant 0 : index
    %c0_3 = arith.constant 0 : index
    %9 = vector.load %arg15[%c0_2, %c0_3] : memref<128x1024xbf16, #tpu.memory_space<vmem>>, vector<128x128xbf16>
    tpu.vector_store %arg15[%c0_2, %c0_3], %8 {strides = array<i32>} : memref<128x1024xbf16, #tpu.memory_space<vmem>>, vector<128x128xbf16>,
    %10 = vector.extract_strided_slice %0 {offsets = [0, 1], sizes = [128, 1], strides = [1, 1]} : vector<128x8xi32> to vector<128x1xi32>
    %11 = vector.broadcast %10 : vector<128x1xi32> to vector<128x128xi32>
    %12 = arith.cmpi eq, %1, %11 : vector<128x128xi32>
    %cst_4 = arith.constant 1.000000e+00 : f32
    %cst_5 = arith.constant 0.000000e+00 : f32
    %13 = vector.broadcast %cst_4 : f32 to vector<128x128xf32>
    %14 = vector.broadcast %cst_5 : f32 to vector<128x128xf32>
    %15 = arith.select %12, %13, %14 : vector<128x128xi1>, vector<128x128xf32>
    %16 = arith.truncf %15 : vector<128x128xf32> to vector<128x128xbf16>
    %c0_6 = arith.constant 0 : index
    %c128 = arith.constant 128 : index
    %17 = vector.load %arg15[%c0_6, %c128] : memref<128x1024xbf16, #tpu.memory_space<vmem>>, vector<128x128xbf16>
    tpu.vector_store %arg15[%c0_6, %c128], %16 {strides = array<i32>} : memref<128x1024xbf16, #tpu.memory_space<vmem>>, vector<128x128xbf16>,
    %18 = vector.extract_strided_slice %0 {offsets = [0, 2], sizes = [128, 1], strides = [1, 1]} : vector<128x8xi32> to vector<128x1xi32>
    %19 = vector.broadcast %18 : vector<128x1xi32> to vector<128x128xi32>
    %20 = arith.cmpi eq, %1, %19 : vector<128x128xi32>
    %cst_7 = arith.constant 1.000000e+00 : f32
    %cst_8 = arith.constant 0.000000e+00 : f32
    %21 = vector.broadcast %cst_7 : f32 to vector<128x128xf32>
    %22 = vector.broadcast %cst_8 : f32 to vector<128x128xf32>
    %23 = arith.select %20, %21, %22 : vector<128x128xi1>, vector<128x128xf32>
    %24 = arith.truncf %23 : vector<128x128xf32> to vector<128x128xbf16>
    %c0_9 = arith.constant 0 : index
    %c256 = arith.constant 256 : index
    %25 = vector.load %arg15[%c0_9, %c256] : memref<128x1024xbf16, #tpu.memory_space<vmem>>, vector<128x128xbf16>
    tpu.vector_store %arg15[%c0_9, %c256], %24 {strides = array<i32>} : memref<128x1024xbf16, #tpu.memory_space<vmem>>, vector<128x128xbf16>,
    %26 = vector.extract_strided_slice %0 {offsets = [0, 3], sizes = [128, 1], strides = [1, 1]} : vector<128x8xi32> to vector<128x1xi32>
    %27 = vector.broadcast %26 : vector<128x1xi32> to vector<128x128xi32>
    %28 = arith.cmpi eq, %1, %27 : vector<128x128xi32>
    %cst_10 = arith.constant 1.000000e+00 : f32
    %cst_11 = arith.constant 0.000000e+00 : f32
    %29 = vector.broadcast %cst_10 : f32 to vector<128x128xf32>
    %30 = vector.broadcast %cst_11 : f32 to vector<128x128xf32>
    %31 = arith.select %28, %29, %30 : vector<128x128xi1>, vector<128x128xf32>
    %32 = arith.truncf %31 : vector<128x128xf32> to vector<128x128xbf16>
    %c0_12 = arith.constant 0 : index
    %c384 = arith.constant 384 : index
    %33 = vector.load %arg15[%c0_12, %c384] : memref<128x1024xbf16, #tpu.memory_space<vmem>>, vector<128x128xbf16>
    tpu.vector_store %arg15[%c0_12, %c384], %32 {strides = array<i32>} : memref<128x1024xbf16, #tpu.memory_space<vmem>>, vector<128x128xbf16>,
    %34 = vector.extract_strided_slice %0 {offsets = [0, 4], sizes = [128, 1], strides = [1, 1]} : vector<128x8xi32> to vector<128x1xi32>
    %35 = vector.broadcast %34 : vector<128x1xi32> to vector<128x128xi32>
    %36 = arith.cmpi eq, %1, %35 : vector<128x128xi32>
    %cst_13 = arith.constant 1.000000e+00 : f32
    %cst_14 = arith.constant 0.000000e+00 : f32
    %37 = vector.broadcast %cst_13 : f32 to vector<128x128xf32>
    %38 = vector.broadcast %cst_14 : f32 to vector<128x128xf32>
    %39 = arith.select %36, %37, %38 : vector<128x128xi1>, vector<128x128xf32>
    %40 = arith.truncf %39 : vector<128x128xf32> to vector<128x128xbf16>
    %c0_15 = arith.constant 0 : index
    %c512 = arith.constant 512 : index
    %41 = vector.load %arg15[%c0_15, %c512] : memref<128x1024xbf16, #tpu.memory_space<vmem>>, vector<128x128xbf16>
    tpu.vector_store %arg15[%c0_15, %c512], %40 {strides = array<i32>} : memref<128x1024xbf16, #tpu.memory_space<vmem>>, vector<128x128xbf16>,
    %42 = vector.extract_strided_slice %0 {offsets = [0, 5], sizes = [128, 1], strides = [1, 1]} : vector<128x8xi32> to vector<128x1xi32>
    %43 = vector.broadcast %42 : vector<128x1xi32> to vector<128x128xi32>
    %44 = arith.cmpi eq, %1, %43 : vector<128x128xi32>
    %cst_16 = arith.constant 1.000000e+00 : f32
    %cst_17 = arith.constant 0.000000e+00 : f32
    %45 = vector.broadcast %cst_16 : f32 to vector<128x128xf32>
    %46 = vector.broadcast %cst_17 : f32 to vector<128x128xf32>
    %47 = arith.select %44, %45, %46 : vector<128x128xi1>, vector<128x128xf32>
    %48 = arith.truncf %47 : vector<128x128xf32> to vector<128x128xbf16>
    %c0_18 = arith.constant 0 : index
    %c640 = arith.constant 640 : index
    %49 = vector.load %arg15[%c0_18, %c640] : memref<128x1024xbf16, #tpu.memory_space<vmem>>, vector<128x128xbf16>
    tpu.vector_store %arg15[%c0_18, %c640], %48 {strides = array<i32>} : memref<128x1024xbf16, #tpu.memory_space<vmem>>, vector<128x128xbf16>,
    %50 = vector.extract_strided_slice %0 {offsets = [0, 6], sizes = [128, 1], strides = [1, 1]} : vector<128x8xi32> to vector<128x1xi32>
    %51 = vector.broadcast %50 : vector<128x1xi32> to vector<128x128xi32>
    %52 = arith.cmpi eq, %1, %51 : vector<128x128xi32>
    %cst_19 = arith.constant 1.000000e+00 : f32
    %cst_20 = arith.constant 0.000000e+00 : f32
    %53 = vector.broadcast %cst_19 : f32 to vector<128x128xf32>
    %54 = vector.broadcast %cst_20 : f32 to vector<128x128xf32>
    %55 = arith.select %52, %53, %54 : vector<128x128xi1>, vector<128x128xf32>
    %56 = arith.truncf %55 : vector<128x128xf32> to vector<128x128xbf16>
    %c0_21 = arith.constant 0 : index
    %c768 = arith.constant 768 : index
    %57 = vector.load %arg15[%c0_21, %c768] : memref<128x1024xbf16, #tpu.memory_space<vmem>>, vector<128x128xbf16>
    tpu.vector_store %arg15[%c0_21, %c768], %56 {strides = array<i32>} : memref<128x1024xbf16, #tpu.memory_space<vmem>>, vector<128x128xbf16>,
    %58 = vector.extract_strided_slice %0 {offsets = [0, 7], sizes = [128, 1], strides = [1, 1]} : vector<128x8xi32> to vector<128x1xi32>
    %59 = vector.broadcast %58 : vector<128x1xi32> to vector<128x128xi32>
    %60 = arith.cmpi eq, %1, %59 : vector<128x128xi32>
    %cst_22 = arith.constant 1.000000e+00 : f32
    %cst_23 = arith.constant 0.000000e+00 : f32
    %61 = vector.broadcast %cst_22 : f32 to vector<128x128xf32>
    %62 = vector.broadcast %cst_23 : f32 to vector<128x128xf32>
    %63 = arith.select %60, %61, %62 : vector<128x128xi1>, vector<128x128xf32>
    %64 = arith.truncf %63 : vector<128x128xf32> to vector<128x128xbf16>
    %c0_24 = arith.constant 0 : index
    %c896 = arith.constant 896 : index
    %65 = vector.load %arg15[%c0_24, %c896] : memref<128x1024xbf16, #tpu.memory_space<vmem>>, vector<128x128xbf16>
    tpu.vector_store %arg15[%c0_24, %c896], %64 {strides = array<i32>} : memref<128x1024xbf16, #tpu.memory_space<vmem>>, vector<128x128xbf16>,
    %c0_25 = arith.constant 0 : index
    %c0_26 = arith.constant 0 : index
    %66 = vector.load %arg15[%c0_25, %c0_26] : memref<128x1024xbf16, #tpu.memory_space<vmem>>, vector<128x1024xbf16>
    %c0_27 = arith.constant 0 : index
    %c0_28 = arith.constant 0 : index
    %67 = vector.load %arg2[%c0_27, %c0_28] : memref<1024x256xbf16, #tpu.memory_space<vmem>>, vector<1024x256xbf16>
    %cst_29 = arith.constant dense<0.000000e+00> : vector<128x256xf32>
    %68 = tpu.matmul %66, %67, %cst_29 {dimension_numbers = #tpu.dot_dimension_numbers<[1], [0], [0], [1], [0, 0, 1, 1], [], []>} : vector<128x1024xbf16>, vector<1024x256xbf16>, vector<128x256xf32> -> vector<128x256xf32>
    %c0_30 = arith.constant 0 : index
    %c0_31 = arith.constant 0 : index
    %69 = vector.load %arg3[%c0_30, %c0_31] : memref<1x256xf32, #tpu.memory_space<vmem>>, vector<1x256xf32>
    %70 = vector.broadcast %69 : vector<1x256xf32> to vector<128x256xf32>
    %71 = arith.addf %68, %70 : vector<128x256xf32>
    %cst_32 = arith.constant 0.000000e+00 : f32
    %72 = vector.broadcast %cst_32 : f32 to vector<128x256xf32>
    %73 = arith.maximumf %71, %72 : vector<128x256xf32>
    %74 = arith.truncf %73 : vector<128x256xf32> to vector<128x256xbf16>
    %c0_33 = arith.constant 0 : index
    %c0_34 = arith.constant 0 : index
    %75 = vector.load %arg4[%c0_33, %c0_34] : memref<256x128xbf16, #tpu.memory_space<vmem>>, vector<256x128xbf16>
    %cst_35 = arith.constant dense<0.000000e+00> : vector<128x128xf32>
    %76 = tpu.matmul %74, %75, %cst_35 {dimension_numbers = #tpu.dot_dimension_numbers<[1], [0], [0], [1], [0, 0, 1, 1], [], []>} : vector<128x256xbf16>, vector<256x128xbf16>, vector<128x128xf32> -> vector<128x128xf32>
    %c0_36 = arith.constant 0 : index
    %c0_37 = arith.constant 0 : index
    %77 = vector.load %arg5[%c0_36, %c0_37] : memref<1x128xf32, #tpu.memory_space<vmem>>, vector<1x128xf32>
    %78 = vector.broadcast %77 : vector<1x128xf32> to vector<128x128xf32>
    %79 = arith.addf %76, %78 : vector<128x128xf32>
    %cst_38 = arith.constant 0.000000e+00 : f32
    %80 = vector.broadcast %cst_38 : f32 to vector<128x128xf32>
    %81 = arith.maximumf %79, %80 : vector<128x128xf32>
    %82 = arith.truncf %81 : vector<128x128xf32> to vector<128x128xbf16>
    %c0_39 = arith.constant 0 : index
    %c0_40 = arith.constant 0 : index
    %83 = vector.load %arg6[%c0_39, %c0_40] : memref<128x128xbf16, #tpu.memory_space<vmem>>, vector<128x128xbf16>
    %cst_41 = arith.constant dense<0.000000e+00> : vector<128x128xf32>
    %84 = tpu.matmul %82, %83, %cst_41 {dimension_numbers = #tpu.dot_dimension_numbers<[1], [0], [0], [1], [0, 0, 1, 1], [], []>} : vector<128x128xbf16>, vector<128x128xbf16>, vector<128x128xf32> -> vector<128x128xf32>
    %c0_42 = arith.constant 0 : index
    %c0_43 = arith.constant 0 : index
    %85 = vector.load %arg7[%c0_42, %c0_43] : memref<1x128xf32, #tpu.memory_space<vmem>>, vector<1x128xf32>
    %86 = vector.broadcast %85 : vector<1x128xf32> to vector<128x128xf32>
    %87 = arith.addf %84, %86 : vector<128x128xf32>
    %cst_44 = arith.constant 0.000000e+00 : f32
    %88 = vector.broadcast %cst_44 : f32 to vector<128x128xf32>
    %89 = arith.maximumf %87, %88 : vector<128x128xf32>
    %90 = arith.truncf %89 : vector<128x128xf32> to vector<128x128xbf16>
    %c0_45 = arith.constant 0 : index
    %c0_46 = arith.constant 0 : index
    %91 = vector.load %arg8[%c0_45, %c0_46] : memref<128x128xbf16, #tpu.memory_space<vmem>>, vector<128x128xbf16>
    %cst_47 = arith.constant dense<0.000000e+00> : vector<128x128xf32>
    %92 = tpu.matmul %90, %91, %cst_47 {dimension_numbers = #tpu.dot_dimension_numbers<[1], [0], [0], [1], [0, 0, 1, 1], [], []>} : vector<128x128xbf16>, vector<128x128xbf16>, vector<128x128xf32> -> vector<128x128xf32>
    %c0_48 = arith.constant 0 : index
    %c0_49 = arith.constant 0 : index
    %93 = vector.load %arg9[%c0_48, %c0_49] : memref<1x128xf32, #tpu.memory_space<vmem>>, vector<1x128xf32>
    %94 = vector.broadcast %93 : vector<1x128xf32> to vector<128x128xf32>
    %95 = arith.addf %92, %94 : vector<128x128xf32>
    %96 = arith.extf %82 : vector<128x128xbf16> to vector<128x128xf32>
    %97 = arith.addf %95, %96 : vector<128x128xf32>
    %cst_50 = arith.constant 0.000000e+00 : f32
    %98 = vector.broadcast %cst_50 : f32 to vector<128x128xf32>
    %99 = arith.maximumf %97, %98 : vector<128x128xf32>
    %100 = arith.truncf %99 : vector<128x128xf32> to vector<128x128xbf16>
    %c0_51 = arith.constant 0 : index
    %c0_52 = arith.constant 0 : index
    %101 = vector.load %arg10[%c0_51, %c0_52] : memref<128x256xbf16, #tpu.memory_space<vmem>>, vector<128x256xbf16>
    %cst_53 = arith.constant dense<0.000000e+00> : vector<128x256xf32>
    %102 = tpu.matmul %100, %101, %cst_53 {dimension_numbers = #tpu.dot_dimension_numbers<[1], [0], [0], [1], [0, 0, 1, 1], [], []>} : vector<128x128xbf16>, vector<128x256xbf16>, vector<128x256xf32> -> vector<128x256xf32>
    %c0_54 = arith.constant 0 : index
    %c0_55 = arith.constant 0 : index
    %103 = vector.load %arg11[%c0_54, %c0_55] : memref<1x256xf32, #tpu.memory_space<vmem>>, vector<1x256xf32>
    %104 = vector.broadcast %103 : vector<1x256xf32> to vector<128x256xf32>
    %105 = arith.addf %102, %104 : vector<128x256xf32>
    %106 = arith.extf %74 : vector<128x256xbf16> to vector<128x256xf32>
    %107 = arith.addf %105, %106 : vector<128x256xf32>
    %cst_56 = arith.constant 0.000000e+00 : f32
    %108 = vector.broadcast %cst_56 : f32 to vector<128x256xf32>
    %109 = arith.maximumf %107, %108 : vector<128x256xf32>
    %110 = arith.truncf %109 : vector<128x256xf32> to vector<128x256xbf16>
    %c0_57 = arith.constant 0 : index
    %c0_58 = arith.constant 0 : index
    %111 = vector.load %arg12[%c0_57, %c0_58] : memref<256x128xbf16, #tpu.memory_space<vmem>>, vector<256x128xbf16>
    %cst_59 = arith.constant dense<0.000000e+00> : vector<128x128xf32>
    %112 = tpu.matmul %110, %111, %cst_59 {dimension_numbers = #tpu.dot_dimension_numbers<[1], [0], [0], [1], [0, 0, 1, 1], [], []>} : vector<128x256xbf16>, vector<256x128xbf16>, vector<128x128xf32> -> vector<128x128xf32>
    %c0_60 = arith.constant 0 : index
    %c0_61 = arith.constant 0 : index
    %113 = vector.load %arg13[%c0_60, %c0_61] : memref<1x128xf32, #tpu.memory_space<vmem>>, vector<1x128xf32>
    %114 = vector.broadcast %113 : vector<1x128xf32> to vector<128x128xf32>
    %115 = arith.addf %112, %114 : vector<128x128xf32>
    %c0_62 = arith.constant 0 : index
    %c0_63 = arith.constant 0 : index
    %116 = vector.load %arg14[%c0_62, %c0_63] : memref<128x128xf32, #tpu.memory_space<vmem>>, vector<128x128xf32>
    tpu.vector_store %arg14[%c0_62, %c0_63], %115 {strides = array<i32>} : memref<128x128xf32, #tpu.memory_space<vmem>>, vector<128x128xf32>,
    return
  }
  func.func @transform_0(%arg0: i32) -> (i32, i32) {
    %c0_i32 = arith.constant 0 : i32
    %c0_i32_0 = arith.constant 0 : i32
    return %arg0, %c0_i32 : i32, i32
  }
  func.func @transform_1(%arg0: i32) -> (i32, i32) {
    %c0_i32 = arith.constant 0 : i32
    %c0_i32_0 = arith.constant 0 : i32
    %c0_i32_1 = arith.constant 0 : i32
    return %c0_i32, %c0_i32_0 : i32, i32
  }
  func.func @transform_2(%arg0: i32) -> (i32, i32) {
    %c0_i32 = arith.constant 0 : i32
    %c0_i32_0 = arith.constant 0 : i32
    %c0_i32_1 = arith.constant 0 : i32
    return %c0_i32, %c0_i32_0 : i32, i32
  }
  func.func @transform_3(%arg0: i32) -> (i32, i32) {
    %c0_i32 = arith.constant 0 : i32
    %c0_i32_0 = arith.constant 0 : i32
    %c0_i32_1 = arith.constant 0 : i32
    return %c0_i32, %c0_i32_0 : i32, i32
  }
  func.func @transform_4(%arg0: i32) -> (i32, i32) {
    %c0_i32 = arith.constant 0 : i32
    %c0_i32_0 = arith.constant 0 : i32
    %c0_i32_1 = arith.constant 0 : i32
    return %c0_i32, %c0_i32_0 : i32, i32
  }
  func.func @transform_5(%arg0: i32) -> (i32, i32) {
    %c0_i32 = arith.constant 0 : i32
    %c0_i32_0 = arith.constant 0 : i32
    %c0_i32_1 = arith.constant 0 : i32
    return %c0_i32, %c0_i32_0 : i32, i32
  }
  func.func @transform_6(%arg0: i32) -> (i32, i32) {
    %c0_i32 = arith.constant 0 : i32
    %c0_i32_0 = arith.constant 0 : i32
    %c0_i32_1 = arith.constant 0 : i32
    return %c0_i32, %c0_i32_0 : i32, i32
  }
  func.func @transform_7(%arg0: i32) -> (i32, i32) {
    %c0_i32 = arith.constant 0 : i32
    %c0_i32_0 = arith.constant 0 : i32
    %c0_i32_1 = arith.constant 0 : i32
    return %c0_i32, %c0_i32_0 : i32, i32
  }
  func.func @transform_8(%arg0: i32) -> (i32, i32) {
    %c0_i32 = arith.constant 0 : i32
    %c0_i32_0 = arith.constant 0 : i32
    %c0_i32_1 = arith.constant 0 : i32
    return %c0_i32, %c0_i32_0 : i32, i32
  }
  func.func @transform_9(%arg0: i32) -> (i32, i32) {
    %c0_i32 = arith.constant 0 : i32
    %c0_i32_0 = arith.constant 0 : i32
    %c0_i32_1 = arith.constant 0 : i32
    return %c0_i32, %c0_i32_0 : i32, i32
  }
  func.func @transform_10(%arg0: i32) -> (i32, i32) {
    %c0_i32 = arith.constant 0 : i32
    %c0_i32_0 = arith.constant 0 : i32
    %c0_i32_1 = arith.constant 0 : i32
    return %c0_i32, %c0_i32_0 : i32, i32
  }
  func.func @transform_11(%arg0: i32) -> (i32, i32) {
    %c0_i32 = arith.constant 0 : i32
    %c0_i32_0 = arith.constant 0 : i32
    %c0_i32_1 = arith.constant 0 : i32
    return %c0_i32, %c0_i32_0 : i32, i32
  }
  func.func @transform_12(%arg0: i32) -> (i32, i32) {
    %c0_i32 = arith.constant 0 : i32
    %c0_i32_0 = arith.constant 0 : i32
    %c0_i32_1 = arith.constant 0 : i32
    return %c0_i32, %c0_i32_0 : i32, i32
  }
  func.func @transform_13(%arg0: i32) -> (i32, i32) {
    %c0_i32 = arith.constant 0 : i32
    %c0_i32_0 = arith.constant 0 : i32
    return %arg0, %c0_i32 : i32, i32
  }
}

</mosaic_0001>

<llo_original>
// kernel: dqn_forward.1
$region0: #{dqn_forward.1}
  #allocation0 [shape = 'u32[]', space=smem, size = 0x4, offset = 0x4, fixed_abs, tag = 'smem constant byte address 0x4 - core index']
  #allocation1 [shape = 'u32[144,128]{1,0:T(1,128)}', space=vmem, size = 0x12000, scoped, tag = 'internal scratch']
  #allocation2 [shape = 'bf16[128,1024]{1,0:T(8,128)(2,1)}', space=vmem, size = 0x40000, scoped, tag = 'scratch operand']
  %s0 = inlined_call_operand.vmem [shape: s32[128,8], index: 0, kind: input, shape index: {}]
  %s1 = inlined_call_operand.hbm [shape: bf16[1024,256], index: 1, kind: input, shape index: {}]
  %s2 = inlined_call_operand.vmem [shape: f32[1,256], index: 2, kind: input, shape index: {}]
  %s3 = inlined_call_operand.vmem [shape: bf16[256,128], index: 3, kind: input, shape index: {}]
  %s4 = inlined_call_operand.vmem [shape: f32[1,128], index: 4, kind: input, shape index: {}]
  %s5 = inlined_call_operand.hbm [shape: bf16[128,128], index: 5, kind: input, shape index: {}]
  %s6 = inlined_call_operand.vmem [shape: f32[1,128], index: 6, kind: input, shape index: {}]
  %s7 = inlined_call_operand.hbm [shape: bf16[128,128], index: 7, kind: input, shape index: {}]
  %s8 = inlined_call_operand.vmem [shape: f32[1,128], index: 8, kind: input, shape index: {}]
  %s9 = inlined_call_operand.hbm [shape: bf16[128,256], index: 9, kind: input, shape index: {}]
  %s10 = inlined_call_operand.vmem [shape: f32[1,256], index: 10, kind: input, shape index: {}]
  %s11 = inlined_call_operand.hbm [shape: bf16[256,128], index: 11, kind: input, shape index: {}]
  %s12 = inlined_call_operand.vmem [shape: f32[1,128], index: 12, kind: input, shape index: {}]
  %s13 = inlined_call_operand.vmem [shape: f32[128,128], index: 13, kind: output, shape index: {}]
  %s14 = sld [smem:[#allocation0]]
  $region82: #{dqn_forward.1} parent=0
    _
  %s16 = ssub.s32 1, %s14
  %s17 = scalar_select 0, %s16, %s14
  $region1: #{dqn_forward.1} parent=0
    #allocation3 [shape = 'u8[524288]{0}', space=vmem, size = 0x80000, scoped, tag = 'input window, operand 1, single buffered']
    #allocation4 [shape = 's32[1]{0}', space=sflag, size = 0x4, scoped, tag = 'scoped memory for dqn_forward.1']
    #allocation5 [shape = 'u8[32768]{0}', space=vmem, size = 0x8000, scoped, tag = 'input window, operand 5, single buffered']
    #allocation6 [shape = 's32[1]{0}', space=sflag, size = 0x4, scoped, tag = 'scoped memory for dqn_forward.1']
    #allocation7 [shape = 'u8[32768]{0}', space=vmem, size = 0x8000, scoped, tag = 'input window, operand 7, single buffered']
    #allocation8 [shape = 'u8[65536]{0}', space=vmem, size = 0x10000, scoped, tag = 'input window, operand 9, single buffered']
    #allocation9 [shape = 's32[1]{0}', space=sflag, size = 0x4, scoped, tag = 'scoped memory for dqn_forward.1']
    #allocation10 [shape = 'u8[65536]{0}', space=vmem, size = 0x10000, scoped, tag = 'input window, operand 11, single buffered']
    %18 = vsyncpa [#allocation4], 0
    %19 = vsyncpa [#allocation6], 0
    %20 = vsyncpa [#allocation9], 0
    // Predicated region
    $region2: #{dqn_forward.1} parent=1 // pred_check
      _
    $region3: #{dqn_forward.1} parent=1 // pred_check_branch
      %22 = sbr.rel (0) target = $region5
    $region4: #{dqn_forward.1} parent=1 // pred_region
      _
    $region5: #{dqn_forward.1} parent=1 // pred_fallthru
      _
    // Predicated region
    $region6: #{dqn_forward.1} parent=1 // pred_check
      _
    $region7: #{dqn_forward.1} parent=1 // pred_check_branch
      %24 = sbr.rel (0) target = $region9
    $region8: #{dqn_forward.1} parent=1 // pred_region
      %s26 = ssub.s32 16384, 16384
      %27 = vsyncadd [#allocation4], %s26
      %s28 = sshll.u32 [#allocation3], 4
      %s29 = int_to_ptr.vmem [resolvable:$true] %s28
      %34 = dma.hbm_to_vmem [thread:$0]  %s1, 16384, %s29, [#allocation4], 128, 128, 8
    $region9: #{dqn_forward.1} parent=1 // pred_fallthru
      _
    // Predicated region
    $region10: #{dqn_forward.1} parent=1 // pred_check
      _
    $region11: #{dqn_forward.1} parent=1 // pred_check_branch
      %36 = sbr.rel (0) target = $region13
    $region12: #{dqn_forward.1} parent=1 // pred_region
      _
    $region13: #{dqn_forward.1} parent=1 // pred_fallthru
      _
    // Predicated region
    $region14: #{dqn_forward.1} parent=1 // pred_check
      _
    $region15: #{dqn_forward.1} parent=1 // pred_check_branch
      %38 = sbr.rel (0) target = $region17
    $region16: #{dqn_forward.1} parent=1 // pred_region
      _
    $region17: #{dqn_forward.1} parent=1 // pred_fallthru
      _
    // Predicated region
    $region18: #{dqn_forward.1} parent=1 // pred_check
      _
    $region19: #{dqn_forward.1} parent=1 // pred_check_branch
      %40 = sbr.rel (0) target = $region21
    $region20: #{dqn_forward.1} parent=1 // pred_region
      _
    $region21: #{dqn_forward.1} parent=1 // pred_fallthru
      _
    // Predicated region
    $region22: #{dqn_forward.1} parent=1 // pred_check
      _
    $region23: #{dqn_forward.1} parent=1 // pred_check_branch
      %42 = sbr.rel (0) target = $region25
    $region24: #{dqn_forward.1} parent=1 // pred_region
      %s44 = ssub.s32 1024, 1024
      %45 = vsyncadd [#allocation6], %s44
      %s46 = sshll.u32 [#allocation5], 4
      %s47 = int_to_ptr.vmem [resolvable:$true] %s46
      %52 = dma.hbm_to_vmem [thread:$0]  %s5, 1024, %s47, [#allocation6], 64, 64, 4
    $region25: #{dqn_forward.1} parent=1 // pred_fallthru
      _
    // Predicated region
    $region26: #{dqn_forward.1} parent=1 // pred_check
      _
    $region27: #{dqn_forward.1} parent=1 // pred_check_branch
      %54 = sbr.rel (0) target = $region29
    $region28: #{dqn_forward.1} parent=1 // pred_region
      _
    $region29: #{dqn_forward.1} parent=1 // pred_fallthru
      _
    // Predicated region
    $region30: #{dqn_forward.1} parent=1 // pred_check
      _
    $region31: #{dqn_forward.1} parent=1 // pred_check_branch
      %56 = sbr.rel (0) target = $region33
    $region32: #{dqn_forward.1} parent=1 // pred_region
      %s58 = ssub.s32 1024, 1024
      %59 = vsyncadd [#allocation6], %s58
      %s60 = sshll.u32 [#allocation7], 4
      %s61 = int_to_ptr.vmem [resolvable:$true] %s60
      %66 = dma.hbm_to_vmem [thread:$0]  %s7, 1024, %s61, [#allocation6], 64, 64, 4
    $region33: #{dqn_forward.1} parent=1 // pred_fallthru
      _
    // Predicated region
    $region34: #{dqn_forward.1} parent=1 // pred_check
      _
    $region35: #{dqn_forward.1} parent=1 // pred_check_branch
      %68 = sbr.rel (0) target = $region37
    $region36: #{dqn_forward.1} parent=1 // pred_region
      _
    $region37: #{dqn_forward.1} parent=1 // pred_fallthru
      _
    // Predicated region
    $region38: #{dqn_forward.1} parent=1 // pred_check
      _
    $region39: #{dqn_forward.1} parent=1 // pred_check_branch
      %70 = sbr.rel (0) target = $region41
    $region40: #{dqn_forward.1} parent=1 // pred_region
      %s72 = ssub.s32 2048, 2048
      %73 = vsyncadd [#allocation9], %s72
      %s74 = sshll.u32 [#allocation8], 4
      %s75 = int_to_ptr.vmem [resolvable:$true] %s74
      %80 = dma.hbm_to_vmem [thread:$0]  %s9, 2048, %s75, [#allocation9], 128, 128, 8
    $region41: #{dqn_forward.1} parent=1 // pred_fallthru
      _
    // Predicated region
    $region42: #{dqn_forward.1} parent=1 // pred_check
      _
    $region43: #{dqn_forward.1} parent=1 // pred_check_branch
      %82 = sbr.rel (0) target = $region45
    $region44: #{dqn_forward.1} parent=1 // pred_region
      _
    $region45: #{dqn_forward.1} parent=1 // pred_fallthru
      _
    // Predicated region
    $region46: #{dqn_forward.1} parent=1 // pred_check
      _
    $region47: #{dqn_forward.1} parent=1 // pred_check_branch
      %84 = sbr.rel (0) target = $region49
    $region48: #{dqn_forward.1} parent=1 // pred_region
      %s86 = ssub.s32 2048, 2048
      %87 = vsyncadd [#allocation9], %s86
      %s88 = sshll.u32 [#allocation10], 4
      %s89 = int_to_ptr.vmem [resolvable:$true] %s88
      %94 = dma.hbm_to_vmem [thread:$0]  %s11, 2048, %s89, [#allocation9], 64, 64, 4
    $region49: #{dqn_forward.1} parent=1 // pred_fallthru
      _
    // Predicated region
    $region50: #{dqn_forward.1} parent=1 // pred_check
      _
    $region51: #{dqn_forward.1} parent=1 // pred_check_branch
      %96 = sbr.rel (0) target = $region53
    $region52: #{dqn_forward.1} parent=1 // pred_region
      _
    $region53: #{dqn_forward.1} parent=1 // pred_fallthru
      _
    // Predicated region
    $region54: #{dqn_forward.1} parent=1 // pred_check
      _
    $region55: #{dqn_forward.1} parent=1 // pred_check_branch
      %98 = sbr.rel (0) target = $region57
    $region56: #{dqn_forward.1} parent=1 // pred_region
      %99 = dma.done [#allocation4], 16384
    $region57: #{dqn_forward.1} parent=1 // pred_fallthru
      _
    // Predicated region
    $region58: #{dqn_forward.1} parent=1 // pred_check
      _
    $region59: #{dqn_forward.1} parent=1 // pred_check_branch
      %101 = sbr.rel (0) target = $region61
    $region60: #{dqn_forward.1} parent=1 // pred_region
      %102 = dma.done [#allocation6], 1024
    $region61: #{dqn_forward.1} parent=1 // pred_fallthru
      _
    // Predicated region
    $region62: #{dqn_forward.1} parent=1 // pred_check
      _
    $region63: #{dqn_forward.1} parent=1 // pred_check_branch
      %104 = sbr.rel (0) target = $region65
    $region64: #{dqn_forward.1} parent=1 // pred_region
      %105 = dma.done [#allocation6], 1024
    $region65: #{dqn_forward.1} parent=1 // pred_fallthru
      _
    // Predicated region
    $region66: #{dqn_forward.1} parent=1 // pred_check
      _
    $region67: #{dqn_forward.1} parent=1 // pred_check_branch
      %107 = sbr.rel (0) target = $region69
    $region68: #{dqn_forward.1} parent=1 // pred_region
      %108 = dma.done [#allocation9], 2048
    $region69: #{dqn_forward.1} parent=1 // pred_fallthru
      _
    // Predicated region
    $region70: #{dqn_forward.1} parent=1 // pred_check
      _
    $region71: #{dqn_forward.1} parent=1 // pred_check_branch
      %110 = sbr.rel (0) target = $region73
    $region72: #{dqn_forward.1} parent=1 // pred_region
      %111 = dma.done [#allocation9], 2048
    $region73: #{dqn_forward.1} parent=1 // pred_fallthru
      _
    %v113 = vld [vmem:[%s0] sm:$0xff]
    %v114 = vld [vmem:[%s0 + $0x8] sm:$0xff]
    %v115 = vld [vmem:[%s0 + $0x10] sm:$0xff]
    %v116 = vld [vmem:[%s0 + $0x18] sm:$0xff]
    %v117 = vld [vmem:[%s0 + $0x20] sm:$0xff]
    %v118 = vld [vmem:[%s0 + $0x28] sm:$0xff]
    %v119 = vld [vmem:[%s0 + $0x30] sm:$0xff]
    %v120 = vld [vmem:[%s0 + $0x38] sm:$0xff]
    %v121 = vld [vmem:[%s0 + $0x40] sm:$0xff]
    %v122 = vld [vmem:[%s0 + $0x48] sm:$0xff]
    %v123 = vld [vmem:[%s0 + $0x50] sm:$0xff]
    %v124 = vld [vmem:[%s0 + $0x58] sm:$0xff]
    %v125 = vld [vmem:[%s0 + $0x60] sm:$0xff]
    %v126 = vld [vmem:[%s0 + $0x68] sm:$0xff]
    %v127 = vld [vmem:[%s0 + $0x70] sm:$0xff]
    %v128 = vld [vmem:[%s0 + $0x78] sm:$0xff]
    %v129 = vlaneseq
    %v130 = vand.u32 %v129, 127
    %131 = vset.pattern.permute.xlu0 0
    %132 = vperm.xlu0 %131, %v113
    %v133 = vpop.permute.xlu0 %132
    %134 = vset.pattern.permute.xlu0 0
    %135 = vperm.xlu0 %134, %v114
    %v136 = vpop.permute.xlu0 %135
    %137 = vset.pattern.permute.xlu0 0
    %138 = vperm.xlu0 %137, %v115
    %v139 = vpop.permute.xlu0 %138
    %140 = vset.pattern.permute.xlu0 0
    %141 = vperm.xlu0 %140, %v116
    %v142 = vpop.permute.xlu0 %141
    %143 = vset.pattern.permute.xlu0 0
    %144 = vperm.xlu0 %143, %v117
    %v145 = vpop.permute.xlu0 %144
    %146 = vset.pattern.permute.xlu0 0
    %147 = vperm.xlu0 %146, %v118
    %v148 = vpop.permute.xlu0 %147
    %149 = vset.pattern.permute.xlu0 0
    %150 = vperm.xlu0 %149, %v119
    %v151 = vpop.permute.xlu0 %150
    %152 = vset.pattern.permute.xlu0 0
    %153 = vperm.xlu0 %152, %v120
    %v154 = vpop.permute.xlu0 %153
    %155 = vset.pattern.permute.xlu0 0
    %156 = vperm.xlu0 %155, %v121
    %v157 = vpop.permute.xlu0 %156
    %158 = vset.pattern.permute.xlu0 0
    %159 = vperm.xlu0 %158, %v122
    %v160 = vpop.permute.xlu0 %159
    %161 = vset.pattern.permute.xlu0 0
    %162 = vperm.xlu0 %161, %v123
    %v163 = vpop.permute.xlu0 %162
    %164 = vset.pattern.permute.xlu0 0
    %165 = vperm.xlu0 %164, %v124
    %v166 = vpop.permute.xlu0 %165
    %167 = vset.pattern.permute.xlu0 0
    %168 = vperm.xlu0 %167, %v125
    %v169 = vpop.permute.xlu0 %168
    %170 = vset.pattern.permute.xlu0 0
    %171 = vperm.xlu0 %170, %v126
    %v172 = vpop.permute.xlu0 %171
    %173 = vset.pattern.permute.xlu0 0
    %174 = vperm.xlu0 %173, %v127
    %v175 = vpop.permute.xlu0 %174
    %176 = vset.pattern.permute.xlu0 0
    %177 = vperm.xlu0 %176, %v128
    %v178 = vpop.permute.xlu0 %177
    %vm179 = vcmp.eq.s32.totalorder %v130, %v133
    %vm180 = vcmp.eq.s32.totalorder %v130, %v136
    %vm181 = vcmp.eq.s32.totalorder %v130, %v139
    %vm182 = vcmp.eq.s32.totalorder %v130, %v142
    %vm183 = vcmp.eq.s32.totalorder %v130, %v145
    %vm184 = vcmp.eq.s32.totalorder %v130, %v148
    %vm185 = vcmp.eq.s32.totalorder %v130, %v151
    %vm186 = vcmp.eq.s32.totalorder %v130, %v154
    %vm187 = vcmp.eq.s32.totalorder %v130, %v157
    %vm188 = vcmp.eq.s32.totalorder %v130, %v160
    %vm189 = vcmp.eq.s32.totalorder %v130, %v163
    %vm190 = vcmp.eq.s32.totalorder %v130, %v166
    %vm191 = vcmp.eq.s32.totalorder %v130, %v169
    %vm192 = vcmp.eq.s32.totalorder %v130, %v172
    %vm193 = vcmp.eq.s32.totalorder %v130, %v175
    %vm194 = vcmp.eq.s32.totalorder %v130, %v178
    %v195 = vsel %vm179, 1.0, 0.0
    %v196 = vsel %vm180, 1.0, 0.0
    %v197 = vsel %vm181, 1.0, 0.0
    %v198 = vsel %vm182, 1.0, 0.0
    %v199 = vsel %vm183, 1.0, 0.0
    %v200 = vsel %vm184, 1.0, 0.0
    %v201 = vsel %vm185, 1.0, 0.0
    %v202 = vsel %vm186, 1.0, 0.0
    %v203 = vsel %vm187, 1.0, 0.0
    %v204 = vsel %vm188, 1.0, 0.0
    %v205 = vsel %vm189, 1.0, 0.0
    %v206 = vsel %vm190, 1.0, 0.0
    %v207 = vsel %vm191, 1.0, 0.0
    %v208 = vsel %vm192, 1.0, 0.0
    %v209 = vsel %vm193, 1.0, 0.0
    %v210 = vsel %vm194, 1.0, 0.0
    %v211 = vpack.c.bf16 %v196, %v195
    %v212 = vpack.c.bf16 %v198, %v197
    %v213 = vpack.c.bf16 %v200, %v199
    %v214 = vpack.c.bf16 %v202, %v201
    %v215 = vpack.c.bf16 %v204, %v203
    %v216 = vpack.c.bf16 %v206, %v205
    %v217 = vpack.c.bf16 %v208, %v207
    %v218 = vpack.c.bf16 %v210, %v209
    %v227 = vunpack.c.l.b16 %v211
    %v228 = vunpack.c.h.b16 %v211
    %v229 = vunpack.c.l.b16 %v212
    %v230 = vunpack.c.h.b16 %v212
    %v231 = vunpack.c.l.b16 %v213
    %v232 = vunpack.c.h.b16 %v213
    %v233 = vunpack.c.l.b16 %v214
    %v234 = vunpack.c.h.b16 %v214
    %v235 = vunpack.c.l.b16 %v215
    %v236 = vunpack.c.h.b16 %v215
    %v237 = vunpack.c.l.b16 %v216
    %v238 = vunpack.c.h.b16 %v216
    %v239 = vunpack.c.l.b16 %v217
    %v240 = vunpack.c.h.b16 %v217
    %v241 = vunpack.c.l.b16 %v218
    %v242 = vunpack.c.h.b16 %v218
    %v243 = vpack.c.b16 %v227, %v227
    %v244 = vpack.c.b16 %v228, %v228
    %v245 = vpack.c.b16 %v229, %v229
    %v246 = vpack.c.b16 %v230, %v230
    %v247 = vpack.c.b16 %v231, %v231
    %v248 = vpack.c.b16 %v232, %v232
    %v249 = vpack.c.b16 %v233, %v233
    %v250 = vpack.c.b16 %v234, %v234
    %v251 = vpack.c.b16 %v235, %v235
    %v252 = vpack.c.b16 %v236, %v236
    %v253 = vpack.c.b16 %v237, %v237
    %v254 = vpack.c.b16 %v238, %v238
    %v255 = vpack.c.b16 %v239, %v239
    %v256 = vpack.c.b16 %v240, %v240
    %v257 = vpack.c.b16 %v241, %v241
    %v258 = vpack.c.b16 %v242, %v242
    %275 = vst [vmem:[#allocation2] sm:$0xf] %v243
    %276 = vst [vmem:[#allocation2 + $0x20] sm:$0xf] %v244
    %277 = vst [vmem:[#allocation2 + $0x40] sm:$0xf] %v245
    %278 = vst [vmem:[#allocation2 + $0x60] sm:$0xf] %v246
    %279 = vst [vmem:[#allocation2 + $0x80] sm:$0xf] %v247
    %280 = vst [vmem:[#allocation2 + $0xa0] sm:$0xf] %v248
    %281 = vst [vmem:[#allocation2 + $0xc0] sm:$0xf] %v249
    %282 = vst [vmem:[#allocation2 + $0xe0] sm:$0xf] %v250
    %283 = vst [vmem:[#allocation2 + $0x100] sm:$0xf] %v251
    %284 = vst [vmem:[#allocation2 + $0x120] sm:$0xf] %v252
    %285 = vst [vmem:[#allocation2 + $0x140] sm:$0xf] %v253
    %286 = vst [vmem:[#allocation2 + $0x160] sm:$0xf] %v254
    %287 = vst [vmem:[#allocation2 + $0x180] sm:$0xf] %v255
    %288 = vst [vmem:[#allocation2 + $0x1a0] sm:$0xf] %v256
    %289 = vst [vmem:[#allocation2 + $0x1c0] sm:$0xf] %v257
    %290 = vst [vmem:[#allocation2 + $0x1e0] sm:$0xf] %v258
    %291 = vset.pattern.permute.xlu0 1
    %292 = vperm.xlu0 %291, %v113
    %v293 = vpop.permute.xlu0 %292
    %294 = vset.pattern.permute.xlu0 1
    %295 = vperm.xlu0 %294, %v114
    %v296 = vpop.permute.xlu0 %295
    %297 = vset.pattern.permute.xlu0 1
    %298 = vperm.xlu0 %297, %v115
    %v299 = vpop.permute.xlu0 %298
    %300 = vset.pattern.permute.xlu0 1
    %301 = vperm.xlu0 %300, %v116
    %v302 = vpop.permute.xlu0 %301
    %303 = vset.pattern.permute.xlu0 1
    %304 = vperm.xlu0 %303, %v117
    %v305 = vpop.permute.xlu0 %304
    %306 = vset.pattern.permute.xlu0 1
    %307 = vperm.xlu0 %306, %v118
    %v308 = vpop.permute.xlu0 %307
    %309 = vset.pattern.permute.xlu0 1
    %310 = vperm.xlu0 %309, %v119
    %v311 = vpop.permute.xlu0 %310
    %312 = vset.pattern.permute.xlu0 1
    %313 = vperm.xlu0 %312, %v120
    %v314 = vpop.permute.xlu0 %313
    %315 = vset.pattern.permute.xlu0 1
    %316 = vperm.xlu0 %315, %v121
    %v317 = vpop.permute.xlu0 %316
    %318 = vset.pattern.permute.xlu0 1
    %319 = vperm.xlu0 %318, %v122
    %v320 = vpop.permute.xlu0 %319
    %321 = vset.pattern.permute.xlu0 1
    %322 = vperm.xlu0 %321, %v123
    %v323 = vpop.permute.xlu0 %322
    %324 = vset.pattern.permute.xlu0 1
    %325 = vperm.xlu0 %324, %v124
    %v326 = vpop.permute.xlu0 %325
    %327 = vset.pattern.permute.xlu0 1
    %328 = vperm.xlu0 %327, %v125
    %v329 = vpop.permute.xlu0 %328
    %330 = vset.pattern.permute.xlu0 1
    %331 = vperm.xlu0 %330, %v126
    %v332 = vpop.permute.xlu0 %331
    %333 = vset.pattern.permute.xlu0 1
    %334 = vperm.xlu0 %333, %v127
    %v335 = vpop.permute.xlu0 %334
    %336 = vset.pattern.permute.xlu0 1
    %337 = vperm.xlu0 %336, %v128
    %v338 = vpop.permute.xlu0 %337
    %vm339 = vcmp.eq.s32.totalorder %v130, %v293
    %vm340 = vcmp.eq.s32.totalorder %v130, %v296
    %vm341 = vcmp.eq.s32.totalorder %v130, %v299
    %vm342 = vcmp.eq.s32.totalorder %v130, %v302
    %vm343 = vcmp.eq.s32.totalorder %v130, %v305
    %vm344 = vcmp.eq.s32.totalorder %v130, %v308
    %vm345 = vcmp.eq.s32.totalorder %v130, %v311
    %vm346 = vcmp.eq.s32.totalorder %v130, %v314
    %vm347 = vcmp.eq.s32.totalorder %v130, %v317
    %vm348 = vcmp.eq.s32.totalorder %v130, %v320
    %vm349 = vcmp.eq.s32.totalorder %v130, %v323
    %vm350 = vcmp.eq.s32.totalorder %v130, %v326
    %vm351 = vcmp.eq.s32.totalorder %v130, %v329
    %vm352 = vcmp.eq.s32.totalorder %v130, %v332
    %vm353 = vcmp.eq.s32.totalorder %v130, %v335
    %vm354 = vcmp.eq.s32.totalorder %v130, %v338
    %v355 = vsel %vm339, 1.0, 0.0
    %v356 = vsel %vm340, 1.0, 0.0
    %v357 = vsel %vm341, 1.0, 0.0
    %v358 = vsel %vm342, 1.0, 0.0
    %v359 = vsel %vm343, 1.0, 0.0
    %v360 = vsel %vm344, 1.0, 0.0
    %v361 = vsel %vm345, 1.0, 0.0
    %v362 = vsel %vm346, 1.0, 0.0
    %v363 = vsel %vm347, 1.0, 0.0
    %v364 = vsel %vm348, 1.0, 0.0
    %v365 = vsel %vm349, 1.0, 0.0
    %v366 = vsel %vm350, 1.0, 0.0
    %v367 = vsel %vm351, 1.0, 0.0
    %v368 = vsel %vm352, 1.0, 0.0
    %v369 = vsel %vm353, 1.0, 0.0
    %v370 = vsel %vm354, 1.0, 0.0
    %v371 = vpack.c.bf16 %v356, %v355
    %v372 = vpack.c.bf16 %v358, %v357
    %v373 = vpack.c.bf16 %v360, %v359
    %v374 = vpack.c.bf16 %v362, %v361
    %v375 = vpack.c.bf16 %v364, %v363
    %v376 = vpack.c.bf16 %v366, %v365
    %v377 = vpack.c.bf16 %v368, %v367
    %v378 = vpack.c.bf16 %v370, %v369
    %v387 = vunpack.c.l.b16 %v371
    %v388 = vunpack.c.h.b16 %v371
    %v389 = vunpack.c.l.b16 %v372
    %v390 = vunpack.c.h.b16 %v372
    %v391 = vunpack.c.l.b16 %v373
    %v392 = vunpack.c.h.b16 %v373
    %v393 = vunpack.c.l.b16 %v374
    %v394 = vunpack.c.h.b16 %v374
    %v395 = vunpack.c.l.b16 %v375
    %v396 = vunpack.c.h.b16 %v375
    %v397 = vunpack.c.l.b16 %v376
    %v398 = vunpack.c.h.b16 %v376
    %v399 = vunpack.c.l.b16 %v377
    %v400 = vunpack.c.h.b16 %v377
    %v401 = vunpack.c.l.b16 %v378
    %v402 = vunpack.c.h.b16 %v378
    %v403 = vpack.c.b16 %v387, %v387
    %v404 = vpack.c.b16 %v388, %v388
    %v405 = vpack.c.b16 %v389, %v389
    %v406 = vpack.c.b16 %v390, %v390
    %v407 = vpack.c.b16 %v391, %v391
    %v408 = vpack.c.b16 %v392, %v392
    %v409 = vpack.c.b16 %v393, %v393
    %v410 = vpack.c.b16 %v394, %v394
    %v411 = vpack.c.b16 %v395, %v395
    %v412 = vpack.c.b16 %v396, %v396
    %v413 = vpack.c.b16 %v397, %v397
    %v414 = vpack.c.b16 %v398, %v398
    %v415 = vpack.c.b16 %v399, %v399
    %v416 = vpack.c.b16 %v400, %v400
    %v417 = vpack.c.b16 %v401, %v401
    %v418 = vpack.c.b16 %v402, %v402
    %435 = vst [vmem:[#allocation2 + $0x4] sm:$0xf] %v403
    %436 = vst [vmem:[#allocation2 + $0x24] sm:$0xf] %v404
    %437 = vst [vmem:[#allocation2 + $0x44] sm:$0xf] %v405
    %438 = vst [vmem:[#allocation2 + $0x64] sm:$0xf] %v406
    %439 = vst [vmem:[#allocation2 + $0x84] sm:$0xf] %v407
    %440 = vst [vmem:[#allocation2 + $0xa4] sm:$0xf] %v408
    %441 = vst [vmem:[#allocation2 + $0xc4] sm:$0xf] %v409
    %442 = vst [vmem:[#allocation2 + $0xe4] sm:$0xf] %v410
    %443 = vst [vmem:[#allocation2 + $0x104] sm:$0xf] %v411
    %444 = vst [vmem:[#allocation2 + $0x124] sm:$0xf] %v412
    %445 = vst [vmem:[#allocation2 + $0x144] sm:$0xf] %v413
    %446 = vst [vmem:[#allocation2 + $0x164] sm:$0xf] %v414
    %447 = vst [vmem:[#allocation2 + $0x184] sm:$0xf] %v415
    %448 = vst [vmem:[#allocation2 + $0x1a4] sm:$0xf] %v416
    %449 = vst [vmem:[#allocation2 + $0x1c4] sm:$0xf] %v417
    %450 = vst [vmem:[#allocation2 + $0x1e4] sm:$0xf] %v418
    %451 = vset.pattern.permute.xlu0 2
    %452 = vperm.xlu0 %451, %v113
    %v453 = vpop.permute.xlu0 %452
    %454 = vset.pattern.permute.xlu0 2
    %455 = vperm.xlu0 %454, %v114
    %v456 = vpop.permute.xlu0 %455
    %457 = vset.pattern.permute.xlu0 2
    %458 = vperm.xlu0 %457, %v115
    %v459 = vpop.permute.xlu0 %458
    %460 = vset.pattern.permute.xlu0 2
    %461 = vperm.xlu0 %460, %v116
    %v462 = vpop.permute.xlu0 %461
    %463 = vset.pattern.permute.xlu0 2
    %464 = vperm.xlu0 %463, %v117
    %v465 = vpop.permute.xlu0 %464
    %466 = vset.pattern.permute.xlu0 2
    %467 = vperm.xlu0 %466, %v118
    %v468 = vpop.permute.xlu0 %467
    %469 = vset.pattern.permute.xlu0 2
    %470 = vperm.xlu0 %469, %v119
    %v471 = vpop.permute.xlu0 %470
    %472 = vset.pattern.permute.xlu0 2
    %473 = vperm.xlu0 %472, %v120
    %v474 = vpop.permute.xlu0 %473
    %475 = vset.pattern.permute.xlu0 2
    %476 = vperm.xlu0 %475, %v121
    %v477 = vpop.permute.xlu0 %476
    %478 = vset.pattern.permute.xlu0 2
    %479 = vperm.xlu0 %478, %v122
    %v480 = vpop.permute.xlu0 %479
    %481 = vset.pattern.permute.xlu0 2
    %482 = vperm.xlu0 %481, %v123
    %v483 = vpop.permute.xlu0 %482
    %484 = vset.pattern.permute.xlu0 2
    %485 = vperm.xlu0 %484, %v124
    %v486 = vpop.permute.xlu0 %485
    %487 = vset.pattern.permute.xlu0 2
    %488 = vperm.xlu0 %487, %v125
    %v489 = vpop.permute.xlu0 %488
    %490 = vset.pattern.permute.xlu0 2
    %491 = vperm.xlu0 %490, %v126
    %v492 = vpop.permute.xlu0 %491
    %493 = vset.pattern.permute.xlu0 2
    %494 = vperm.xlu0 %493, %v127
    %v495 = vpop.permute.xlu0 %494
    %496 = vset.pattern.permute.xlu0 2
    %497 = vperm.xlu0 %496, %v128
    %v498 = vpop.permute.xlu0 %497
    %vm499 = vcmp.eq.s32.totalorder %v130, %v453
    %vm500 = vcmp.eq.s32.totalorder %v130, %v456
    %vm501 = vcmp.eq.s32.totalorder %v130, %v459
    %vm502 = vcmp.eq.s32.totalorder %v130, %v462
    %vm503 = vcmp.eq.s32.totalorder %v130, %v465
    %vm504 = vcmp.eq.s32.totalorder %v130, %v468
    %vm505 = vcmp.eq.s32.totalorder %v130, %v471
    %vm506 = vcmp.eq.s32.totalorder %v130, %v474
    %vm507 = vcmp.eq.s32.totalorder %v130, %v477
    %vm508 = vcmp.eq.s32.totalorder %v130, %v480
    %vm509 = vcmp.eq.s32.totalorder %v130, %v483
    %vm510 = vcmp.eq.s32.totalorder %v130, %v486
    %vm511 = vcmp.eq.s32.totalorder %v130, %v489
    %vm512 = vcmp.eq.s32.totalorder %v130, %v492
    %vm513 = vcmp.eq.s32.totalorder %v130, %v495
    %vm514 = vcmp.eq.s32.totalorder %v130, %v498
    %v515 = vsel %vm499, 1.0, 0.0
    %v516 = vsel %vm500, 1.0, 0.0
    %v517 = vsel %vm501, 1.0, 0.0
    %v518 = vsel %vm502, 1.0, 0.0
    %v519 = vsel %vm503, 1.0, 0.0
    %v520 = vsel %vm504, 1.0, 0.0
    %v521 = vsel %vm505, 1.0, 0.0
    %v522 = vsel %vm506, 1.0, 0.0
    %v523 = vsel %vm507, 1.0, 0.0
    %v524 = vsel %vm508, 1.0, 0.0
    %v525 = vsel %vm509, 1.0, 0.0
    %v526 = vsel %vm510, 1.0, 0.0
    %v527 = vsel %vm511, 1.0, 0.0
    %v528 = vsel %vm512, 1.0, 0.0
    %v529 = vsel %vm513, 1.0, 0.0
    %v530 = vsel %vm514, 1.0, 0.0
    %v531 = vpack.c.bf16 %v516, %v515
    %v532 = vpack.c.bf16 %v518, %v517
    %v533 = vpack.c.bf16 %v520, %v519
    %v534 = vpack.c.bf16 %v522, %v521
    %v535 = vpack.c.bf16 %v524, %v523
    %v536 = vpack.c.bf16 %v526, %v525
    %v537 = vpack.c.bf16 %v528, %v527
    %v538 = vpack.c.bf16 %v530, %v529
    %v547 = vunpack.c.l.b16 %v531
    %v548 = vunpack.c.h.b16 %v531
    %v549 = vunpack.c.l.b16 %v532
    %v550 = vunpack.c.h.b16 %v532
    %v551 = vunpack.c.l.b16 %v533
    %v552 = vunpack.c.h.b16 %v533
    %v553 = vunpack.c.l.b16 %v534
    %v554 = vunpack.c.h.b16 %v534
    %v555 = vunpack.c.l.b16 %v535
    %v556 = vunpack.c.h.b16 %v535
    %v557 = vunpack.c.l.b16 %v536
    %v558 = vunpack.c.h.b16 %v536
    %v559 = vunpack.c.l.b16 %v537
    %v560 = vunpack.c.h.b16 %v537
    %v561 = vunpack.c.l.b16 %v538
    %v562 = vunpack.c.h.b16 %v538
    %v563 = vpack.c.b16 %v547, %v547
    %v564 = vpack.c.b16 %v548, %v548
    %v565 = vpack.c.b16 %v549, %v549
    %v566 = vpack.c.b16 %v550, %v550
    %v567 = vpack.c.b16 %v551, %v551
    %v568 = vpack.c.b16 %v552, %v552
    %v569 = vpack.c.b16 %v553, %v553
    %v570 = vpack.c.b16 %v554, %v554
    %v571 = vpack.c.b16 %v555, %v555
    %v572 = vpack.c.b16 %v556, %v556
    %v573 = vpack.c.b16 %v557, %v557
    %v574 = vpack.c.b16 %v558, %v558
    %v575 = vpack.c.b16 %v559, %v559
    %v576 = vpack.c.b16 %v560, %v560
    %v577 = vpack.c.b16 %v561, %v561
    %v578 = vpack.c.b16 %v562, %v562
    %595 = vst [vmem:[#allocation2 + $0x8] sm:$0xf] %v563
    %596 = vst [vmem:[#allocation2 + $0x28] sm:$0xf] %v564
    %597 = vst [vmem:[#allocation2 + $0x48] sm:$0xf] %v565
    %598 = vst [vmem:[#allocation2 + $0x68] sm:$0xf] %v566
    %599 = vst [vmem:[#allocation2 + $0x88] sm:$0xf] %v567
    %600 = vst [vmem:[#allocation2 + $0xa8] sm:$0xf] %v568
    %601 = vst [vmem:[#allocation2 + $0xc8] sm:$0xf] %v569
    %602 = vst [vmem:[#allocation2 + $0xe8] sm:$0xf] %v570
    %603 = vst [vmem:[#allocation2 + $0x108] sm:$0xf] %v571
    %604 = vst [vmem:[#allocation2 + $0x128] sm:$0xf] %v572
    %605 = vst [vmem:[#allocation2 + $0x148] sm:$0xf] %v573
    %606 = vst [vmem:[#allocation2 + $0x168] sm:$0xf] %v574
    %607 = vst [vmem:[#allocation2 + $0x188] sm:$0xf] %v575
    %608 = vst [vmem:[#allocation2 + $0x1a8] sm:$0xf] %v576
    %609 = vst [vmem:[#allocation2 + $0x1c8] sm:$0xf] %v577
    %610 = vst [vmem:[#allocation2 + $0x1e8] sm:$0xf] %v578
    %611 = vset.pattern.permute.xlu0 3
    %612 = vperm.xlu0 %611, %v113
    %v613 = vpop.permute.xlu0 %612
    %614 = vset.pattern.permute.xlu0 3
    %615 = vperm.xlu0 %614, %v114
    %v616 = vpop.permute.xlu0 %615
    %617 = vset.pattern.permute.xlu0 3
    %618 = vperm.xlu0 %617, %v115
    %v619 = vpop.permute.xlu0 %618
    %620 = vset.pattern.permute.xlu0 3
    %621 = vperm.xlu0 %620, %v116
    %v622 = vpop.permute.xlu0 %621
    %623 = vset.pattern.permute.xlu0 3
    %624 = vperm.xlu0 %623, %v117
    %v625 = vpop.permute.xlu0 %624
    %626 = vset.pattern.permute.xlu0 3
    %627 = vperm.xlu0 %626, %v118
    %v628 = vpop.permute.xlu0 %627
    %629 = vset.pattern.permute.xlu0 3
    %630 = vperm.xlu0 %629, %v119
    %v631 = vpop.permute.xlu0 %630
    %632 = vset.pattern.permute.xlu0 3
    %633 = vperm.xlu0 %632, %v120
    %v634 = vpop.permute.xlu0 %633
    %635 = vset.pattern.permute.xlu0 3
    %636 = vperm.xlu0 %635, %v121
    %v637 = vpop.permute.xlu0 %636
    %638 = vset.pattern.permute.xlu0 3
    %639 = vperm.xlu0 %638, %v122
    %v640 = vpop.permute.xlu0 %639
    %641 = vset.pattern.permute.xlu0 3
    %642 = vperm.xlu0 %641, %v123
    %v643 = vpop.permute.xlu0 %642
    %644 = vset.pattern.permute.xlu0 3
    %645 = vperm.xlu0 %644, %v124
    %v646 = vpop.permute.xlu0 %645
    %647 = vset.pattern.permute.xlu0 3
    %648 = vperm.xlu0 %647, %v125
    %v649 = vpop.permute.xlu0 %648
    %650 = vset.pattern.permute.xlu0 3
    %651 = vperm.xlu0 %650, %v126
    %v652 = vpop.permute.xlu0 %651
    %653 = vset.pattern.permute.xlu0 3
    %654 = vperm.xlu0 %653, %v127
    %v655 = vpop.permute.xlu0 %654
    %656 = vset.pattern.permute.xlu0 3
    %657 = vperm.xlu0 %656, %v128
    %v658 = vpop.permute.xlu0 %657
    %vm659 = vcmp.eq.s32.totalorder %v130, %v613
    %vm660 = vcmp.eq.s32.totalorder %v130, %v616
    %vm661 = vcmp.eq.s32.totalorder %v130, %v619
    %vm662 = vcmp.eq.s32.totalorder %v130, %v622
    %vm663 = vcmp.eq.s32.totalorder %v130, %v625
    %vm664 = vcmp.eq.s32.totalorder %v130, %v628
    %vm665 = vcmp.eq.s32.totalorder %v130, %v631
    %vm666 = vcmp.eq.s32.totalorder %v130, %v634
    %vm667 = vcmp.eq.s32.totalorder %v130, %v637
    %vm668 = vcmp.eq.s32.totalorder %v130, %v640
    %vm669 = vcmp.eq.s32.totalorder %v130, %v643
    %vm670 = vcmp.eq.s32.totalorder %v130, %v646
    %vm671 = vcmp.eq.s32.totalorder %v130, %v649
    %vm672 = vcmp.eq.s32.totalorder %v130, %v652
    %vm673 = vcmp.eq.s32.totalorder %v130, %v655
    %vm674 = vcmp.eq.s32.totalorder %v130, %v658
    %v675 = vsel %vm659, 1.0, 0.0
    %v676 = vsel %vm660, 1.0, 0.0
    %v677 = vsel %vm661, 1.0, 0.0
    %v678 = vsel %vm662, 1.0, 0.0
    %v679 = vsel %vm663, 1.0, 0.0
    %v680 = vsel %vm664, 1.0, 0.0
    %v681 = vsel %vm665, 1.0, 0.0
    %v682 = vsel %vm666, 1.0, 0.0
    %v683 = vsel %vm667, 1.0, 0.0
    %v684 = vsel %vm668, 1.0, 0.0
    %v685 = vsel %vm669, 1.0, 0.0
    %v686 = vsel %vm670, 1.0, 0.0
    %v687 = vsel %vm671, 1.0, 0.0
    %v688 = vsel %vm672, 1.0, 0.0
    %v689 = vsel %vm673, 1.0, 0.0
    %v690 = vsel %vm674, 1.0, 0.0
    %v691 = vpack.c.bf16 %v676, %v675
    %v692 = vpack.c.bf16 %v678, %v677
    %v693 = vpack.c.bf16 %v680, %v679
    %v694 = vpack.c.bf16 %v682, %v681
    %v695 = vpack.c.bf16 %v684, %v683
    %v696 = vpack.c.bf16 %v686, %v685
    %v697 = vpack.c.bf16 %v688, %v687
    %v698 = vpack.c.bf16 %v690, %v689
    %v707 = vunpack.c.l.b16 %v691
    %v708 = vunpack.c.h.b16 %v691
    %v709 = vunpack.c.l.b16 %v692
    %v710 = vunpack.c.h.b16 %v692
    %v711 = vunpack.c.l.b16 %v693
    %v712 = vunpack.c.h.b16 %v693
    %v713 = vunpack.c.l.b16 %v694
    %v714 = vunpack.c.h.b16 %v694
    %v715 = vunpack.c.l.b16 %v695
    %v716 = vunpack.c.h.b16 %v695
    %v717 = vunpack.c.l.b16 %v696
    %v718 = vunpack.c.h.b16 %v696
    %v719 = vunpack.c.l.b16 %v697
    %v720 = vunpack.c.h.b16 %v697
    %v721 = vunpack.c.l.b16 %v698
    %v722 = vunpack.c.h.b16 %v698
    %v723 = vpack.c.b16 %v707, %v707
    %v724 = vpack.c.b16 %v708, %v708
    %v725 = vpack.c.b16 %v709, %v709
    %v726 = vpack.c.b16 %v710, %v710
    %v727 = vpack.c.b16 %v711, %v711
    %v728 = vpack.c.b16 %v712, %v712
    %v729 = vpack.c.b16 %v713, %v713
    %v730 = vpack.c.b16 %v714, %v714
    %v731 = vpack.c.b16 %v715, %v715
    %v732 = vpack.c.b16 %v716, %v716
    %v733 = vpack.c.b16 %v717, %v717
    %v734 = vpack.c.b16 %v718, %v718
    %v735 = vpack.c.b16 %v719, %v719
    %v736 = vpack.c.b16 %v720, %v720
    %v737 = vpack.c.b16 %v721, %v721
    %v738 = vpack.c.b16 %v722, %v722
    %755 = vst [vmem:[#allocation2 + $0xc] sm:$0xf] %v723
    %756 = vst [vmem:[#allocation2 + $0x2c] sm:$0xf] %v724
    %757 = vst [vmem:[#allocation2 + $0x4c] sm:$0xf] %v725
    %758 = vst [vmem:[#allocation2 + $0x6c] sm:$0xf] %v726
    %759 = vst [vmem:[#allocation2 + $0x8c] sm:$0xf] %v727
    %760 = vst [vmem:[#allocation2 + $0xac] sm:$0xf] %v728
    %761 = vst [vmem:[#allocation2 + $0xcc] sm:$0xf] %v729
    %762 = vst [vmem:[#allocation2 + $0xec] sm:$0xf] %v730
    %763 = vst [vmem:[#allocation2 + $0x10c] sm:$0xf] %v731
    %764 = vst [vmem:[#allocation2 + $0x12c] sm:$0xf] %v732
    %765 = vst [vmem:[#allocation2 + $0x14c] sm:$0xf] %v733
    %766 = vst [vmem:[#allocation2 + $0x16c] sm:$0xf] %v734
    %767 = vst [vmem:[#allocation2 + $0x18c] sm:$0xf] %v735
    %768 = vst [vmem:[#allocation2 + $0x1ac] sm:$0xf] %v736
    %769 = vst [vmem:[#allocation2 + $0x1cc] sm:$0xf] %v737
    %770 = vst [vmem:[#allocation2 + $0x1ec] sm:$0xf] %v738
    %771 = vset.pattern.permute.xlu0 4
    %772 = vperm.xlu0 %771, %v113
    %v773 = vpop.permute.xlu0 %772
    %774 = vset.pattern.permute.xlu0 4
    %775 = vperm.xlu0 %774, %v114
    %v776 = vpop.permute.xlu0 %775
    %777 = vset.pattern.permute.xlu0 4
    %778 = vperm.xlu0 %777, %v115
    %v779 = vpop.permute.xlu0 %778
    %780 = vset.pattern.permute.xlu0 4
    %781 = vperm.xlu0 %780, %v116
    %v782 = vpop.permute.xlu0 %781
    %783 = vset.pattern.permute.xlu0 4
    %784 = vperm.xlu0 %783, %v117
    %v785 = vpop.permute.xlu0 %784
    %786 = vset.pattern.permute.xlu0 4
    %787 = vperm.xlu0 %786, %v118
    %v788 = vpop.permute.xlu0 %787
    %789 = vset.pattern.permute.xlu0 4
    %790 = vperm.xlu0 %789, %v119
    %v791 = vpop.permute.xlu0 %790
    %792 = vset.pattern.permute.xlu0 4
    %793 = vperm.xlu0 %792, %v120
    %v794 = vpop.permute.xlu0 %793
    %795 = vset.pattern.permute.xlu0 4
    %796 = vperm.xlu0 %795, %v121
    %v797 = vpop.permute.xlu0 %796
    %798 = vset.pattern.permute.xlu0 4
    %799 = vperm.xlu0 %798, %v122
    %v800 = vpop.permute.xlu0 %799
    %801 = vset.pattern.permute.xlu0 4
    %802 = vperm.xlu0 %801, %v123
    %v803 = vpop.permute.xlu0 %802
    %804 = vset.pattern.permute.xlu0 4
    %805 = vperm.xlu0 %804, %v124
    %v806 = vpop.permute.xlu0 %805
    %807 = vset.pattern.permute.xlu0 4
    %808 = vperm.xlu0 %807, %v125
    %v809 = vpop.permute.xlu0 %808
    %810 = vset.pattern.permute.xlu0 4
    %811 = vperm.xlu0 %810, %v126
    %v812 = vpop.permute.xlu0 %811
    %813 = vset.pattern.permute.xlu0 4
    %814 = vperm.xlu0 %813, %v127
    %v815 = vpop.permute.xlu0 %814
    %816 = vset.pattern.permute.xlu0 4
    %817 = vperm.xlu0 %816, %v128
    %v818 = vpop.permute.xlu0 %817
    %vm819 = vcmp.eq.s32.totalorder %v130, %v773
    %vm820 = vcmp.eq.s32.totalorder %v130, %v776
    %vm821 = vcmp.eq.s32.totalorder %v130, %v779
    %vm822 = vcmp.eq.s32.totalorder %v130, %v782
    %vm823 = vcmp.eq.s32.totalorder %v130, %v785
    %vm824 = vcmp.eq.s32.totalorder %v130, %v788
    %vm825 = vcmp.eq.s32.totalorder %v130, %v791
    %vm826 = vcmp.eq.s32.totalorder %v130, %v794
    %vm827 = vcmp.eq.s32.totalorder %v130, %v797
    %vm828 = vcmp.eq.s32.totalorder %v130, %v800
    %vm829 = vcmp.eq.s32.totalorder %v130, %v803
    %vm830 = vcmp.eq.s32.totalorder %v130, %v806
    %vm831 = vcmp.eq.s32.totalorder %v130, %v809
    %vm832 = vcmp.eq.s32.totalorder %v130, %v812
    %vm833 = vcmp.eq.s32.totalorder %v130, %v815
    %vm834 = vcmp.eq.s32.totalorder %v130, %v818
    %v835 = vsel %vm819, 1.0, 0.0
    %v836 = vsel %vm820, 1.0, 0.0
    %v837 = vsel %vm821, 1.0, 0.0
    %v838 = vsel %vm822, 1.0, 0.0
    %v839 = vsel %vm823, 1.0, 0.0
    %v840 = vsel %vm824, 1.0, 0.0
    %v841 = vsel %vm825, 1.0, 0.0
    %v842 = vsel %vm826, 1.0, 0.0
    %v843 = vsel %vm827, 1.0, 0.0
    %v844 = vsel %vm828, 1.0, 0.0
    %v845 = vsel %vm829, 1.0, 0.0
    %v846 = vsel %vm830, 1.0, 0.0
    %v847 = vsel %vm831, 1.0, 0.0
    %v848 = vsel %vm832, 1.0, 0.0
    %v849 = vsel %vm833, 1.0, 0.0
    %v850 = vsel %vm834, 1.0, 0.0
    %v851 = vpack.c.bf16 %v836, %v835
    %v852 = vpack.c.bf16 %v838, %v837
    %v853 = vpack.c.bf16 %v840, %v839
    %v854 = vpack.c.bf16 %v842, %v841
    %v855 = vpack.c.bf16 %v844, %v843
    %v856 = vpack.c.bf16 %v846, %v845
    %v857 = vpack.c.bf16 %v848, %v847
    %v858 = vpack.c.bf16 %v850, %v849
    %v867 = vunpack.c.l.b16 %v851
    %v868 = vunpack.c.h.b16 %v851
    %v869 = vunpack.c.l.b16 %v852
    %v870 = vunpack.c.h.b16 %v852
    %v871 = vunpack.c.l.b16 %v853
    %v872 = vunpack.c.h.b16 %v853
    %v873 = vunpack.c.l.b16 %v854
    %v874 = vunpack.c.h.b16 %v854
    %v875 = vunpack.c.l.b16 %v855
    %v876 = vunpack.c.h.b16 %v855
    %v877 = vunpack.c.l.b16 %v856
    %v878 = vunpack.c.h.b16 %v856
    %v879 = vunpack.c.l.b16 %v857
    %v880 = vunpack.c.h.b16 %v857
    %v881 = vunpack.c.l.b16 %v858
    %v882 = vunpack.c.h.b16 %v858
    %v883 = vpack.c.b16 %v867, %v867
    %v884 = vpack.c.b16 %v868, %v868
    %v885 = vpack.c.b16 %v869, %v869
    %v886 = vpack.c.b16 %v870, %v870
    %v887 = vpack.c.b16 %v871, %v871
    %v888 = vpack.c.b16 %v872, %v872
    %v889 = vpack.c.b16 %v873, %v873
    %v890 = vpack.c.b16 %v874, %v874
    %v891 = vpack.c.b16 %v875, %v875
    %v892 = vpack.c.b16 %v876, %v876
    %v893 = vpack.c.b16 %v877, %v877
    %v894 = vpack.c.b16 %v878, %v878
    %v895 = vpack.c.b16 %v879, %v879
    %v896 = vpack.c.b16 %v880, %v880
    %v897 = vpack.c.b16 %v881, %v881
    %v898 = vpack.c.b16 %v882, %v882
    %915 = vst [vmem:[#allocation2 + $0x10] sm:$0xf] %v883
    %916 = vst [vmem:[#allocation2 + $0x30] sm:$0xf] %v884
    %917 = vst [vmem:[#allocation2 + $0x50] sm:$0xf] %v885
    %918 = vst [vmem:[#allocation2 + $0x70] sm:$0xf] %v886
    %919 = vst [vmem:[#allocation2 + $0x90] sm:$0xf] %v887
    %920 = vst [vmem:[#allocation2 + $0xb0] sm:$0xf] %v888
    %921 = vst [vmem:[#allocation2 + $0xd0] sm:$0xf] %v889
    %922 = vst [vmem:[#allocation2 + $0xf0] sm:$0xf] %v890
    %923 = vst [vmem:[#allocation2 + $0x110] sm:$0xf] %v891
    %924 = vst [vmem:[#allocation2 + $0x130] sm:$0xf] %v892
    %925 = vst [vmem:[#allocation2 + $0x150] sm:$0xf] %v893
    %926 = vst [vmem:[#allocation2 + $0x170] sm:$0xf] %v894
    %927 = vst [vmem:[#allocation2 + $0x190] sm:$0xf] %v895
    %928 = vst [vmem:[#allocation2 + $0x1b0] sm:$0xf] %v896
    %929 = vst [vmem:[#allocation2 + $0x1d0] sm:$0xf] %v897
    %930 = vst [vmem:[#allocation2 + $0x1f0] sm:$0xf] %v898
    %931 = vset.pattern.permute.xlu0 5
    %932 = vperm.xlu0 %931, %v113
    %v933 = vpop.permute.xlu0 %932
    %934 = vset.pattern.permute.xlu0 5
    %935 = vperm.xlu0 %934, %v114
    %v936 = vpop.permute.xlu0 %935
    %937 = vset.pattern.permute.xlu0 5
    %938 = vperm.xlu0 %937, %v115
    %v939 = vpop.permute.xlu0 %938
    %940 = vset.pattern.permute.xlu0 5
    %941 = vperm.xlu0 %940, %v116
    %v942 = vpop.permute.xlu0 %941
    %943 = vset.pattern.permute.xlu0 5
    %944 = vperm.xlu0 %943, %v117
    %v945 = vpop.permute.xlu0 %944
    %946 = vset.pattern.permute.xlu0 5
    %947 = vperm.xlu0 %946, %v118
    %v948 = vpop.permute.xlu0 %947
    %949 = vset.pattern.permute.xlu0 5
    %950 = vperm.xlu0 %949, %v119
    %v951 = vpop.permute.xlu0 %950
    %952 = vset.pattern.permute.xlu0 5
    %953 = vperm.xlu0 %952, %v120
    %v954 = vpop.permute.xlu0 %953
    %955 = vset.pattern.permute.xlu0 5
    %956 = vperm.xlu0 %955, %v121
    %v957 = vpop.permute.xlu0 %956
    %958 = vset.pattern.permute.xlu0 5
    %959 = vperm.xlu0 %958, %v122
    %v960 = vpop.permute.xlu0 %959
    %961 = vset.pattern.permute.xlu0 5
    %962 = vperm.xlu0 %961, %v123
    %v963 = vpop.permute.xlu0 %962
    %964 = vset.pattern.permute.xlu0 5
    %965 = vperm.xlu0 %964, %v124
    %v966 = vpop.permute.xlu0 %965
    %967 = vset.pattern.permute.xlu0 5
    %968 = vperm.xlu0 %967, %v125
    %v969 = vpop.permute.xlu0 %968
    %970 = vset.pattern.permute.xlu0 5
    %971 = vperm.xlu0 %970, %v126
    %v972 = vpop.permute.xlu0 %971
    %973 = vset.pattern.permute.xlu0 5
    %974 = vperm.xlu0 %973, %v127
    %v975 = vpop.permute.xlu0 %974
    %976 = vset.pattern.permute.xlu0 5
    %977 = vperm.xlu0 %976, %v128
    %v978 = vpop.permute.xlu0 %977
    %vm979 = vcmp.eq.s32.totalorder %v130, %v933
    %vm980 = vcmp.eq.s32.totalorder %v130, %v936
    %vm981 = vcmp.eq.s32.totalorder %v130, %v939
    %vm982 = vcmp.eq.s32.totalorder %v130, %v942
    %vm983 = vcmp.eq.s32.totalorder %v130, %v945
    %vm984 = vcmp.eq.s32.totalorder %v130, %v948
    %vm985 = vcmp.eq.s32.totalorder %v130, %v951
    %vm986 = vcmp.eq.s32.totalorder %v130, %v954
    %vm987 = vcmp.eq.s32.totalorder %v130, %v957
    %vm988 = vcmp.eq.s32.totalorder %v130, %v960
    %vm989 = vcmp.eq.s32.totalorder %v130, %v963
    %vm990 = vcmp.eq.s32.totalorder %v130, %v966
    %vm991 = vcmp.eq.s32.totalorder %v130, %v969
    %vm992 = vcmp.eq.s32.totalorder %v130, %v972
    %vm993 = vcmp.eq.s32.totalorder %v130, %v975
    %vm994 = vcmp.eq.s32.totalorder %v130, %v978
    %v995 = vsel %vm979, 1.0, 0.0
    %v996 = vsel %vm980, 1.0, 0.0
    %v997 = vsel %vm981, 1.0, 0.0
    %v998 = vsel %vm982, 1.0, 0.0
    %v999 = vsel %vm983, 1.0, 0.0
    %v1000 = vsel %vm984, 1.0, 0.0
    %v1001 = vsel %vm985, 1.0, 0.0
    %v1002 = vsel %vm986, 1.0, 0.0
    %v1003 = vsel %vm987, 1.0, 0.0
    %v1004 = vsel %vm988, 1.0, 0.0
    %v1005 = vsel %vm989, 1.0, 0.0
    %v1006 = vsel %vm990, 1.0, 0.0
    %v1007 = vsel %vm991, 1.0, 0.0
    %v1008 = vsel %vm992, 1.0, 0.0
    %v1009 = vsel %vm993, 1.0, 0.0
    %v1010 = vsel %vm994, 1.0, 0.0
    %v1011 = vpack.c.bf16 %v996, %v995
    %v1012 = vpack.c.bf16 %v998, %v997
    %v1013 = vpack.c.bf16 %v1000, %v999
    %v1014 = vpack.c.bf16 %v1002, %v1001
    %v1015 = vpack.c.bf16 %v1004, %v1003
    %v1016 = vpack.c.bf16 %v1006, %v1005
    %v1017 = vpack.c.bf16 %v1008, %v1007
    %v1018 = vpack.c.bf16 %v1010, %v1009
    %v1027 = vunpack.c.l.b16 %v1011
    %v1028 = vunpack.c.h.b16 %v1011
    %v1029 = vunpack.c.l.b16 %v1012
    %v1030 = vunpack.c.h.b16 %v1012
    %v1031 = vunpack.c.l.b16 %v1013
    %v1032 = vunpack.c.h.b16 %v1013
    %v1033 = vunpack.c.l.b16 %v1014
    %v1034 = vunpack.c.h.b16 %v1014
    %v1035 = vunpack.c.l.b16 %v1015
    %v1036 = vunpack.c.h.b16 %v1015
    %v1037 = vunpack.c.l.b16 %v1016
    %v1038 = vunpack.c.h.b16 %v1016
    %v1039 = vunpack.c.l.b16 %v1017
    %v1040 = vunpack.c.h.b16 %v1017
    %v1041 = vunpack.c.l.b16 %v1018
    %v1042 = vunpack.c.h.b16 %v1018
    %v1043 = vpack.c.b16 %v1027, %v1027
    %v1044 = vpack.c.b16 %v1028, %v1028
    %v1045 = vpack.c.b16 %v1029, %v1029
    %v1046 = vpack.c.b16 %v1030, %v1030
    %v1047 = vpack.c.b16 %v1031, %v1031
    %v1048 = vpack.c.b16 %v1032, %v1032
    %v1049 = vpack.c.b16 %v1033, %v1033
    %v1050 = vpack.c.b16 %v1034, %v1034
    %v1051 = vpack.c.b16 %v1035, %v1035
    %v1052 = vpack.c.b16 %v1036, %v1036
    %v1053 = vpack.c.b16 %v1037, %v1037
    %v1054 = vpack.c.b16 %v1038, %v1038
    %v1055 = vpack.c.b16 %v1039, %v1039
    %v1056 = vpack.c.b16 %v1040, %v1040
    %v1057 = vpack.c.b16 %v1041, %v1041
    %v1058 = vpack.c.b16 %v1042, %v1042
    %1075 = vst [vmem:[#allocation2 + $0x14] sm:$0xf] %v1043
    %1076 = vst [vmem:[#allocation2 + $0x34] sm:$0xf] %v1044
    %1077 = vst [vmem:[#allocation2 + $0x54] sm:$0xf] %v1045
    %1078 = vst [vmem:[#allocation2 + $0x74] sm:$0xf] %v1046
    %1079 = vst [vmem:[#allocation2 + $0x94] sm:$0xf] %v1047
    %1080 = vst [vmem:[#allocation2 + $0xb4] sm:$0xf] %v1048
    %1081 = vst [vmem:[#allocation2 + $0xd4] sm:$0xf] %v1049
    %1082 = vst [vmem:[#allocation2 + $0xf4] sm:$0xf] %v1050
    %1083 = vst [vmem:[#allocation2 + $0x114] sm:$0xf] %v1051
    %1084 = vst [vmem:[#allocation2 + $0x134] sm:$0xf] %v1052
    %1085 = vst [vmem:[#allocation2 + $0x154] sm:$0xf] %v1053
    %1086 = vst [vmem:[#allocation2 + $0x174] sm:$0xf] %v1054
    %1087 = vst [vmem:[#allocation2 + $0x194] sm:$0xf] %v1055
    %1088 = vst [vmem:[#allocation2 + $0x1b4] sm:$0xf] %v1056
    %1089 = vst [vmem:[#allocation2 + $0x1d4] sm:$0xf] %v1057
    %1090 = vst [vmem:[#allocation2 + $0x1f4] sm:$0xf] %v1058
    %1091 = vset.pattern.permute.xlu0 6
    %1092 = vperm.xlu0 %1091, %v113
    %v1093 = vpop.permute.xlu0 %1092
    %1094 = vset.pattern.permute.xlu0 6
    %1095 = vperm.xlu0 %1094, %v114
    %v1096 = vpop.permute.xlu0 %1095
    %1097 = vset.pattern.permute.xlu0 6
    %1098 = vperm.xlu0 %1097, %v115
    %v1099 = vpop.permute.xlu0 %1098
    %1100 = vset.pattern.permute.xlu0 6
    %1101 = vperm.xlu0 %1100, %v116
    %v1102 = vpop.permute.xlu0 %1101
    %1103 = vset.pattern.permute.xlu0 6
    %1104 = vperm.xlu0 %1103, %v117
    %v1105 = vpop.permute.xlu0 %1104
    %1106 = vset.pattern.permute.xlu0 6
    %1107 = vperm.xlu0 %1106, %v118
    %v1108 = vpop.permute.xlu0 %1107
    %1109 = vset.pattern.permute.xlu0 6
    %1110 = vperm.xlu0 %1109, %v119
    %v1111 = vpop.permute.xlu0 %1110
    %1112 = vset.pattern.permute.xlu0 6
    %1113 = vperm.xlu0 %1112, %v120
    %v1114 = vpop.permute.xlu0 %1113
    %1115 = vset.pattern.permute.xlu0 6
    %1116 = vperm.xlu0 %1115, %v121
    %v1117 = vpop.permute.xlu0 %1116
    %1118 = vset.pattern.permute.xlu0 6
    %1119 = vperm.xlu0 %1118, %v122
    %v1120 = vpop.permute.xlu0 %1119
    %1121 = vset.pattern.permute.xlu0 6
    %1122 = vperm.xlu0 %1121, %v123
    %v1123 = vpop.permute.xlu0 %1122
    %1124 = vset.pattern.permute.xlu0 6
    %1125 = vperm.xlu0 %1124, %v124
    %v1126 = vpop.permute.xlu0 %1125
    %1127 = vset.pattern.permute.xlu0 6
    %1128 = vperm.xlu0 %1127, %v125
    %v1129 = vpop.permute.xlu0 %1128
    %1130 = vset.pattern.permute.xlu0 6
    %1131 = vperm.xlu0 %1130, %v126
    %v1132 = vpop.permute.xlu0 %1131
    %1133 = vset.pattern.permute.xlu0 6
    %1134 = vperm.xlu0 %1133, %v127
    %v1135 = vpop.permute.xlu0 %1134
    %1136 = vset.pattern.permute.xlu0 6
    %1137 = vperm.xlu0 %1136, %v128
    %v1138 = vpop.permute.xlu0 %1137
    %vm1139 = vcmp.eq.s32.totalorder %v130, %v1093
    %vm1140 = vcmp.eq.s32.totalorder %v130, %v1096
    %vm1141 = vcmp.eq.s32.totalorder %v130, %v1099
    %vm1142 = vcmp.eq.s32.totalorder %v130, %v1102
    %vm1143 = vcmp.eq.s32.totalorder %v130, %v1105
    %vm1144 = vcmp.eq.s32.totalorder %v130, %v1108
    %vm1145 = vcmp.eq.s32.totalorder %v130, %v1111
    %vm1146 = vcmp.eq.s32.totalorder %v130, %v1114
    %vm1147 = vcmp.eq.s32.totalorder %v130, %v1117
    %vm1148 = vcmp.eq.s32.totalorder %v130, %v1120
    %vm1149 = vcmp.eq.s32.totalorder %v130, %v1123
    %vm1150 = vcmp.eq.s32.totalorder %v130, %v1126
    %vm1151 = vcmp.eq.s32.totalorder %v130, %v1129
    %vm1152 = vcmp.eq.s32.totalorder %v130, %v1132
    %vm1153 = vcmp.eq.s32.totalorder %v130, %v1135
    %vm1154 = vcmp.eq.s32.totalorder %v130, %v1138
    %v1155 = vsel %vm1139, 1.0, 0.0
    %v1156 = vsel %vm1140, 1.0, 0.0
    %v1157 = vsel %vm1141, 1.0, 0.0
    %v1158 = vsel %vm1142, 1.0, 0.0
    %v1159 = vsel %vm1143, 1.0, 0.0
    %v1160 = vsel %vm1144, 1.0, 0.0
    %v1161 = vsel %vm1145, 1.0, 0.0
    %v1162 = vsel %vm1146, 1.0, 0.0
    %v1163 = vsel %vm1147, 1.0, 0.0
    %v1164 = vsel %vm1148, 1.0, 0.0
    %v1165 = vsel %vm1149, 1.0, 0.0
    %v1166 = vsel %vm1150, 1.0, 0.0
    %v1167 = vsel %vm1151, 1.0, 0.0
    %v1168 = vsel %vm1152, 1.0, 0.0
    %v1169 = vsel %vm1153, 1.0, 0.0
    %v1170 = vsel %vm1154, 1.0, 0.0
    %v1171 = vpack.c.bf16 %v1156, %v1155
    %v1172 = vpack.c.bf16 %v1158, %v1157
    %v1173 = vpack.c.bf16 %v1160, %v1159
    %v1174 = vpack.c.bf16 %v1162, %v1161
    %v1175 = vpack.c.bf16 %v1164, %v1163
    %v1176 = vpack.c.bf16 %v1166, %v1165
    %v1177 = vpack.c.bf16 %v1168, %v1167
    %v1178 = vpack.c.bf16 %v1170, %v1169
    %v1187 = vunpack.c.l.b16 %v1171
    %v1188 = vunpack.c.h.b16 %v1171
    %v1189 = vunpack.c.l.b16 %v1172
    %v1190 = vunpack.c.h.b16 %v1172
    %v1191 = vunpack.c.l.b16 %v1173
    %v1192 = vunpack.c.h.b16 %v1173
    %v1193 = vunpack.c.l.b16 %v1174
    %v1194 = vunpack.c.h.b16 %v1174
    %v1195 = vunpack.c.l.b16 %v1175
    %v1196 = vunpack.c.h.b16 %v1175
    %v1197 = vunpack.c.l.b16 %v1176
    %v1198 = vunpack.c.h.b16 %v1176
    %v1199 = vunpack.c.l.b16 %v1177
    %v1200 = vunpack.c.h.b16 %v1177
    %v1201 = vunpack.c.l.b16 %v1178
    %v1202 = vunpack.c.h.b16 %v1178
    %v1203 = vpack.c.b16 %v1187, %v1187
    %v1204 = vpack.c.b16 %v1188, %v1188
    %v1205 = vpack.c.b16 %v1189, %v1189
    %v1206 = vpack.c.b16 %v1190, %v1190
    %v1207 = vpack.c.b16 %v1191, %v1191
    %v1208 = vpack.c.b16 %v1192, %v1192
    %v1209 = vpack.c.b16 %v1193, %v1193
    %v1210 = vpack.c.b16 %v1194, %v1194
    %v1211 = vpack.c.b16 %v1195, %v1195
    %v1212 = vpack.c.b16 %v1196, %v1196
    %v1213 = vpack.c.b16 %v1197, %v1197
    %v1214 = vpack.c.b16 %v1198, %v1198
    %v1215 = vpack.c.b16 %v1199, %v1199
    %v1216 = vpack.c.b16 %v1200, %v1200
    %v1217 = vpack.c.b16 %v1201, %v1201
    %v1218 = vpack.c.b16 %v1202, %v1202
    %1235 = vst [vmem:[#allocation2 + $0x18] sm:$0xf] %v1203
    %1236 = vst [vmem:[#allocation2 + $0x38] sm:$0xf] %v1204
    %1237 = vst [vmem:[#allocation2 + $0x58] sm:$0xf] %v1205
    %1238 = vst [vmem:[#allocation2 + $0x78] sm:$0xf] %v1206
    %1239 = vst [vmem:[#allocation2 + $0x98] sm:$0xf] %v1207
    %1240 = vst [vmem:[#allocation2 + $0xb8] sm:$0xf] %v1208
    %1241 = vst [vmem:[#allocation2 + $0xd8] sm:$0xf] %v1209
    %1242 = vst [vmem:[#allocation2 + $0xf8] sm:$0xf] %v1210
    %1243 = vst [vmem:[#allocation2 + $0x118] sm:$0xf] %v1211
    %1244 = vst [vmem:[#allocation2 + $0x138] sm:$0xf] %v1212
    %1245 = vst [vmem:[#allocation2 + $0x158] sm:$0xf] %v1213
    %1246 = vst [vmem:[#allocation2 + $0x178] sm:$0xf] %v1214
    %1247 = vst [vmem:[#allocation2 + $0x198] sm:$0xf] %v1215
    %1248 = vst [vmem:[#allocation2 + $0x1b8] sm:$0xf] %v1216
    %1249 = vst [vmem:[#allocation2 + $0x1d8] sm:$0xf] %v1217
    %1250 = vst [vmem:[#allocation2 + $0x1f8] sm:$0xf] %v1218
    %1251 = vset.pattern.permute.xlu0 7
    %1252 = vperm.xlu0 %1251, %v113
    %v1253 = vpop.permute.xlu0 %1252
    %1254 = vset.pattern.permute.xlu0 7
    %1255 = vperm.xlu0 %1254, %v114
    %v1256 = vpop.permute.xlu0 %1255
    %1257 = vset.pattern.permute.xlu0 7
    %1258 = vperm.xlu0 %1257, %v115
    %v1259 = vpop.permute.xlu0 %1258
    %1260 = vset.pattern.permute.xlu0 7
    %1261 = vperm.xlu0 %1260, %v116
    %v1262 = vpop.permute.xlu0 %1261
    %1263 = vset.pattern.permute.xlu0 7
    %1264 = vperm.xlu0 %1263, %v117
    %v1265 = vpop.permute.xlu0 %1264
    %1266 = vset.pattern.permute.xlu0 7
    %1267 = vperm.xlu0 %1266, %v118
    %v1268 = vpop.permute.xlu0 %1267
    %1269 = vset.pattern.permute.xlu0 7
    %1270 = vperm.xlu0 %1269, %v119
    %v1271 = vpop.permute.xlu0 %1270
    %1272 = vset.pattern.permute.xlu0 7
    %1273 = vperm.xlu0 %1272, %v120
    %v1274 = vpop.permute.xlu0 %1273
    %1275 = vset.pattern.permute.xlu0 7
    %1276 = vperm.xlu0 %1275, %v121
    %v1277 = vpop.permute.xlu0 %1276
    %1278 = vset.pattern.permute.xlu0 7
    %1279 = vperm.xlu0 %1278, %v122
    %v1280 = vpop.permute.xlu0 %1279
    %1281 = vset.pattern.permute.xlu0 7
    %1282 = vperm.xlu0 %1281, %v123
    %v1283 = vpop.permute.xlu0 %1282
    %1284 = vset.pattern.permute.xlu0 7
    %1285 = vperm.xlu0 %1284, %v124
    %v1286 = vpop.permute.xlu0 %1285
    %1287 = vset.pattern.permute.xlu0 7
    %1288 = vperm.xlu0 %1287, %v125
    %v1289 = vpop.permute.xlu0 %1288
    %1290 = vset.pattern.permute.xlu0 7
    %1291 = vperm.xlu0 %1290, %v126
    %v1292 = vpop.permute.xlu0 %1291
    %1293 = vset.pattern.permute.xlu0 7
    %1294 = vperm.xlu0 %1293, %v127
    %v1295 = vpop.permute.xlu0 %1294
    %1296 = vset.pattern.permute.xlu0 7
    %1297 = vperm.xlu0 %1296, %v128
    %v1298 = vpop.permute.xlu0 %1297
    %vm1299 = vcmp.eq.s32.totalorder %v130, %v1253
    %vm1300 = vcmp.eq.s32.totalorder %v130, %v1256
    %vm1301 = vcmp.eq.s32.totalorder %v130, %v1259
    %vm1302 = vcmp.eq.s32.totalorder %v130, %v1262
    %vm1303 = vcmp.eq.s32.totalorder %v130, %v1265
    %vm1304 = vcmp.eq.s32.totalorder %v130, %v1268
    %vm1305 = vcmp.eq.s32.totalorder %v130, %v1271
    %vm1306 = vcmp.eq.s32.totalorder %v130, %v1274
    %vm1307 = vcmp.eq.s32.totalorder %v130, %v1277
    %vm1308 = vcmp.eq.s32.totalorder %v130, %v1280
    %vm1309 = vcmp.eq.s32.totalorder %v130, %v1283
    %vm1310 = vcmp.eq.s32.totalorder %v130, %v1286
    %vm1311 = vcmp.eq.s32.totalorder %v130, %v1289
    %vm1312 = vcmp.eq.s32.totalorder %v130, %v1292
    %vm1313 = vcmp.eq.s32.totalorder %v130, %v1295
    %vm1314 = vcmp.eq.s32.totalorder %v130, %v1298
    %v1315 = vsel %vm1299, 1.0, 0.0
    %v1316 = vsel %vm1300, 1.0, 0.0
    %v1317 = vsel %vm1301, 1.0, 0.0
    %v1318 = vsel %vm1302, 1.0, 0.0
    %v1319 = vsel %vm1303, 1.0, 0.0
    %v1320 = vsel %vm1304, 1.0, 0.0
    %v1321 = vsel %vm1305, 1.0, 0.0
    %v1322 = vsel %vm1306, 1.0, 0.0
    %v1323 = vsel %vm1307, 1.0, 0.0
    %v1324 = vsel %vm1308, 1.0, 0.0
    %v1325 = vsel %vm1309, 1.0, 0.0
    %v1326 = vsel %vm1310, 1.0, 0.0
    %v1327 = vsel %vm1311, 1.0, 0.0
    %v1328 = vsel %vm1312, 1.0, 0.0
    %v1329 = vsel %vm1313, 1.0, 0.0
    %v1330 = vsel %vm1314, 1.0, 0.0
    %v1331 = vpack.c.bf16 %v1316, %v1315
    %v1332 = vpack.c.bf16 %v1318, %v1317
    %v1333 = vpack.c.bf16 %v1320, %v1319
    %v1334 = vpack.c.bf16 %v1322, %v1321
    %v1335 = vpack.c.bf16 %v1324, %v1323
    %v1336 = vpack.c.bf16 %v1326, %v1325
    %v1337 = vpack.c.bf16 %v1328, %v1327
    %v1338 = vpack.c.bf16 %v1330, %v1329
    %v1347 = vunpack.c.l.b16 %v1331
    %v1348 = vunpack.c.h.b16 %v1331
    %v1349 = vunpack.c.l.b16 %v1332
    %v1350 = vunpack.c.h.b16 %v1332
    %v1351 = vunpack.c.l.b16 %v1333
    %v1352 = vunpack.c.h.b16 %v1333
    %v1353 = vunpack.c.l.b16 %v1334
    %v1354 = vunpack.c.h.b16 %v1334
    %v1355 = vunpack.c.l.b16 %v1335
    %v1356 = vunpack.c.h.b16 %v1335
    %v1357 = vunpack.c.l.b16 %v1336
    %v1358 = vunpack.c.h.b16 %v1336
    %v1359 = vunpack.c.l.b16 %v1337
    %v1360 = vunpack.c.h.b16 %v1337
    %v1361 = vunpack.c.l.b16 %v1338
    %v1362 = vunpack.c.h.b16 %v1338
    %v1363 = vpack.c.b16 %v1347, %v1347
    %v1364 = vpack.c.b16 %v1348, %v1348
    %v1365 = vpack.c.b16 %v1349, %v1349
    %v1366 = vpack.c.b16 %v1350, %v1350
    %v1367 = vpack.c.b16 %v1351, %v1351
    %v1368 = vpack.c.b16 %v1352, %v1352
    %v1369 = vpack.c.b16 %v1353, %v1353
    %v1370 = vpack.c.b16 %v1354, %v1354
    %v1371 = vpack.c.b16 %v1355, %v1355
    %v1372 = vpack.c.b16 %v1356, %v1356
    %v1373 = vpack.c.b16 %v1357, %v1357
    %v1374 = vpack.c.b16 %v1358, %v1358
    %v1375 = vpack.c.b16 %v1359, %v1359
    %v1376 = vpack.c.b16 %v1360, %v1360
    %v1377 = vpack.c.b16 %v1361, %v1361
    %v1378 = vpack.c.b16 %v1362, %v1362
    %1395 = vst [vmem:[#allocation2 + $0x1c] sm:$0xf] %v1363
    %1396 = vst [vmem:[#allocation2 + $0x3c] sm:$0xf] %v1364
    %1397 = vst [vmem:[#allocation2 + $0x5c] sm:$0xf] %v1365
    %1398 = vst [vmem:[#allocation2 + $0x7c] sm:$0xf] %v1366
    %1399 = vst [vmem:[#allocation2 + $0x9c] sm:$0xf] %v1367
    %1400 = vst [vmem:[#allocation2 + $0xbc] sm:$0xf] %v1368
    %1401 = vst [vmem:[#allocation2 + $0xdc] sm:$0xf] %v1369
    %1402 = vst [vmem:[#allocation2 + $0xfc] sm:$0xf] %v1370
    %1403 = vst [vmem:[#allocation2 + $0x11c] sm:$0xf] %v1371
    %1404 = vst [vmem:[#allocation2 + $0x13c] sm:$0xf] %v1372
    %1405 = vst [vmem:[#allocation2 + $0x15c] sm:$0xf] %v1373
    %1406 = vst [vmem:[#allocation2 + $0x17c] sm:$0xf] %v1374
    %1407 = vst [vmem:[#allocation2 + $0x19c] sm:$0xf] %v1375
    %1408 = vst [vmem:[#allocation2 + $0x1bc] sm:$0xf] %v1376
    %1409 = vst [vmem:[#allocation2 + $0x1dc] sm:$0xf] %v1377
    %1410 = vst [vmem:[#allocation2 + $0x1fc] sm:$0xf] %v1378
    %v1411 = vld [vmem:[#allocation2] sm:$0xff]
    %v1412 = vld [vmem:[#allocation2 + $0x8] sm:$0xff]
    %v1413 = vld [vmem:[#allocation2 + $0x10] sm:$0xff]
    %v1414 = vld [vmem:[#allocation2 + $0x18] sm:$0xff]
    %v1415 = vld [vmem:[#allocation2 + $0x20] sm:$0xff]
    %v1416 = vld [vmem:[#allocation2 + $0x28] sm:$0xff]
    %v1417 = vld [vmem:[#allocation2 + $0x30] sm:$0xff]
    %v1418 = vld [vmem:[#allocation2 + $0x38] sm:$0xff]
    %v1419 = vld [vmem:[#allocation2 + $0x40] sm:$0xff]
    %v1420 = vld [vmem:[#allocation2 + $0x48] sm:$0xff]
    %v1421 = vld [vmem:[#allocation2 + $0x50] sm:$0xff]
    %v1422 = vld [vmem:[#allocation2 + $0x58] sm:$0xff]
    %v1423 = vld [vmem:[#allocation2 + $0x60] sm:$0xff]
    %v1424 = vld [vmem:[#allocation2 + $0x68] sm:$0xff]
    %v1425 = vld [vmem:[#allocation2 + $0x70] sm:$0xff]
    %v1426 = vld [vmem:[#allocation2 + $0x78] sm:$0xff]
    %v1427 = vld [vmem:[#allocation2 + $0x80] sm:$0xff]
    %v1428 = vld [vmem:[#allocation2 + $0x88] sm:$0xff]
    %v1429 = vld [vmem:[#allocation2 + $0x90] sm:$0xff]
    %v1430 = vld [vmem:[#allocation2 + $0x98] sm:$0xff]
    %v1431 = vld [vmem:[#allocation2 + $0xa0] sm:$0xff]
    %v1432 = vld [vmem:[#allocation2 + $0xa8] sm:$0xff]
    %v1433 = vld [vmem:[#allocation2 + $0xb0] sm:$0xff]
    %v1434 = vld [vmem:[#allocation2 + $0xb8] sm:$0xff]
    %v1435 = vld [vmem:[#allocation2 + $0xc0] sm:$0xff]
    %v1436 = vld [vmem:[#allocation2 + $0xc8] sm:$0xff]
    %v1437 = vld [vmem:[#allocation2 + $0xd0] sm:$0xff]
    %v1438 = vld [vmem:[#allocation2 + $0xd8] sm:$0xff]
    %v1439 = vld [vmem:[#allocation2 + $0xe0] sm:$0xff]
    %v1440 = vld [vmem:[#allocation2 + $0xe8] sm:$0xff]
    %v1441 = vld [vmem:[#allocation2 + $0xf0] sm:$0xff]
    %v1442 = vld [vmem:[#allocation2 + $0xf8] sm:$0xff]
    %v1443 = vld [vmem:[#allocation2 + $0x100] sm:$0xff]
    %v1444 = vld [vmem:[#allocation2 + $0x108] sm:$0xff]
    %v1445 = vld [vmem:[#allocation2 + $0x110] sm:$0xff]
    %v1446 = vld [vmem:[#allocation2 + $0x118] sm:$0xff]
    %v1447 = vld [vmem:[#allocation2 + $0x120] sm:$0xff]
    %v1448 = vld [vmem:[#allocation2 + $0x128] sm:$0xff]
    %v1449 = vld [vmem:[#allocation2 + $0x130] sm:$0xff]
    %v1450 = vld [vmem:[#allocation2 + $0x138] sm:$0xff]
    %v1451 = vld [vmem:[#allocation2 + $0x140] sm:$0xff]
    %v1452 = vld [vmem:[#allocation2 + $0x148] sm:$0xff]
    %v1453 = vld [vmem:[#allocation2 + $0x150] sm:$0xff]
    %v1454 = vld [vmem:[#allocation2 + $0x158] sm:$0xff]
    %v1455 = vld [vmem:[#allocation2 + $0x160] sm:$0xff]
    %v1456 = vld [vmem:[#allocation2 + $0x168] sm:$0xff]
    %v1457 = vld [vmem:[#allocation2 + $0x170] sm:$0xff]
    %v1458 = vld [vmem:[#allocation2 + $0x178] sm:$0xff]
    %v1459 = vld [vmem:[#allocation2 + $0x180] sm:$0xff]
    %v1460 = vld [vmem:[#allocation2 + $0x188] sm:$0xff]
    %v1461 = vld [vmem:[#allocation2 + $0x190] sm:$0xff]
    %v1462 = vld [vmem:[#allocation2 + $0x198] sm:$0xff]
    %v1463 = vld [vmem:[#allocation2 + $0x1a0] sm:$0xff]
    %v1464 = vld [vmem:[#allocation2 + $0x1a8] sm:$0xff]
    %v1465 = vld [vmem:[#allocation2 + $0x1b0] sm:$0xff]
    %v1466 = vld [vmem:[#allocation2 + $0x1b8] sm:$0xff]
    %v1467 = vld [vmem:[#allocation2 + $0x1c0] sm:$0xff]
    %v1468 = vld [vmem:[#allocation2 + $0x1c8] sm:$0xff]
    %v1469 = vld [vmem:[#allocation2 + $0x1d0] sm:$0xff]
    %v1470 = vld [vmem:[#allocation2 + $0x1d8] sm:$0xff]
    %v1471 = vld [vmem:[#allocation2 + $0x1e0] sm:$0xff]
    %v1472 = vld [vmem:[#allocation2 + $0x1e8] sm:$0xff]
    %v1473 = vld [vmem:[#allocation2 + $0x1f0] sm:$0xff]
    %v1474 = vld [vmem:[#allocation2 + $0x1f8] sm:$0xff]
    %v1475 = vld [vmem:[#allocation3] sm:$0xff]
    %v1476 = vld [vmem:[#allocation3 + $0x8] sm:$0xff]
    %v1477 = vld [vmem:[#allocation3 + $0x10] sm:$0xff]
    %v1478 = vld [vmem:[#allocation3 + $0x18] sm:$0xff]
    %v1479 = vld [vmem:[#allocation3 + $0x20] sm:$0xff]
    %v1480 = vld [vmem:[#allocation3 + $0x28] sm:$0xff]
    %v1481 = vld [vmem:[#allocation3 + $0x30] sm:$0xff]
    %v1482 = vld [vmem:[#allocation3 + $0x38] sm:$0xff]
    %v1483 = vld [vmem:[#allocation3 + $0x40] sm:$0xff]
    %v1484 = vld [vmem:[#allocation3 + $0x48] sm:$0xff]
    %v1485 = vld [vmem:[#allocation3 + $0x50] sm:$0xff]
    %v1486 = vld [vmem:[#allocation3 + $0x58] sm:$0xff]
    %v1487 = vld [vmem:[#allocation3 + $0x60] sm:$0xff]
    %v1488 = vld [vmem:[#allocation3 + $0x68] sm:$0xff]
    %v1489 = vld [vmem:[#allocation3 + $0x70] sm:$0xff]
    %v1490 = vld [vmem:[#allocation3 + $0x78] sm:$0xff]
    %v1491 = vld [vmem:[#allocation3 + $0x80] sm:$0xff]
    %v1492 = vld [vmem:[#allocation3 + $0x88] sm:$0xff]
    %v1493 = vld [vmem:[#allocation3 + $0x90] sm:$0xff]
    %v1494 = vld [vmem:[#allocation3 + $0x98] sm:$0xff]
    %v1495 = vld [vmem:[#allocation3 + $0xa0] sm:$0xff]
    %v1496 = vld [vmem:[#allocation3 + $0xa8] sm:$0xff]
    %v1497 = vld [vmem:[#allocation3 + $0xb0] sm:$0xff]
    %v1498 = vld [vmem:[#allocation3 + $0xb8] sm:$0xff]
    %v1499 = vld [vmem:[#allocation3 + $0xc0] sm:$0xff]
    %v1500 = vld [vmem:[#allocation3 + $0xc8] sm:$0xff]
    %v1501 = vld [vmem:[#allocation3 + $0xd0] sm:$0xff]
    %v1502 = vld [vmem:[#allocation3 + $0xd8] sm:$0xff]
    %v1503 = vld [vmem:[#allocation3 + $0xe0] sm:$0xff]
    %v1504 = vld [vmem:[#allocation3 + $0xe8] sm:$0xff]
    %v1505 = vld [vmem:[#allocation3 + $0xf0] sm:$0xff]
    %v1506 = vld [vmem:[#allocation3 + $0xf8] sm:$0xff]
    %v1507 = vld [vmem:[#allocation3 + $0x100] sm:$0xff]
    %v1508 = vld [vmem:[#allocation3 + $0x108] sm:$0xff]
    %v1509 = vld [vmem:[#allocation3 + $0x110] sm:$0xff]
    %v1510 = vld [vmem:[#allocation3 + $0x118] sm:$0xff]
    %v1511 = vld [vmem:[#allocation3 + $0x120] sm:$0xff]
    %v1512 = vld [vmem:[#allocation3 + $0x128] sm:$0xff]
    %v1513 = vld [vmem:[#allocation3 + $0x130] sm:$0xff]
    %v1514 = vld [vmem:[#allocation3 + $0x138] sm:$0xff]
    %v1515 = vld [vmem:[#allocation3 + $0x140] sm:$0xff]
    %v1516 = vld [vmem:[#allocation3 + $0x148] sm:$0xff]
    %v1517 = vld [vmem:[#allocation3 + $0x150] sm:$0xff]
    %v1518 = vld [vmem:[#allocation3 + $0x158] sm:$0xff]
    %v1519 = vld [vmem:[#allocation3 + $0x160] sm:$0xff]
    %v1520 = vld [vmem:[#allocation3 + $0x168] sm:$0xff]
    %v1521 = vld [vmem:[#allocation3 + $0x170] sm:$0xff]
    %v1522 = vld [vmem:[#allocation3 + $0x178] sm:$0xff]
    %v1523 = vld [vmem:[#allocation3 + $0x180] sm:$0xff]
    %v1524 = vld [vmem:[#allocation3 + $0x188] sm:$0xff]
    %v1525 = vld [vmem:[#allocation3 + $0x190] sm:$0xff]
    %v1526 = vld [vmem:[#allocation3 + $0x198] sm:$0xff]
    %v1527 = vld [vmem:[#allocation3 + $0x1a0] sm:$0xff]
    %v1528 = vld [vmem:[#allocation3 + $0x1a8] sm:$0xff]
    %v1529 = vld [vmem:[#allocation3 + $0x1b0] sm:$0xff]
    %v1530 = vld [vmem:[#allocation3 + $0x1b8] sm:$0xff]
    %v1531 = vld [vmem:[#allocation3 + $0x1c0] sm:$0xff]
    %v1532 = vld [vmem:[#allocation3 + $0x1c8] sm:$0xff]
    %v1533 = vld [vmem:[#allocation3 + $0x1d0] sm:$0xff]
    %v1534 = vld [vmem:[#allocation3 + $0x1d8] sm:$0xff]
    %v1535 = vld [vmem:[#allocation3 + $0x1e0] sm:$0xff]
    %v1536 = vld [vmem:[#allocation3 + $0x1e8] sm:$0xff]
    %v1537 = vld [vmem:[#allocation3 + $0x1f0] sm:$0xff]
    %v1538 = vld [vmem:[#allocation3 + $0x1f8] sm:$0xff]
    %v1539 = vld [vmem:[#allocation3 + $0x200] sm:$0xff]
    %v1540 = vld [vmem:[#allocation3 + $0x208] sm:$0xff]
    %v1541 = vld [vmem:[#allocation3 + $0x210] sm:$0xff]
    %v1542 = vld [vmem:[#allocation3 + $0x218] sm:$0xff]
    %v1543 = vld [vmem:[#allocation3 + $0x220] sm:$0xff]
    %v1544 = vld [vmem:[#allocation3 + $0x228] sm:$0xff]
    %v1545 = vld [vmem:[#allocation3 + $0x230] sm:$0xff]
    %v1546 = vld [vmem:[#allocation3 + $0x238] sm:$0xff]
    %v1547 = vld [vmem:[#allocation3 + $0x240] sm:$0xff]
    %v1548 = vld [vmem:[#allocation3 + $0x248] sm:$0xff]
    %v1549 = vld [vmem:[#allocation3 + $0x250] sm:$0xff]
    %v1550 = vld [vmem:[#allocation3 + $0x258] sm:$0xff]
    %v1551 = vld [vmem:[#allocation3 + $0x260] sm:$0xff]
    %v1552 = vld [vmem:[#allocation3 + $0x268] sm:$0xff]
    %v1553 = vld [vmem:[#allocation3 + $0x270] sm:$0xff]
    %v1554 = vld [vmem:[#allocation3 + $0x278] sm:$0xff]
    %v1555 = vld [vmem:[#allocation3 + $0x280] sm:$0xff]
    %v1556 = vld [vmem:[#allocation3 + $0x288] sm:$0xff]
    %v1557 = vld [vmem:[#allocation3 + $0x290] sm:$0xff]
    %v1558 = vld [vmem:[#allocation3 + $0x298] sm:$0xff]
    %v1559 = vld [vmem:[#allocation3 + $0x2a0] sm:$0xff]
    %v1560 = vld [vmem:[#allocation3 + $0x2a8] sm:$0xff]
    %v1561 = vld [vmem:[#allocation3 + $0x2b0] sm:$0xff]
    %v1562 = vld [vmem:[#allocation3 + $0x2b8] sm:$0xff]
    %v1563 = vld [vmem:[#allocation3 + $0x2c0] sm:$0xff]
    %v1564 = vld [vmem:[#allocation3 + $0x2c8] sm:$0xff]
    %v1565 = vld [vmem:[#allocation3 + $0x2d0] sm:$0xff]
    %v1566 = vld [vmem:[#allocation3 + $0x2d8] sm:$0xff]
    %v1567 = vld [vmem:[#allocation3 + $0x2e0] sm:$0xff]
    %v1568 = vld [vmem:[#allocation3 + $0x2e8] sm:$0xff]
    %v1569 = vld [vmem:[#allocation3 + $0x2f0] sm:$0xff]
    %v1570 = vld [vmem:[#allocation3 + $0x2f8] sm:$0xff]
    %v1571 = vld [vmem:[#allocation3 + $0x300] sm:$0xff]
    %v1572 = vld [vmem:[#allocation3 + $0x308] sm:$0xff]
    %v1573 = vld [vmem:[#allocation3 + $0x310] sm:$0xff]
    %v1574 = vld [vmem:[#allocation3 + $0x318] sm:$0xff]
    %v1575 = vld [vmem:[#allocation3 + $0x320] sm:$0xff]
    %v1576 = vld [vmem:[#allocation3 + $0x328] sm:$0xff]
    %v1577 = vld [vmem:[#allocation3 + $0x330] sm:$0xff]
    %v1578 = vld [vmem:[#allocation3 + $0x338] sm:$0xff]
    %v1579 = vld [vmem:[#allocation3 + $0x340] sm:$0xff]
    %v1580 = vld [vmem:[#allocation3 + $0x348] sm:$0xff]
    %v1581 = vld [vmem:[#allocation3 + $0x350] sm:$0xff]
    %v1582 = vld [vmem:[#allocation3 + $0x358] sm:$0xff]
    %v1583 = vld [vmem:[#allocation3 + $0x360] sm:$0xff]
    %v1584 = vld [vmem:[#allocation3 + $0x368] sm:$0xff]
    %v1585 = vld [vmem:[#allocation3 + $0x370] sm:$0xff]
    %v1586 = vld [vmem:[#allocation3 + $0x378] sm:$0xff]
    %v1587 = vld [vmem:[#allocation3 + $0x380] sm:$0xff]
    %v1588 = vld [vmem:[#allocation3 + $0x388] sm:$0xff]
    %v1589 = vld [vmem:[#allocation3 + $0x390] sm:$0xff]
    %v1590 = vld [vmem:[#allocation3 + $0x398] sm:$0xff]
    %v1591 = vld [vmem:[#allocation3 + $0x3a0] sm:$0xff]
    %v1592 = vld [vmem:[#allocation3 + $0x3a8] sm:$0xff]
    %v1593 = vld [vmem:[#allocation3 + $0x3b0] sm:$0xff]
    %v1594 = vld [vmem:[#allocation3 + $0x3b8] sm:$0xff]
    %v1595 = vld [vmem:[#allocation3 + $0x3c0] sm:$0xff]
    %v1596 = vld [vmem:[#allocation3 + $0x3c8] sm:$0xff]
    %v1597 = vld [vmem:[#allocation3 + $0x3d0] sm:$0xff]
    %v1598 = vld [vmem:[#allocation3 + $0x3d8] sm:$0xff]
    %v1599 = vld [vmem:[#allocation3 + $0x3e0] sm:$0xff]
    %v1600 = vld [vmem:[#allocation3 + $0x3e8] sm:$0xff]
    %v1601 = vld [vmem:[#allocation3 + $0x3f0] sm:$0xff]
    %v1602 = vld [vmem:[#allocation3 + $0x3f8] sm:$0xff]
    %v1603 = vld [vmem:[%s2] sm:$0x3]
    %v1605 = vlaneseq
    %v1606 = vshrl.u32 %v1605, 7
    %v1607 = vsub.s32 0, %v1606
    %v1608 = vrot.slane %v1603, %v1607
    %v1609 = vlaneseq
    %v1610 = vshrl.u32 %v1609, 7
    %v1611 = vsub.s32 1, %v1610
    %v1612 = vrot.slane %v1603, %v1611
    %v1679 = vunpack.c.l.b16 %v1411
    %v1680 = vunpack.c.h.b16 %v1411
    %v1681 = vunpack.c.l.b16 %v1412
    %v1682 = vunpack.c.h.b16 %v1412
    %v1683 = vunpack.c.l.b16 %v1413
    %v1684 = vunpack.c.h.b16 %v1413
    %v1685 = vunpack.c.l.b16 %v1414
    %v1686 = vunpack.c.h.b16 %v1414
    %v1687 = vunpack.c.l.b16 %v1415
    %v1688 = vunpack.c.h.b16 %v1415
    %v1689 = vunpack.c.l.b16 %v1416
    %v1690 = vunpack.c.h.b16 %v1416
    %v1691 = vunpack.c.l.b16 %v1417
    %v1692 = vunpack.c.h.b16 %v1417
    %v1693 = vunpack.c.l.b16 %v1418
    %v1694 = vunpack.c.h.b16 %v1418
    %v1695 = vunpack.c.l.b16 %v1419
    %v1696 = vunpack.c.h.b16 %v1419
    %v1697 = vunpack.c.l.b16 %v1420
    %v1698 = vunpack.c.h.b16 %v1420
    %v1699 = vunpack.c.l.b16 %v1421
    %v1700 = vunpack.c.h.b16 %v1421
    %v1701 = vunpack.c.l.b16 %v1422
    %v1702 = vunpack.c.h.b16 %v1422
    %v1703 = vunpack.c.l.b16 %v1423
    %v1704 = vunpack.c.h.b16 %v1423
    %v1705 = vunpack.c.l.b16 %v1424
    %v1706 = vunpack.c.h.b16 %v1424
    %v1707 = vunpack.c.l.b16 %v1425
    %v1708 = vunpack.c.h.b16 %v1425
    %v1709 = vunpack.c.l.b16 %v1426
    %v1710 = vunpack.c.h.b16 %v1426
    %v1711 = vunpack.c.l.b16 %v1427
    %v1712 = vunpack.c.h.b16 %v1427
    %v1713 = vunpack.c.l.b16 %v1428
    %v1714 = vunpack.c.h.b16 %v1428
    %v1715 = vunpack.c.l.b16 %v1429
    %v1716 = vunpack.c.h.b16 %v1429
    %v1717 = vunpack.c.l.b16 %v1430
    %v1718 = vunpack.c.h.b16 %v1430
    %v1719 = vunpack.c.l.b16 %v1431
    %v1720 = vunpack.c.h.b16 %v1431
    %v1721 = vunpack.c.l.b16 %v1432
    %v1722 = vunpack.c.h.b16 %v1432
    %v1723 = vunpack.c.l.b16 %v1433
    %v1724 = vunpack.c.h.b16 %v1433
    %v1725 = vunpack.c.l.b16 %v1434
    %v1726 = vunpack.c.h.b16 %v1434
    %v1727 = vunpack.c.l.b16 %v1435
    %v1728 = vunpack.c.h.b16 %v1435
    %v1729 = vunpack.c.l.b16 %v1436
    %v1730 = vunpack.c.h.b16 %v1436
    %v1731 = vunpack.c.l.b16 %v1437
    %v1732 = vunpack.c.h.b16 %v1437
    %v1733 = vunpack.c.l.b16 %v1438
    %v1734 = vunpack.c.h.b16 %v1438
    %v1735 = vunpack.c.l.b16 %v1439
    %v1736 = vunpack.c.h.b16 %v1439
    %v1737 = vunpack.c.l.b16 %v1440
    %v1738 = vunpack.c.h.b16 %v1440
    %v1739 = vunpack.c.l.b16 %v1441
    %v1740 = vunpack.c.h.b16 %v1441
    %v1741 = vunpack.c.l.b16 %v1442
    %v1742 = vunpack.c.h.b16 %v1442
    %v1743 = vunpack.c.l.b16 %v1443
    %v1744 = vunpack.c.h.b16 %v1443
    %v1745 = vunpack.c.l.b16 %v1444
    %v1746 = vunpack.c.h.b16 %v1444
    %v1747 = vunpack.c.l.b16 %v1445
    %v1748 = vunpack.c.h.b16 %v1445
    %v1749 = vunpack.c.l.b16 %v1446
    %v1750 = vunpack.c.h.b16 %v1446
    %v1751 = vunpack.c.l.b16 %v1447
    %v1752 = vunpack.c.h.b16 %v1447
    %v1753 = vunpack.c.l.b16 %v1448
    %v1754 = vunpack.c.h.b16 %v1448
    %v1755 = vunpack.c.l.b16 %v1449
    %v1756 = vunpack.c.h.b16 %v1449
    %v1757 = vunpack.c.l.b16 %v1450
    %v1758 = vunpack.c.h.b16 %v1450
    %v1759 = vunpack.c.l.b16 %v1451
    %v1760 = vunpack.c.h.b16 %v1451
    %v1761 = vunpack.c.l.b16 %v1452
    %v1762 = vunpack.c.h.b16 %v1452
    %v1763 = vunpack.c.l.b16 %v1453
    %v1764 = vunpack.c.h.b16 %v1453
    %v1765 = vunpack.c.l.b16 %v1454
    %v1766 = vunpack.c.h.b16 %v1454
    %v1767 = vunpack.c.l.b16 %v1455
    %v1768 = vunpack.c.h.b16 %v1455
    %v1769 = vunpack.c.l.b16 %v1456
    %v1770 = vunpack.c.h.b16 %v1456
    %v1771 = vunpack.c.l.b16 %v1457
    %v1772 = vunpack.c.h.b16 %v1457
    %v1773 = vunpack.c.l.b16 %v1458
    %v1774 = vunpack.c.h.b16 %v1458
    %v1775 = vunpack.c.l.b16 %v1459
    %v1776 = vunpack.c.h.b16 %v1459
    %v1777 = vunpack.c.l.b16 %v1460
    %v1778 = vunpack.c.h.b16 %v1460
    %v1779 = vunpack.c.l.b16 %v1461
    %v1780 = vunpack.c.h.b16 %v1461
    %v1781 = vunpack.c.l.b16 %v1462
    %v1782 = vunpack.c.h.b16 %v1462
    %v1783 = vunpack.c.l.b16 %v1463
    %v1784 = vunpack.c.h.b16 %v1463
    %v1785 = vunpack.c.l.b16 %v1464
    %v1786 = vunpack.c.h.b16 %v1464
    %v1787 = vunpack.c.l.b16 %v1465
    %v1788 = vunpack.c.h.b16 %v1465
    %v1789 = vunpack.c.l.b16 %v1466
    %v1790 = vunpack.c.h.b16 %v1466
    %v1791 = vunpack.c.l.b16 %v1467
    %v1792 = vunpack.c.h.b16 %v1467
    %v1793 = vunpack.c.l.b16 %v1468
    %v1794 = vunpack.c.h.b16 %v1468
    %v1795 = vunpack.c.l.b16 %v1469
    %v1796 = vunpack.c.h.b16 %v1469
    %v1797 = vunpack.c.l.b16 %v1470
    %v1798 = vunpack.c.h.b16 %v1470
    %v1799 = vunpack.c.l.b16 %v1471
    %v1800 = vunpack.c.h.b16 %v1471
    %v1801 = vunpack.c.l.b16 %v1472
    %v1802 = vunpack.c.h.b16 %v1472
    %v1803 = vunpack.c.l.b16 %v1473
    %v1804 = vunpack.c.h.b16 %v1473
    %v1805 = vunpack.c.l.b16 %v1474
    %v1806 = vunpack.c.h.b16 %v1474
    %v1807 = vpack.c.b16 %v1687, %v1679
    %v1808 = vpack.c.b16 %v1688, %v1680
    %v1809 = vpack.c.b16 %v1689, %v1681
    %v1810 = vpack.c.b16 %v1690, %v1682
    %v1811 = vpack.c.b16 %v1691, %v1683
    %v1812 = vpack.c.b16 %v1692, %v1684
    %v1813 = vpack.c.b16 %v1693, %v1685
    %v1814 = vpack.c.b16 %v1694, %v1686
    %v1815 = vpack.c.b16 %v1703, %v1695
    %v1816 = vpack.c.b16 %v1704, %v1696
    %v1817 = vpack.c.b16 %v1705, %v1697
    %v1818 = vpack.c.b16 %v1706, %v1698
    %v1819 = vpack.c.b16 %v1707, %v1699
    %v1820 = vpack.c.b16 %v1708, %v1700
    %v1821 = vpack.c.b16 %v1709, %v1701
    %v1822 = vpack.c.b16 %v1710, %v1702
    %v1823 = vpack.c.b16 %v1719, %v1711
    %v1824 = vpack.c.b16 %v1720, %v1712
    %v1825 = vpack.c.b16 %v1721, %v1713
    %v1826 = vpack.c.b16 %v1722, %v1714
    %v1827 = vpack.c.b16 %v1723, %v1715
    %v1828 = vpack.c.b16 %v1724, %v1716
    %v1829 = vpack.c.b16 %v1725, %v1717
    %v1830 = vpack.c.b16 %v1726, %v1718
    %v1831 = vpack.c.b16 %v1735, %v1727
    %v1832 = vpack.c.b16 %v1736, %v1728
    %v1833 = vpack.c.b16 %v1737, %v1729
    %v1834 = vpack.c.b16 %v1738, %v1730
    %v1835 = vpack.c.b16 %v1739, %v1731
    %v1836 = vpack.c.b16 %v1740, %v1732
    %v1837 = vpack.c.b16 %v1741, %v1733
    %v1838 = vpack.c.b16 %v1742, %v1734
    %v1839 = vpack.c.b16 %v1751, %v1743
    %v1840 = vpack.c.b16 %v1752, %v1744
    %v1841 = vpack.c.b16 %v1753, %v1745
    %v1842 = vpack.c.b16 %v1754, %v1746
    %v1843 = vpack.c.b16 %v1755, %v1747
    %v1844 = vpack.c.b16 %v1756, %v1748
    %v1845 = vpack.c.b16 %v1757, %v1749
    %v1846 = vpack.c.b16 %v1758, %v1750
    %v1847 = vpack.c.b16 %v1767, %v1759
    %v1848 = vpack.c.b16 %v1768, %v1760
    %v1849 = vpack.c.b16 %v1769, %v1761
    %v1850 = vpack.c.b16 %v1770, %v1762
    %v1851 = vpack.c.b16 %v1771, %v1763
    %v1852 = vpack.c.b16 %v1772, %v1764
    %v1853 = vpack.c.b16 %v1773, %v1765
    %v1854 = vpack.c.b16 %v1774, %v1766
    %v1855 = vpack.c.b16 %v1783, %v1775
    %v1856 = vpack.c.b16 %v1784, %v1776
    %v1857 = vpack.c.b16 %v1785, %v1777
    %v1858 = vpack.c.b16 %v1786, %v1778
    %v1859 = vpack.c.b16 %v1787, %v1779
    %v1860 = vpack.c.b16 %v1788, %v1780
    %v1861 = vpack.c.b16 %v1789, %v1781
    %v1862 = vpack.c.b16 %v1790, %v1782
    %v1863 = vpack.c.b16 %v1799, %v1791
    %v1864 = vpack.c.b16 %v1800, %v1792
    %v1865 = vpack.c.b16 %v1801, %v1793
    %v1866 = vpack.c.b16 %v1802, %v1794
    %v1867 = vpack.c.b16 %v1803, %v1795
    %v1868 = vpack.c.b16 %v1804, %v1796
    %v1869 = vpack.c.b16 %v1805, %v1797
    %v1870 = vpack.c.b16 %v1806, %v1798
    %v2063 = vunpack.c.l.b16 %v1475
    %v2064 = vunpack.c.h.b16 %v1475
    %v2065 = vunpack.c.l.b16 %v1476
    %v2066 = vunpack.c.h.b16 %v1476
    %v2067 = vunpack.c.l.b16 %v1477
    %v2068 = vunpack.c.h.b16 %v1477
    %v2069 = vunpack.c.l.b16 %v1478
    %v2070 = vunpack.c.h.b16 %v1478
    %v2071 = vunpack.c.l.b16 %v1479
    %v2072 = vunpack.c.h.b16 %v1479
    %v2073 = vunpack.c.l.b16 %v1480
    %v2074 = vunpack.c.h.b16 %v1480
    %v2075 = vunpack.c.l.b16 %v1481
    %v2076 = vunpack.c.h.b16 %v1481
    %v2077 = vunpack.c.l.b16 %v1482
    %v2078 = vunpack.c.h.b16 %v1482
    %v2079 = vunpack.c.l.b16 %v1483
    %v2080 = vunpack.c.h.b16 %v1483
    %v2081 = vunpack.c.l.b16 %v1484
    %v2082 = vunpack.c.h.b16 %v1484
    %v2083 = vunpack.c.l.b16 %v1485
    %v2084 = vunpack.c.h.b16 %v1485
    %v2085 = vunpack.c.l.b16 %v1486
    %v2086 = vunpack.c.h.b16 %v1486
    %v2087 = vunpack.c.l.b16 %v1487
    %v2088 = vunpack.c.h.b16 %v1487
    %v2089 = vunpack.c.l.b16 %v1488
    %v2090 = vunpack.c.h.b16 %v1488
    %v2091 = vunpack.c.l.b16 %v1489
    %v2092 = vunpack.c.h.b16 %v1489
    %v2093 = vunpack.c.l.b16 %v1490
    %v2094 = vunpack.c.h.b16 %v1490
    %v2095 = vunpack.c.l.b16 %v1491
    %v2096 = vunpack.c.h.b16 %v1491
    %v2097 = vunpack.c.l.b16 %v1492
    %v2098 = vunpack.c.h.b16 %v1492
    %v2099 = vunpack.c.l.b16 %v1493
    %v2100 = vunpack.c.h.b16 %v1493
    %v2101 = vunpack.c.l.b16 %v1494
    %v2102 = vunpack.c.h.b16 %v1494
    %v2103 = vunpack.c.l.b16 %v1495
    %v2104 = vunpack.c.h.b16 %v1495
    %v2105 = vunpack.c.l.b16 %v1496
    %v2106 = vunpack.c.h.b16 %v1496
    %v2107 = vunpack.c.l.b16 %v1497
    %v2108 = vunpack.c.h.b16 %v1497
    %v2109 = vunpack.c.l.b16 %v1498
    %v2110 = vunpack.c.h.b16 %v1498
    %v2111 = vunpack.c.l.b16 %v1499
    %v2112 = vunpack.c.h.b16 %v1499
    %v2113 = vunpack.c.l.b16 %v1500
    %v2114 = vunpack.c.h.b16 %v1500
    %v2115 = vunpack.c.l.b16 %v1501
    %v2116 = vunpack.c.h.b16 %v1501
    %v2117 = vunpack.c.l.b16 %v1502
    %v2118 = vunpack.c.h.b16 %v1502
    %v2119 = vunpack.c.l.b16 %v1503
    %v2120 = vunpack.c.h.b16 %v1503
    %v2121 = vunpack.c.l.b16 %v1504
    %v2122 = vunpack.c.h.b16 %v1504
    %v2123 = vunpack.c.l.b16 %v1505
    %v2124 = vunpack.c.h.b16 %v1505
    %v2125 = vunpack.c.l.b16 %v1506
    %v2126 = vunpack.c.h.b16 %v1506
    %v2127 = vunpack.c.l.b16 %v1507
    %v2128 = vunpack.c.h.b16 %v1507
    %v2129 = vunpack.c.l.b16 %v1508
    %v2130 = vunpack.c.h.b16 %v1508
    %v2131 = vunpack.c.l.b16 %v1509
    %v2132 = vunpack.c.h.b16 %v1509
    %v2133 = vunpack.c.l.b16 %v1510
    %v2134 = vunpack.c.h.b16 %v1510
    %v2135 = vunpack.c.l.b16 %v1511
    %v2136 = vunpack.c.h.b16 %v1511
    %v2137 = vunpack.c.l.b16 %v1512
    %v2138 = vunpack.c.h.b16 %v1512
    %v2139 = vunpack.c.l.b16 %v1513
    %v2140 = vunpack.c.h.b16 %v1513
    %v2141 = vunpack.c.l.b16 %v1514
    %v2142 = vunpack.c.h.b16 %v1514
    %v2143 = vunpack.c.l.b16 %v1515
    %v2144 = vunpack.c.h.b16 %v1515
    %v2145 = vunpack.c.l.b16 %v1516
    %v2146 = vunpack.c.h.b16 %v1516
    %v2147 = vunpack.c.l.b16 %v1517
    %v2148 = vunpack.c.h.b16 %v1517
    %v2149 = vunpack.c.l.b16 %v1518
    %v2150 = vunpack.c.h.b16 %v1518
    %v2151 = vunpack.c.l.b16 %v1519
    %v2152 = vunpack.c.h.b16 %v1519
    %v2153 = vunpack.c.l.b16 %v1520
    %v2154 = vunpack.c.h.b16 %v1520
    %v2155 = vunpack.c.l.b16 %v1521
    %v2156 = vunpack.c.h.b16 %v1521
    %v2157 = vunpack.c.l.b16 %v1522
    %v2158 = vunpack.c.h.b16 %v1522
    %v2159 = vunpack.c.l.b16 %v1523
    %v2160 = vunpack.c.h.b16 %v1523
    %v2161 = vunpack.c.l.b16 %v1524
    %v2162 = vunpack.c.h.b16 %v1524
    %v2163 = vunpack.c.l.b16 %v1525
    %v2164 = vunpack.c.h.b16 %v1525
    %v2165 = vunpack.c.l.b16 %v1526
    %v2166 = vunpack.c.h.b16 %v1526
    %v2167 = vunpack.c.l.b16 %v1527
    %v2168 = vunpack.c.h.b16 %v1527
    %v2169 = vunpack.c.l.b16 %v1528
    %v2170 = vunpack.c.h.b16 %v1528
    %v2171 = vunpack.c.l.b16 %v1529
    %v2172 = vunpack.c.h.b16 %v1529
    %v2173 = vunpack.c.l.b16 %v1530
    %v2174 = vunpack.c.h.b16 %v1530
    %v2175 = vunpack.c.l.b16 %v1531
    %v2176 = vunpack.c.h.b16 %v1531
    %v2177 = vunpack.c.l.b16 %v1532
    %v2178 = vunpack.c.h.b16 %v1532
    %v2179 = vunpack.c.l.b16 %v1533
    %v2180 = vunpack.c.h.b16 %v1533
    %v2181 = vunpack.c.l.b16 %v1534
    %v2182 = vunpack.c.h.b16 %v1534
    %v2183 = vunpack.c.l.b16 %v1535
    %v2184 = vunpack.c.h.b16 %v1535
    %v2185 = vunpack.c.l.b16 %v1536
    %v2186 = vunpack.c.h.b16 %v1536
    %v2187 = vunpack.c.l.b16 %v1537
    %v2188 = vunpack.c.h.b16 %v1537
    %v2189 = vunpack.c.l.b16 %v1538
    %v2190 = vunpack.c.h.b16 %v1538
    %v2191 = vunpack.c.l.b16 %v1539
    %v2192 = vunpack.c.h.b16 %v1539
    %v2193 = vunpack.c.l.b16 %v1540
    %v2194 = vunpack.c.h.b16 %v1540
    %v2195 = vunpack.c.l.b16 %v1541
    %v2196 = vunpack.c.h.b16 %v1541
    %v2197 = vunpack.c.l.b16 %v1542
    %v2198 = vunpack.c.h.b16 %v1542
    %v2199 = vunpack.c.l.b16 %v1543
    %v2200 = vunpack.c.h.b16 %v1543
    %v2201 = vunpack.c.l.b16 %v1544
    %v2202 = vunpack.c.h.b16 %v1544
    %v2203 = vunpack.c.l.b16 %v1545
    %v2204 = vunpack.c.h.b16 %v1545
    %v2205 = vunpack.c.l.b16 %v1546
    %v2206 = vunpack.c.h.b16 %v1546
    %v2207 = vunpack.c.l.b16 %v1547
    %v2208 = vunpack.c.h.b16 %v1547
    %v2209 = vunpack.c.l.b16 %v1548
    %v2210 = vunpack.c.h.b16 %v1548
    %v2211 = vunpack.c.l.b16 %v1549
    %v2212 = vunpack.c.h.b16 %v1549
    %v2213 = vunpack.c.l.b16 %v1550
    %v2214 = vunpack.c.h.b16 %v1550
    %v2215 = vunpack.c.l.b16 %v1551
    %v2216 = vunpack.c.h.b16 %v1551
    %v2217 = vunpack.c.l.b16 %v1552
    %v2218 = vunpack.c.h.b16 %v1552
    %v2219 = vunpack.c.l.b16 %v1553
    %v2220 = vunpack.c.h.b16 %v1553
    %v2221 = vunpack.c.l.b16 %v1554
    %v2222 = vunpack.c.h.b16 %v1554
    %v2223 = vunpack.c.l.b16 %v1555
    %v2224 = vunpack.c.h.b16 %v1555
    %v2225 = vunpack.c.l.b16 %v1556
    %v2226 = vunpack.c.h.b16 %v1556
    %v2227 = vunpack.c.l.b16 %v1557
    %v2228 = vunpack.c.h.b16 %v1557
    %v2229 = vunpack.c.l.b16 %v1558
    %v2230 = vunpack.c.h.b16 %v1558
    %v2231 = vunpack.c.l.b16 %v1559
    %v2232 = vunpack.c.h.b16 %v1559
    %v2233 = vunpack.c.l.b16 %v1560
    %v2234 = vunpack.c.h.b16 %v1560
    %v2235 = vunpack.c.l.b16 %v1561
    %v2236 = vunpack.c.h.b16 %v1561
    %v2237 = vunpack.c.l.b16 %v1562
    %v2238 = vunpack.c.h.b16 %v1562
    %v2239 = vunpack.c.l.b16 %v1563
    %v2240 = vunpack.c.h.b16 %v1563
    %v2241 = vunpack.c.l.b16 %v1564
    %v2242 = vunpack.c.h.b16 %v1564
    %v2243 = vunpack.c.l.b16 %v1565
    %v2244 = vunpack.c.h.b16 %v1565
    %v2245 = vunpack.c.l.b16 %v1566
    %v2246 = vunpack.c.h.b16 %v1566
    %v2247 = vunpack.c.l.b16 %v1567
    %v2248 = vunpack.c.h.b16 %v1567
    %v2249 = vunpack.c.l.b16 %v1568
    %v2250 = vunpack.c.h.b16 %v1568
    %v2251 = vunpack.c.l.b16 %v1569
    %v2252 = vunpack.c.h.b16 %v1569
    %v2253 = vunpack.c.l.b16 %v1570
    %v2254 = vunpack.c.h.b16 %v1570
    %v2255 = vunpack.c.l.b16 %v1571
    %v2256 = vunpack.c.h.b16 %v1571
    %v2257 = vunpack.c.l.b16 %v1572
    %v2258 = vunpack.c.h.b16 %v1572
    %v2259 = vunpack.c.l.b16 %v1573
    %v2260 = vunpack.c.h.b16 %v1573
    %v2261 = vunpack.c.l.b16 %v1574
    %v2262 = vunpack.c.h.b16 %v1574
    %v2263 = vunpack.c.l.b16 %v1575
    %v2264 = vunpack.c.h.b16 %v1575
    %v2265 = vunpack.c.l.b16 %v1576
    %v2266 = vunpack.c.h.b16 %v1576
    %v2267 = vunpack.c.l.b16 %v1577
    %v2268 = vunpack.c.h.b16 %v1577
    %v2269 = vunpack.c.l.b16 %v1578
    %v2270 = vunpack.c.h.b16 %v1578
    %v2271 = vunpack.c.l.b16 %v1579
    %v2272 = vunpack.c.h.b16 %v1579
    %v2273 = vunpack.c.l.b16 %v1580
    %v2274 = vunpack.c.h.b16 %v1580
    %v2275 = vunpack.c.l.b16 %v1581
    %v2276 = vunpack.c.h.b16 %v1581
    %v2277 = vunpack.c.l.b16 %v1582
    %v2278 = vunpack.c.h.b16 %v1582
    %v2279 = vunpack.c.l.b16 %v1583
    %v2280 = vunpack.c.h.b16 %v1583
    %v2281 = vunpack.c.l.b16 %v1584
    %v2282 = vunpack.c.h.b16 %v1584
    %v2283 = vunpack.c.l.b16 %v1585
    %v2284 = vunpack.c.h.b16 %v1585
    %v2285 = vunpack.c.l.b16 %v1586
    %v2286 = vunpack.c.h.b16 %v1586
    %v2287 = vunpack.c.l.b16 %v1587
    %v2288 = vunpack.c.h.b16 %v1587
    %v2289 = vunpack.c.l.b16 %v1588
    %v2290 = vunpack.c.h.b16 %v1588
    %v2291 = vunpack.c.l.b16 %v1589
    %v2292 = vunpack.c.h.b16 %v1589
    %v2293 = vunpack.c.l.b16 %v1590
    %v2294 = vunpack.c.h.b16 %v1590
    %v2295 = vunpack.c.l.b16 %v1591
    %v2296 = vunpack.c.h.b16 %v1591
    %v2297 = vunpack.c.l.b16 %v1592
    %v2298 = vunpack.c.h.b16 %v1592
    %v2299 = vunpack.c.l.b16 %v1593
    %v2300 = vunpack.c.h.b16 %v1593
    %v2301 = vunpack.c.l.b16 %v1594
    %v2302 = vunpack.c.h.b16 %v1594
    %v2303 = vunpack.c.l.b16 %v1595
    %v2304 = vunpack.c.h.b16 %v1595
    %v2305 = vunpack.c.l.b16 %v1596
    %v2306 = vunpack.c.h.b16 %v1596
    %v2307 = vunpack.c.l.b16 %v1597
    %v2308 = vunpack.c.h.b16 %v1597
    %v2309 = vunpack.c.l.b16 %v1598
    %v2310 = vunpack.c.h.b16 %v1598
    %v2311 = vunpack.c.l.b16 %v1599
    %v2312 = vunpack.c.h.b16 %v1599
    %v2313 = vunpack.c.l.b16 %v1600
    %v2314 = vunpack.c.h.b16 %v1600
    %v2315 = vunpack.c.l.b16 %v1601
    %v2316 = vunpack.c.h.b16 %v1601
    %v2317 = vunpack.c.l.b16 %v1602
    %v2318 = vunpack.c.h.b16 %v1602
    %v2319 = vpack.c.b16 %v2065, %v2063
    %v2320 = vpack.c.b16 %v2066, %v2064
    %v2321 = vpack.c.b16 %v2069, %v2067
    %v2322 = vpack.c.b16 %v2070, %v2068
    %v2323 = vpack.c.b16 %v2073, %v2071
    %v2324 = vpack.c.b16 %v2074, %v2072
    %v2325 = vpack.c.b16 %v2077, %v2075
    %v2326 = vpack.c.b16 %v2078, %v2076
    %v2327 = vpack.c.b16 %v2081, %v2079
    %v2328 = vpack.c.b16 %v2082, %v2080
    %v2329 = vpack.c.b16 %v2085, %v2083
    %v2330 = vpack.c.b16 %v2086, %v2084
    %v2331 = vpack.c.b16 %v2089, %v2087
    %v2332 = vpack.c.b16 %v2090, %v2088
    %v2333 = vpack.c.b16 %v2093, %v2091
    %v2334 = vpack.c.b16 %v2094, %v2092
    %v2335 = vpack.c.b16 %v2097, %v2095
    %v2336 = vpack.c.b16 %v2098, %v2096
    %v2337 = vpack.c.b16 %v2101, %v2099
    %v2338 = vpack.c.b16 %v2102, %v2100
    %v2339 = vpack.c.b16 %v2105, %v2103
    %v2340 = vpack.c.b16 %v2106, %v2104
    %v2341 = vpack.c.b16 %v2109, %v2107
    %v2342 = vpack.c.b16 %v2110, %v2108
    %v2343 = vpack.c.b16 %v2113, %v2111
    %v2344 = vpack.c.b16 %v2114, %v2112
    %v2345 = vpack.c.b16 %v2117, %v2115
    %v2346 = vpack.c.b16 %v2118, %v2116
    %v2347 = vpack.c.b16 %v2121, %v2119
    %v2348 = vpack.c.b16 %v2122, %v2120
    %v2349 = vpack.c.b16 %v2125, %v2123
    %v2350 = vpack.c.b16 %v2126, %v2124
    %v2351 = vpack.c.b16 %v2129, %v2127
    %v2352 = vpack.c.b16 %v2130, %v2128
    %v2353 = vpack.c.b16 %v2133, %v2131
    %v2354 = vpack.c.b16 %v2134, %v2132
    %v2355 = vpack.c.b16 %v2137, %v2135
    %v2356 = vpack.c.b16 %v2138, %v2136
    %v2357 = vpack.c.b16 %v2141, %v2139
    %v2358 = vpack.c.b16 %v2142, %v2140
    %v2359 = vpack.c.b16 %v2145, %v2143
    %v2360 = vpack.c.b16 %v2146, %v2144
    %v2361 = vpack.c.b16 %v2149, %v2147
    %v2362 = vpack.c.b16 %v2150, %v2148
    %v2363 = vpack.c.b16 %v2153, %v2151
    %v2364 = vpack.c.b16 %v2154, %v2152
    %v2365 = vpack.c.b16 %v2157, %v2155
    %v2366 = vpack.c.b16 %v2158, %v2156
    %v2367 = vpack.c.b16 %v2161, %v2159
    %v2368 = vpack.c.b16 %v2162, %v2160
    %v2369 = vpack.c.b16 %v2165, %v2163
    %v2370 = vpack.c.b16 %v2166, %v2164
    %v2371 = vpack.c.b16 %v2169, %v2167
    %v2372 = vpack.c.b16 %v2170, %v2168
    %v2373 = vpack.c.b16 %v2173, %v2171
    %v2374 = vpack.c.b16 %v2174, %v2172
    %v2375 = vpack.c.b16 %v2177, %v2175
    %v2376 = vpack.c.b16 %v2178, %v2176
    %v2377 = vpack.c.b16 %v2181, %v2179
    %v2378 = vpack.c.b16 %v2182, %v2180
    %v2379 = vpack.c.b16 %v2185, %v2183
    %v2380 = vpack.c.b16 %v2186, %v2184
    %v2381 = vpack.c.b16 %v2189, %v2187
    %v2382 = vpack.c.b16 %v2190, %v2188
    %v2383 = vpack.c.b16 %v2193, %v2191
    %v2384 = vpack.c.b16 %v2194, %v2192
    %v2385 = vpack.c.b16 %v2197, %v2195
    %v2386 = vpack.c.b16 %v2198, %v2196
    %v2387 = vpack.c.b16 %v2201, %v2199
    %v2388 = vpack.c.b16 %v2202, %v2200
    %v2389 = vpack.c.b16 %v2205, %v2203
    %v2390 = vpack.c.b16 %v2206, %v2204
    %v2391 = vpack.c.b16 %v2209, %v2207
    %v2392 = vpack.c.b16 %v2210, %v2208
    %v2393 = vpack.c.b16 %v2213, %v2211
    %v2394 = vpack.c.b16 %v2214, %v2212
    %v2395 = vpack.c.b16 %v2217, %v2215
    %v2396 = vpack.c.b16 %v2218, %v2216
    %v2397 = vpack.c.b16 %v2221, %v2219
    %v2398 = vpack.c.b16 %v2222, %v2220
    %v2399 = vpack.c.b16 %v2225, %v2223
    %v2400 = vpack.c.b16 %v2226, %v2224
    %v2401 = vpack.c.b16 %v2229, %v2227
    %v2402 = vpack.c.b16 %v2230, %v2228
    %v2403 = vpack.c.b16 %v2233, %v2231
    %v2404 = vpack.c.b16 %v2234, %v2232
    %v2405 = vpack.c.b16 %v2237, %v2235
    %v2406 = vpack.c.b16 %v2238, %v2236
    %v2407 = vpack.c.b16 %v2241, %v2239
    %v2408 = vpack.c.b16 %v2242, %v2240
    %v2409 = vpack.c.b16 %v2245, %v2243
    %v2410 = vpack.c.b16 %v2246, %v2244
    %v2411 = vpack.c.b16 %v2249, %v2247
    %v2412 = vpack.c.b16 %v2250, %v2248
    %v2413 = vpack.c.b16 %v2253, %v2251
    %v2414 = vpack.c.b16 %v2254, %v2252
    %v2415 = vpack.c.b16 %v2257, %v2255
    %v2416 = vpack.c.b16 %v2258, %v2256
    %v2417 = vpack.c.b16 %v2261, %v2259
    %v2418 = vpack.c.b16 %v2262, %v2260
    %v2419 = vpack.c.b16 %v2265, %v2263
    %v2420 = vpack.c.b16 %v2266, %v2264
    %v2421 = vpack.c.b16 %v2269, %v2267
    %v2422 = vpack.c.b16 %v2270, %v2268
    %v2423 = vpack.c.b16 %v2273, %v2271
    %v2424 = vpack.c.b16 %v2274, %v2272
    %v2425 = vpack.c.b16 %v2277, %v2275
    %v2426 = vpack.c.b16 %v2278, %v2276
    %v2427 = vpack.c.b16 %v2281, %v2279
    %v2428 = vpack.c.b16 %v2282, %v2280
    %v2429 = vpack.c.b16 %v2285, %v2283
    %v2430 = vpack.c.b16 %v2286, %v2284
    %v2431 = vpack.c.b16 %v2289, %v2287
    %v2432 = vpack.c.b16 %v2290, %v2288
    %v2433 = vpack.c.b16 %v2293, %v2291
    %v2434 = vpack.c.b16 %v2294, %v2292
    %v2435 = vpack.c.b16 %v2297, %v2295
    %v2436 = vpack.c.b16 %v2298, %v2296
    %v2437 = vpack.c.b16 %v2301, %v2299
    %v2438 = vpack.c.b16 %v2302, %v2300
    %v2439 = vpack.c.b16 %v2305, %v2303
    %v2440 = vpack.c.b16 %v2306, %v2304
    %v2441 = vpack.c.b16 %v2309, %v2307
    %v2442 = vpack.c.b16 %v2310, %v2308
    %v2443 = vpack.c.b16 %v2313, %v2311
    %v2444 = vpack.c.b16 %v2314, %v2312
    %v2445 = vpack.c.b16 %v2317, %v2315
    %v2446 = vpack.c.b16 %v2318, %v2316
    %2575 = vmatprep.subr.bf16.mxu0 %v2334
    %2576 = vmatpush1.bf16.msra.mxu0 %v2333
    %2577 = vmatprep.subr.bf16.mxu0 %v2332
    %2578 = vmatpush1.bf16.msra.mxu0 %v2331
    %2579 = vmatprep.subr.bf16.mxu0 %v2330
    %2580 = vmatpush1.bf16.msra.mxu0 %v2329
    %2581 = vmatprep.subr.bf16.mxu0 %v2328
    %2582 = vmatpush1.bf16.msra.mxu0 %v2327
    %2583 = vmatprep.subr.bf16.mxu0 %v2326
    %2584 = vmatpush1.bf16.msra.mxu0 %v2325
    %2585 = vmatprep.subr.bf16.mxu0 %v2324
    %2586 = vmatpush1.bf16.msra.mxu0 %v2323
    %2587 = vmatprep.subr.bf16.mxu0 %v2322
    %2588 = vmatpush1.bf16.msra.mxu0 %v2321
    %2589 = vmatprep.subr.bf16.mxu0 %v2320
    %2590 = vmatpush1.bf16.msra.mxu0 %v2319
    %2591 = vmatprep.subr.bf16.mxu0 %v2350
    %2592 = vmatpush2.bf16.msra.mxu0 %v2349
    %2593 = vmatprep.subr.bf16.mxu0 %v2348
    %2594 = vmatpush2.bf16.msra.mxu0 %v2347
    %2595 = vmatprep.subr.bf16.mxu0 %v2346
    %2596 = vmatpush2.bf16.msra.mxu0 %v2345
    %2597 = vmatprep.subr.bf16.mxu0 %v2344
    %2598 = vmatpush2.bf16.msra.mxu0 %v2343
    %2599 = vmatprep.subr.bf16.mxu0 %v2342
    %2600 = vmatpush2.bf16.msra.mxu0 %v2341
    %2601 = vmatprep.subr.bf16.mxu0 %v2340
    %2602 = vmatpush2.bf16.msra.mxu0 %v2339
    %2603 = vmatprep.subr.bf16.mxu0 %v2338
    %2604 = vmatpush2.bf16.msra.mxu0 %v2337
    %2605 = vmatprep.subr.bf16.mxu0 %v2336
    %2606 = vmatpush2.bf16.msra.mxu0 %v2335
    %2607 = vmatprep.mubr.bf16.mxu0 %v1808
    %2608 = vmatmul.mubr.bf16.gmra.mxu0 %v1807
    %v2609 = vpop.f32.mrf.mxu0
    %v2610 = vadd.f32 %v1608, %v2609
    %v2611 = vpop.f32.mrf.mxu0
    %v2612 = vadd.f32 %v1612, %v2611
    %v2613 = vpop.f32.mrf.mxu0
    %v2614 = vadd.f32 %v1608, %v2613
    %v2615 = vpop.f32.mrf.mxu0
    %v2616 = vadd.f32 %v1612, %v2615
    %2617 = vmatprep.mubr.bf16.mxu0 %v1816
    %2618 = vmatmul.mubr.bf16.gmra.mxu0 %v1815
    %v2619 = vpop.f32.mrf.mxu0
    %v2620 = vadd.f32 %v1608, %v2619
    %v2621 = vpop.f32.mrf.mxu0
    %v2622 = vadd.f32 %v1612, %v2621
    %v2623 = vpop.f32.mrf.mxu0
    %v2624 = vadd.f32 %v1608, %v2623
    %v2625 = vpop.f32.mrf.mxu0
    %v2626 = vadd.f32 %v1612, %v2625
    %2627 = vmatprep.mubr.bf16.mxu0 %v1824
    %2628 = vmatmul.mubr.bf16.gmra.mxu0 %v1823
    %v2629 = vpop.f32.mrf.mxu0
    %v2630 = vadd.f32 %v1608, %v2629
    %v2631 = vpop.f32.mrf.mxu0
    %v2632 = vadd.f32 %v1612, %v2631
    %v2633 = vpop.f32.mrf.mxu0
    %v2634 = vadd.f32 %v1608, %v2633
    %v2635 = vpop.f32.mrf.mxu0
    %v2636 = vadd.f32 %v1612, %v2635
    %2637 = vmatprep.mubr.bf16.mxu0 %v1832
    %2638 = vmatmul.mubr.bf16.gmra.mxu0 %v1831
    %v2639 = vpop.f32.mrf.mxu0
    %v2640 = vadd.f32 %v1608, %v2639
    %v2641 = vpop.f32.mrf.mxu0
    %v2642 = vadd.f32 %v1612, %v2641
    %v2643 = vpop.f32.mrf.mxu0
    %v2644 = vadd.f32 %v1608, %v2643
    %v2645 = vpop.f32.mrf.mxu0
    %v2646 = vadd.f32 %v1612, %v2645
    %2647 = vmatprep.mubr.bf16.mxu0 %v1840
    %2648 = vmatmul.mubr.bf16.gmra.mxu0 %v1839
    %v2649 = vpop.f32.mrf.mxu0
    %v2650 = vadd.f32 %v1608, %v2649
    %v2651 = vpop.f32.mrf.mxu0
    %v2652 = vadd.f32 %v1612, %v2651
    %v2653 = vpop.f32.mrf.mxu0
    %v2654 = vadd.f32 %v1608, %v2653
    %v2655 = vpop.f32.mrf.mxu0
    %v2656 = vadd.f32 %v1612, %v2655
    %2657 = vmatprep.mubr.bf16.mxu0 %v1848
    %2658 = vmatmul.mubr.bf16.gmra.mxu0 %v1847
    %v2659 = vpop.f32.mrf.mxu0
    %v2660 = vadd.f32 %v1608, %v2659
    %v2661 = vpop.f32.mrf.mxu0
    %v2662 = vadd.f32 %v1612, %v2661
    %v2663 = vpop.f32.mrf.mxu0
    %v2664 = vadd.f32 %v1608, %v2663
    %v2665 = vpop.f32.mrf.mxu0
    %v2666 = vadd.f32 %v1612, %v2665
    %2667 = vmatprep.mubr.bf16.mxu0 %v1856
    %2668 = vmatmul.mubr.bf16.gmra.mxu0 %v1855
    %v2669 = vpop.f32.mrf.mxu0
    %v2670 = vadd.f32 %v1608, %v2669
    %v2671 = vpop.f32.mrf.mxu0
    %v2672 = vadd.f32 %v1612, %v2671
    %v2673 = vpop.f32.mrf.mxu0
    %v2674 = vadd.f32 %v1608, %v2673
    %v2675 = vpop.f32.mrf.mxu0
    %v2676 = vadd.f32 %v1612, %v2675
    %2677 = vmatprep.mubr.bf16.mxu0 %v1864
    %2678 = vmatmul.mubr.bf16.gmra.mxu0 %v1863
    %v2679 = vpop.f32.mrf.mxu0
    %v2680 = vadd.f32 %v1608, %v2679
    %v2681 = vpop.f32.mrf.mxu0
    %v2682 = vadd.f32 %v1612, %v2681
    %v2683 = vpop.f32.mrf.mxu0
    %v2684 = vadd.f32 %v1608, %v2683
    %v2685 = vpop.f32.mrf.mxu0
    %v2686 = vadd.f32 %v1612, %v2685
    %2687 = vdwg.mxu0
    %2688 = vmatprep.subr.bf16.mxu0 %v2366
    %2689 = vmatpush1.bf16.msra.mxu0 %v2365
    %2690 = vmatprep.subr.bf16.mxu0 %v2364
    %2691 = vmatpush1.bf16.msra.mxu0 %v2363
    %2692 = vmatprep.subr.bf16.mxu0 %v2362
    %2693 = vmatpush1.bf16.msra.mxu0 %v2361
    %2694 = vmatprep.subr.bf16.mxu0 %v2360
    %2695 = vmatpush1.bf16.msra.mxu0 %v2359
    %2696 = vmatprep.subr.bf16.mxu0 %v2358
    %2697 = vmatpush1.bf16.msra.mxu0 %v2357
    %2698 = vmatprep.subr.bf16.mxu0 %v2356
    %2699 = vmatpush1.bf16.msra.mxu0 %v2355
    %2700 = vmatprep.subr.bf16.mxu0 %v2354
    %2701 = vmatpush1.bf16.msra.mxu0 %v2353
    %2702 = vmatprep.subr.bf16.mxu0 %v2352
    %2703 = vmatpush1.bf16.msra.mxu0 %v2351
    %2704 = vmatprep.subr.bf16.mxu0 %v2382
    %2705 = vmatpush2.bf16.msra.mxu0 %v2381
    %2706 = vmatprep.subr.bf16.mxu0 %v2380
    %2707 = vmatpush2.bf16.msra.mxu0 %v2379
    %2708 = vmatprep.subr.bf16.mxu0 %v2378
    %2709 = vmatpush2.bf16.msra.mxu0 %v2377
    %2710 = vmatprep.subr.bf16.mxu0 %v2376
    %2711 = vmatpush2.bf16.msra.mxu0 %v2375
    %2712 = vmatprep.subr.bf16.mxu0 %v2374
    %2713 = vmatpush2.bf16.msra.mxu0 %v2373
    %2714 = vmatprep.subr.bf16.mxu0 %v2372
    %2715 = vmatpush2.bf16.msra.mxu0 %v2371
    %2716 = vmatprep.subr.bf16.mxu0 %v2370
    %2717 = vmatpush2.bf16.msra.mxu0 %v2369
    %2718 = vmatprep.subr.bf16.mxu0 %v2368
    %2719 = vmatpush2.bf16.msra.mxu0 %v2367
    %2720 = vmatprep.mubr.bf16.mxu0 %v1810
    %2721 = vmatmul.mubr.bf16.gmra.mxu0 %v1809
    %v2722 = vpop.f32.mrf.mxu0
    %v2723 = vadd.f32 %v2610, %v2722
    %v2724 = vpop.f32.mrf.mxu0
    %v2725 = vadd.f32 %v2612, %v2724
    %v2726 = vpop.f32.mrf.mxu0
    %v2727 = vadd.f32 %v2614, %v2726
    %v2728 = vpop.f32.mrf.mxu0
    %v2729 = vadd.f32 %v2616, %v2728
    %2730 = vmatprep.mubr.bf16.mxu0 %v1818
    %2731 = vmatmul.mubr.bf16.gmra.mxu0 %v1817
    %v2732 = vpop.f32.mrf.mxu0
    %v2733 = vadd.f32 %v2620, %v2732
    %v2734 = vpop.f32.mrf.mxu0
    %v2735 = vadd.f32 %v2622, %v2734
    %v2736 = vpop.f32.mrf.mxu0
    %v2737 = vadd.f32 %v2624, %v2736
    %v2738 = vpop.f32.mrf.mxu0
    %v2739 = vadd.f32 %v2626, %v2738
    %2740 = vmatprep.mubr.bf16.mxu0 %v1826
    %2741 = vmatmul.mubr.bf16.gmra.mxu0 %v1825
    %v2742 = vpop.f32.mrf.mxu0
    %v2743 = vadd.f32 %v2630, %v2742
    %v2744 = vpop.f32.mrf.mxu0
    %v2745 = vadd.f32 %v2632, %v2744
    %v2746 = vpop.f32.mrf.mxu0
    %v2747 = vadd.f32 %v2634, %v2746
    %v2748 = vpop.f32.mrf.mxu0
    %v2749 = vadd.f32 %v2636, %v2748
    %2750 = vmatprep.mubr.bf16.mxu0 %v1834
    %2751 = vmatmul.mubr.bf16.gmra.mxu0 %v1833
    %v2752 = vpop.f32.mrf.mxu0
    %v2753 = vadd.f32 %v2640, %v2752
    %v2754 = vpop.f32.mrf.mxu0
    %v2755 = vadd.f32 %v2642, %v2754
    %v2756 = vpop.f32.mrf.mxu0
    %v2757 = vadd.f32 %v2644, %v2756
    %v2758 = vpop.f32.mrf.mxu0
    %v2759 = vadd.f32 %v2646, %v2758
    %2760 = vmatprep.mubr.bf16.mxu0 %v1842
    %2761 = vmatmul.mubr.bf16.gmra.mxu0 %v1841
    %v2762 = vpop.f32.mrf.mxu0
    %v2763 = vadd.f32 %v2650, %v2762
    %v2764 = vpop.f32.mrf.mxu0
    %v2765 = vadd.f32 %v2652, %v2764
    %v2766 = vpop.f32.mrf.mxu0
    %v2767 = vadd.f32 %v2654, %v2766
    %v2768 = vpop.f32.mrf.mxu0
    %v2769 = vadd.f32 %v2656, %v2768
    %2770 = vmatprep.mubr.bf16.mxu0 %v1850
    %2771 = vmatmul.mubr.bf16.gmra.mxu0 %v1849
    %v2772 = vpop.f32.mrf.mxu0
    %v2773 = vadd.f32 %v2660, %v2772
    %v2774 = vpop.f32.mrf.mxu0
    %v2775 = vadd.f32 %v2662, %v2774
    %v2776 = vpop.f32.mrf.mxu0
    %v2777 = vadd.f32 %v2664, %v2776
    %v2778 = vpop.f32.mrf.mxu0
    %v2779 = vadd.f32 %v2666, %v2778
    %2780 = vmatprep.mubr.bf16.mxu0 %v1858
    %2781 = vmatmul.mubr.bf16.gmra.mxu0 %v1857
    %v2782 = vpop.f32.mrf.mxu0
    %v2783 = vadd.f32 %v2670, %v2782
    %v2784 = vpop.f32.mrf.mxu0
    %v2785 = vadd.f32 %v2672, %v2784
    %v2786 = vpop.f32.mrf.mxu0
    %v2787 = vadd.f32 %v2674, %v2786
    %v2788 = vpop.f32.mrf.mxu0
    %v2789 = vadd.f32 %v2676, %v2788
    %2790 = vmatprep.mubr.bf16.mxu0 %v1866
    %2791 = vmatmul.mubr.bf16.gmra.mxu0 %v1865
    %v2792 = vpop.f32.mrf.mxu0
    %v2793 = vadd.f32 %v2680, %v2792
    %v2794 = vpop.f32.mrf.mxu0
    %v2795 = vadd.f32 %v2682, %v2794
    %v2796 = vpop.f32.mrf.mxu0
    %v2797 = vadd.f32 %v2684, %v2796
    %v2798 = vpop.f32.mrf.mxu0
    %v2799 = vadd.f32 %v2686, %v2798
    %2800 = vdwg.mxu0
    %2801 = vmatprep.subr.bf16.mxu0 %v2398
    %2802 = vmatpush1.bf16.msra.mxu0 %v2397
    %2803 = vmatprep.subr.bf16.mxu0 %v2396
    %2804 = vmatpush1.bf16.msra.mxu0 %v2395
    %2805 = vmatprep.subr.bf16.mxu0 %v2394
    %2806 = vmatpush1.bf16.msra.mxu0 %v2393
    %2807 = vmatprep.subr.bf16.mxu0 %v2392
    %2808 = vmatpush1.bf16.msra.mxu0 %v2391
    %2809 = vmatprep.subr.bf16.mxu0 %v2390
    %2810 = vmatpush1.bf16.msra.mxu0 %v2389
    %2811 = vmatprep.subr.bf16.mxu0 %v2388
    %2812 = vmatpush1.bf16.msra.mxu0 %v2387
    %2813 = vmatprep.subr.bf16.mxu0 %v2386
    %2814 = vmatpush1.bf16.msra.mxu0 %v2385
    %2815 = vmatprep.subr.bf16.mxu0 %v2384
    %2816 = vmatpush1.bf16.msra.mxu0 %v2383
    %2817 = vmatprep.subr.bf16.mxu0 %v2414
    %2818 = vmatpush2.bf16.msra.mxu0 %v2413
    %2819 = vmatprep.subr.bf16.mxu0 %v2412
    %2820 = vmatpush2.bf16.msra.mxu0 %v2411
    %2821 = vmatprep.subr.bf16.mxu0 %v2410
    %2822 = vmatpush2.bf16.msra.mxu0 %v2409
    %2823 = vmatprep.subr.bf16.mxu0 %v2408
    %2824 = vmatpush2.bf16.msra.mxu0 %v2407
    %2825 = vmatprep.subr.bf16.mxu0 %v2406
    %2826 = vmatpush2.bf16.msra.mxu0 %v2405
    %2827 = vmatprep.subr.bf16.mxu0 %v2404
    %2828 = vmatpush2.bf16.msra.mxu0 %v2403
    %2829 = vmatprep.subr.bf16.mxu0 %v2402
    %2830 = vmatpush2.bf16.msra.mxu0 %v2401
    %2831 = vmatprep.subr.bf16.mxu0 %v2400
    %2832 = vmatpush2.bf16.msra.mxu0 %v2399
    %2833 = vmatprep.mubr.bf16.mxu0 %v1812
    %2834 = vmatmul.mubr.bf16.gmra.mxu0 %v1811
    %v2835 = vpop.f32.mrf.mxu0
    %v2836 = vadd.f32 %v2723, %v2835
    %v2837 = vpop.f32.mrf.mxu0
    %v2838 = vadd.f32 %v2725, %v2837
    %v2839 = vpop.f32.mrf.mxu0
    %v2840 = vadd.f32 %v2727, %v2839
    %v2841 = vpop.f32.mrf.mxu0
    %v2842 = vadd.f32 %v2729, %v2841
    %2843 = vmatprep.mubr.bf16.mxu0 %v1820
    %2844 = vmatmul.mubr.bf16.gmra.mxu0 %v1819
    %v2845 = vpop.f32.mrf.mxu0
    %v2846 = vadd.f32 %v2733, %v2845
    %v2847 = vpop.f32.mrf.mxu0
    %v2848 = vadd.f32 %v2735, %v2847
    %v2849 = vpop.f32.mrf.mxu0
    %v2850 = vadd.f32 %v2737, %v2849
    %v2851 = vpop.f32.mrf.mxu0
    %v2852 = vadd.f32 %v2739, %v2851
    %2853 = vmatprep.mubr.bf16.mxu0 %v1828
    %2854 = vmatmul.mubr.bf16.gmra.mxu0 %v1827
    %v2855 = vpop.f32.mrf.mxu0
    %v2856 = vadd.f32 %v2743, %v2855
    %v2857 = vpop.f32.mrf.mxu0
    %v2858 = vadd.f32 %v2745, %v2857
    %v2859 = vpop.f32.mrf.mxu0
    %v2860 = vadd.f32 %v2747, %v2859
    %v2861 = vpop.f32.mrf.mxu0
    %v2862 = vadd.f32 %v2749, %v2861
    %2863 = vmatprep.mubr.bf16.mxu0 %v1836
    %2864 = vmatmul.mubr.bf16.gmra.mxu0 %v1835
    %v2865 = vpop.f32.mrf.mxu0
    %v2866 = vadd.f32 %v2753, %v2865
    %v2867 = vpop.f32.mrf.mxu0
    %v2868 = vadd.f32 %v2755, %v2867
    %v2869 = vpop.f32.mrf.mxu0
    %v2870 = vadd.f32 %v2757, %v2869
    %v2871 = vpop.f32.mrf.mxu0
    %v2872 = vadd.f32 %v2759, %v2871
    %2873 = vmatprep.mubr.bf16.mxu0 %v1844
    %2874 = vmatmul.mubr.bf16.gmra.mxu0 %v1843
    %v2875 = vpop.f32.mrf.mxu0
    %v2876 = vadd.f32 %v2763, %v2875
    %v2877 = vpop.f32.mrf.mxu0
    %v2878 = vadd.f32 %v2765, %v2877
    %v2879 = vpop.f32.mrf.mxu0
    %v2880 = vadd.f32 %v2767, %v2879
    %v2881 = vpop.f32.mrf.mxu0
    %v2882 = vadd.f32 %v2769, %v2881
    %2883 = vmatprep.mubr.bf16.mxu0 %v1852
    %2884 = vmatmul.mubr.bf16.gmra.mxu0 %v1851
    %v2885 = vpop.f32.mrf.mxu0
    %v2886 = vadd.f32 %v2773, %v2885
    %v2887 = vpop.f32.mrf.mxu0
    %v2888 = vadd.f32 %v2775, %v2887
    %v2889 = vpop.f32.mrf.mxu0
    %v2890 = vadd.f32 %v2777, %v2889
    %v2891 = vpop.f32.mrf.mxu0
    %v2892 = vadd.f32 %v2779, %v2891
    %2893 = vmatprep.mubr.bf16.mxu0 %v1860
    %2894 = vmatmul.mubr.bf16.gmra.mxu0 %v1859
    %v2895 = vpop.f32.mrf.mxu0
    %v2896 = vadd.f32 %v2783, %v2895
    %v2897 = vpop.f32.mrf.mxu0
    %v2898 = vadd.f32 %v2785, %v2897
    %v2899 = vpop.f32.mrf.mxu0
    %v2900 = vadd.f32 %v2787, %v2899
    %v2901 = vpop.f32.mrf.mxu0
    %v2902 = vadd.f32 %v2789, %v2901
    %2903 = vmatprep.mubr.bf16.mxu0 %v1868
    %2904 = vmatmul.mubr.bf16.gmra.mxu0 %v1867
    %v2905 = vpop.f32.mrf.mxu0
    %v2906 = vadd.f32 %v2793, %v2905
    %v2907 = vpop.f32.mrf.mxu0
    %v2908 = vadd.f32 %v2795, %v2907
    %v2909 = vpop.f32.mrf.mxu0
    %v2910 = vadd.f32 %v2797, %v2909
    %v2911 = vpop.f32.mrf.mxu0
    %v2912 = vadd.f32 %v2799, %v2911
    %2913 = vdwg.mxu0
    %2914 = vmatprep.subr.bf16.mxu0 %v2430
    %2915 = vmatpush1.bf16.msra.mxu0 %v2429
    %2916 = vmatprep.subr.bf16.mxu0 %v2428
    %2917 = vmatpush1.bf16.msra.mxu0 %v2427
    %2918 = vmatprep.subr.bf16.mxu0 %v2426
    %2919 = vmatpush1.bf16.msra.mxu0 %v2425
    %2920 = vmatprep.subr.bf16.mxu0 %v2424
    %2921 = vmatpush1.bf16.msra.mxu0 %v2423
    %2922 = vmatprep.subr.bf16.mxu0 %v2422
    %2923 = vmatpush1.bf16.msra.mxu0 %v2421
    %2924 = vmatprep.subr.bf16.mxu0 %v2420
    %2925 = vmatpush1.bf16.msra.mxu0 %v2419
    %2926 = vmatprep.subr.bf16.mxu0 %v2418
    %2927 = vmatpush1.bf16.msra.mxu0 %v2417
    %2928 = vmatprep.subr.bf16.mxu0 %v2416
    %2929 = vmatpush1.bf16.msra.mxu0 %v2415
    %2930 = vmatprep.subr.bf16.mxu0 %v2446
    %2931 = vmatpush2.bf16.msra.mxu0 %v2445
    %2932 = vmatprep.subr.bf16.mxu0 %v2444
    %2933 = vmatpush2.bf16.msra.mxu0 %v2443
    %2934 = vmatprep.subr.bf16.mxu0 %v2442
    %2935 = vmatpush2.bf16.msra.mxu0 %v2441
    %2936 = vmatprep.subr.bf16.mxu0 %v2440
    %2937 = vmatpush2.bf16.msra.mxu0 %v2439
    %2938 = vmatprep.subr.bf16.mxu0 %v2438
    %2939 = vmatpush2.bf16.msra.mxu0 %v2437
    %2940 = vmatprep.subr.bf16.mxu0 %v2436
    %2941 = vmatpush2.bf16.msra.mxu0 %v2435
    %2942 = vmatprep.subr.bf16.mxu0 %v2434
    %2943 = vmatpush2.bf16.msra.mxu0 %v2433
    %2944 = vmatprep.subr.bf16.mxu0 %v2432
    %2945 = vmatpush2.bf16.msra.mxu0 %v2431
    %2946 = vmatprep.mubr.bf16.mxu0 %v1814
    %2947 = vmatmul.mubr.bf16.gmra.mxu0 %v1813
    %v2948 = vpop.f32.mrf.mxu0
    %v2949 = vadd.f32 %v2836, %v2948
    %v2950 = vpop.f32.mrf.mxu0
    %v2951 = vadd.f32 %v2838, %v2950
    %v2952 = vpop.f32.mrf.mxu0
    %v2953 = vadd.f32 %v2840, %v2952
    %v2954 = vpop.f32.mrf.mxu0
    %v2955 = vadd.f32 %v2842, %v2954
    %2956 = vmatprep.mubr.bf16.mxu0 %v1822
    %2957 = vmatmul.mubr.bf16.gmra.mxu0 %v1821
    %v2958 = vpop.f32.mrf.mxu0
    %v2959 = vadd.f32 %v2846, %v2958
    %v2960 = vpop.f32.mrf.mxu0
    %v2961 = vadd.f32 %v2848, %v2960
    %v2962 = vpop.f32.mrf.mxu0
    %v2963 = vadd.f32 %v2850, %v2962
    %v2964 = vpop.f32.mrf.mxu0
    %v2965 = vadd.f32 %v2852, %v2964
    %2966 = vmatprep.mubr.bf16.mxu0 %v1830
    %2967 = vmatmul.mubr.bf16.gmra.mxu0 %v1829
    %v2968 = vpop.f32.mrf.mxu0
    %v2969 = vadd.f32 %v2856, %v2968
    %v2970 = vpop.f32.mrf.mxu0
    %v2971 = vadd.f32 %v2858, %v2970
    %v2972 = vpop.f32.mrf.mxu0
    %v2973 = vadd.f32 %v2860, %v2972
    %v2974 = vpop.f32.mrf.mxu0
    %v2975 = vadd.f32 %v2862, %v2974
    %2976 = vmatprep.mubr.bf16.mxu0 %v1838
    %2977 = vmatmul.mubr.bf16.gmra.mxu0 %v1837
    %v2978 = vpop.f32.mrf.mxu0
    %v2979 = vadd.f32 %v2866, %v2978
    %v2980 = vpop.f32.mrf.mxu0
    %v2981 = vadd.f32 %v2868, %v2980
    %v2982 = vpop.f32.mrf.mxu0
    %v2983 = vadd.f32 %v2870, %v2982
    %v2984 = vpop.f32.mrf.mxu0
    %v2985 = vadd.f32 %v2872, %v2984
    %2986 = vmatprep.mubr.bf16.mxu0 %v1846
    %2987 = vmatmul.mubr.bf16.gmra.mxu0 %v1845
    %v2988 = vpop.f32.mrf.mxu0
    %v2989 = vadd.f32 %v2876, %v2988
    %v2990 = vpop.f32.mrf.mxu0
    %v2991 = vadd.f32 %v2878, %v2990
    %v2992 = vpop.f32.mrf.mxu0
    %v2993 = vadd.f32 %v2880, %v2992
    %v2994 = vpop.f32.mrf.mxu0
    %v2995 = vadd.f32 %v2882, %v2994
    %2996 = vmatprep.mubr.bf16.mxu0 %v1854
    %2997 = vmatmul.mubr.bf16.gmra.mxu0 %v1853
    %v2998 = vpop.f32.mrf.mxu0
    %v2999 = vadd.f32 %v2886, %v2998
    %v3000 = vpop.f32.mrf.mxu0
    %v3001 = vadd.f32 %v2888, %v3000
    %v3002 = vpop.f32.mrf.mxu0
    %v3003 = vadd.f32 %v2890, %v3002
    %v3004 = vpop.f32.mrf.mxu0
    %v3005 = vadd.f32 %v2892, %v3004
    %3006 = vmatprep.mubr.bf16.mxu0 %v1862
    %3007 = vmatmul.mubr.bf16.gmra.mxu0 %v1861
    %v3008 = vpop.f32.mrf.mxu0
    %v3009 = vadd.f32 %v2896, %v3008
    %v3010 = vpop.f32.mrf.mxu0
    %v3011 = vadd.f32 %v2898, %v3010
    %v3012 = vpop.f32.mrf.mxu0
    %v3013 = vadd.f32 %v2900, %v3012
    %v3014 = vpop.f32.mrf.mxu0
    %v3015 = vadd.f32 %v2902, %v3014
    %3016 = vmatprep.mubr.bf16.mxu0 %v1870
    %3017 = vmatmul.mubr.bf16.gmra.mxu0 %v1869
    %v3018 = vpop.f32.mrf.mxu0
    %v3019 = vadd.f32 %v2906, %v3018
    %v3020 = vpop.f32.mrf.mxu0
    %v3021 = vadd.f32 %v2908, %v3020
    %v3022 = vpop.f32.mrf.mxu0
    %v3023 = vadd.f32 %v2910, %v3022
    %v3024 = vpop.f32.mrf.mxu0
    %v3025 = vadd.f32 %v2912, %v3024
    %3026 = vdwg.mxu0
    %v3027 = vmax.f32 %v2949, 0.0
    %v3028 = vmax.f32 %v2951, 0.0
    %v3029 = vmax.f32 %v2953, 0.0
    %v3030 = vmax.f32 %v2955, 0.0
    %v3031 = vmax.f32 %v2959, 0.0
    %v3032 = vmax.f32 %v2961, 0.0
    %v3033 = vmax.f32 %v2963, 0.0
    %v3034 = vmax.f32 %v2965, 0.0
    %v3035 = vmax.f32 %v2969, 0.0
    %v3036 = vmax.f32 %v2971, 0.0
    %v3037 = vmax.f32 %v2973, 0.0
    %v3038 = vmax.f32 %v2975, 0.0
    %v3039 = vmax.f32 %v2979, 0.0
    %v3040 = vmax.f32 %v2981, 0.0
    %v3041 = vmax.f32 %v2983, 0.0
    %v3042 = vmax.f32 %v2985, 0.0
    %v3043 = vmax.f32 %v2989, 0.0
    %v3044 = vmax.f32 %v2991, 0.0
    %v3045 = vmax.f32 %v2993, 0.0
    %v3046 = vmax.f32 %v2995, 0.0
    %v3047 = vmax.f32 %v2999, 0.0
    %v3048 = vmax.f32 %v3001, 0.0
    %v3049 = vmax.f32 %v3003, 0.0
    %v3050 = vmax.f32 %v3005, 0.0
    %v3051 = vmax.f32 %v3009, 0.0
    %v3052 = vmax.f32 %v3011, 0.0
    %v3053 = vmax.f32 %v3013, 0.0
    %v3054 = vmax.f32 %v3015, 0.0
    %v3055 = vmax.f32 %v3019, 0.0
    %v3056 = vmax.f32 %v3021, 0.0
    %v3057 = vmax.f32 %v3023, 0.0
    %v3058 = vmax.f32 %v3025, 0.0
    %v3059 = vpack.c.bf16 %v3029, %v3027
    %v3060 = vpack.c.bf16 %v3030, %v3028
    %v3061 = vpack.c.bf16 %v3033, %v3031
    %v3062 = vpack.c.bf16 %v3034, %v3032
    %v3063 = vpack.c.bf16 %v3037, %v3035
    %v3064 = vpack.c.bf16 %v3038, %v3036
    %v3065 = vpack.c.bf16 %v3041, %v3039
    %v3066 = vpack.c.bf16 %v3042, %v3040
    %v3067 = vpack.c.bf16 %v3045, %v3043
    %v3068 = vpack.c.bf16 %v3046, %v3044
    %v3069 = vpack.c.bf16 %v3049, %v3047
    %v3070 = vpack.c.bf16 %v3050, %v3048
    %v3071 = vpack.c.bf16 %v3053, %v3051
    %v3072 = vpack.c.bf16 %v3054, %v3052
    %v3073 = vpack.c.bf16 %v3057, %v3055
    %v3074 = vpack.c.bf16 %v3058, %v3056
    %v3075 = vld [vmem:[%s3] sm:$0xf]
    %v3076 = vld [vmem:[%s3 + $0x4] sm:$0xf]
    %v3077 = vld [vmem:[%s3 + $0x8] sm:$0xf]
    %v3078 = vld [vmem:[%s3 + $0xc] sm:$0xf]
    %v3079 = vld [vmem:[%s3 + $0x10] sm:$0xf]
    %v3080 = vld [vmem:[%s3 + $0x14] sm:$0xf]
    %v3081 = vld [vmem:[%s3 + $0x18] sm:$0xf]
    %v3082 = vld [vmem:[%s3 + $0x1c] sm:$0xf]
    %v3083 = vld [vmem:[%s3 + $0x20] sm:$0xf]
    %v3084 = vld [vmem:[%s3 + $0x24] sm:$0xf]
    %v3085 = vld [vmem:[%s3 + $0x28] sm:$0xf]
    %v3086 = vld [vmem:[%s3 + $0x2c] sm:$0xf]
    %v3087 = vld [vmem:[%s3 + $0x30] sm:$0xf]
    %v3088 = vld [vmem:[%s3 + $0x34] sm:$0xf]
    %v3089 = vld [vmem:[%s3 + $0x38] sm:$0xf]
    %v3090 = vld [vmem:[%s3 + $0x3c] sm:$0xf]
    %v3091 = vld [vmem:[%s3 + $0x40] sm:$0xf]
    %v3092 = vld [vmem:[%s3 + $0x44] sm:$0xf]
    %v3093 = vld [vmem:[%s3 + $0x48] sm:$0xf]
    %v3094 = vld [vmem:[%s3 + $0x4c] sm:$0xf]
    %v3095 = vld [vmem:[%s3 + $0x50] sm:$0xf]
    %v3096 = vld [vmem:[%s3 + $0x54] sm:$0xf]
    %v3097 = vld [vmem:[%s3 + $0x58] sm:$0xf]
    %v3098 = vld [vmem:[%s3 + $0x5c] sm:$0xf]
    %v3099 = vld [vmem:[%s3 + $0x60] sm:$0xf]
    %v3100 = vld [vmem:[%s3 + $0x64] sm:$0xf]
    %v3101 = vld [vmem:[%s3 + $0x68] sm:$0xf]
    %v3102 = vld [vmem:[%s3 + $0x6c] sm:$0xf]
    %v3103 = vld [vmem:[%s3 + $0x70] sm:$0xf]
    %v3104 = vld [vmem:[%s3 + $0x74] sm:$0xf]
    %v3105 = vld [vmem:[%s3 + $0x78] sm:$0xf]
    %v3106 = vld [vmem:[%s3 + $0x7c] sm:$0xf]
    %v3107 = vld [vmem:[%s4] sm:$0x1]
    %v3109 = vlaneseq
    %v3110 = vshrl.u32 %v3109, 7
    %v3111 = vsub.s32 0, %v3110
    %v3112 = vrot.slane %v3107, %v3111
    %v3146 = vunpack.c.l.b16 %v3075
    %v3147 = vunpack.c.l.b16 %v3076
    %v3148 = vunpack.c.l.b16 %v3077
    %v3149 = vunpack.c.l.b16 %v3078
    %v3150 = vunpack.c.l.b16 %v3079
    %v3151 = vunpack.c.l.b16 %v3080
    %v3152 = vunpack.c.l.b16 %v3081
    %v3153 = vunpack.c.l.b16 %v3082
    %v3154 = vunpack.c.l.b16 %v3083
    %v3155 = vunpack.c.l.b16 %v3084
    %v3156 = vunpack.c.l.b16 %v3085
    %v3157 = vunpack.c.l.b16 %v3086
    %v3158 = vunpack.c.l.b16 %v3087
    %v3159 = vunpack.c.l.b16 %v3088
    %v3160 = vunpack.c.l.b16 %v3089
    %v3161 = vunpack.c.l.b16 %v3090
    %v3162 = vunpack.c.l.b16 %v3091
    %v3163 = vunpack.c.l.b16 %v3092
    %v3164 = vunpack.c.l.b16 %v3093
    %v3165 = vunpack.c.l.b16 %v3094
    %v3166 = vunpack.c.l.b16 %v3095
    %v3167 = vunpack.c.l.b16 %v3096
    %v3168 = vunpack.c.l.b16 %v3097
    %v3169 = vunpack.c.l.b16 %v3098
    %v3170 = vunpack.c.l.b16 %v3099
    %v3171 = vunpack.c.l.b16 %v3100
    %v3172 = vunpack.c.l.b16 %v3101
    %v3173 = vunpack.c.l.b16 %v3102
    %v3174 = vunpack.c.l.b16 %v3103
    %v3175 = vunpack.c.l.b16 %v3104
    %v3176 = vunpack.c.l.b16 %v3105
    %v3177 = vunpack.c.l.b16 %v3106
    %v3178 = vpack.c.b16 %v3147, %v3146
    %v3179 = vpack.c.b16 %v3149, %v3148
    %v3180 = vpack.c.b16 %v3151, %v3150
    %v3181 = vpack.c.b16 %v3153, %v3152
    %v3182 = vpack.c.b16 %v3155, %v3154
    %v3183 = vpack.c.b16 %v3157, %v3156
    %v3184 = vpack.c.b16 %v3159, %v3158
    %v3185 = vpack.c.b16 %v3161, %v3160
    %v3186 = vpack.c.b16 %v3163, %v3162
    %v3187 = vpack.c.b16 %v3165, %v3164
    %v3188 = vpack.c.b16 %v3167, %v3166
    %v3189 = vpack.c.b16 %v3169, %v3168
    %v3190 = vpack.c.b16 %v3171, %v3170
    %v3191 = vpack.c.b16 %v3173, %v3172
    %v3192 = vpack.c.b16 %v3175, %v3174
    %v3193 = vpack.c.b16 %v3177, %v3176
    %3210 = vmatprep.subr.bf16.mxu0 0
    %3211 = vmatpush1.bf16.msra.mxu0 %v3185
    %3212 = vmatprep.subr.bf16.mxu0 0
    %3213 = vmatpush1.bf16.msra.mxu0 %v3184
    %3214 = vmatprep.subr.bf16.mxu0 0
    %3215 = vmatpush1.bf16.msra.mxu0 %v3183
    %3216 = vmatprep.subr.bf16.mxu0 0
    %3217 = vmatpush1.bf16.msra.mxu0 %v3182
    %3218 = vmatprep.subr.bf16.mxu0 0
    %3219 = vmatpush1.bf16.msra.mxu0 %v3181
    %3220 = vmatprep.subr.bf16.mxu0 0
    %3221 = vmatpush1.bf16.msra.mxu0 %v3180
    %3222 = vmatprep.subr.bf16.mxu0 0
    %3223 = vmatpush1.bf16.msra.mxu0 %v3179
    %3224 = vmatprep.subr.bf16.mxu0 0
    %3225 = vmatpush1.bf16.msra.mxu0 %v3178
    %3226 = vmatprep.subr.bf16.mxu0 0
    %3227 = vmatpush2.bf16.msra.mxu0 %v3193
    %3228 = vmatprep.subr.bf16.mxu0 0
    %3229 = vmatpush2.bf16.msra.mxu0 %v3192
    %3230 = vmatprep.subr.bf16.mxu0 0
    %3231 = vmatpush2.bf16.msra.mxu0 %v3191
    %3232 = vmatprep.subr.bf16.mxu0 0
    %3233 = vmatpush2.bf16.msra.mxu0 %v3190
    %3234 = vmatprep.subr.bf16.mxu0 0
    %3235 = vmatpush2.bf16.msra.mxu0 %v3189
    %3236 = vmatprep.subr.bf16.mxu0 0
    %3237 = vmatpush2.bf16.msra.mxu0 %v3188
    %3238 = vmatprep.subr.bf16.mxu0 0
    %3239 = vmatpush2.bf16.msra.mxu0 %v3187
    %3240 = vmatprep.subr.bf16.mxu0 0
    %3241 = vmatpush2.bf16.msra.mxu0 %v3186
    %3242 = vmatprep.mubr.bf16.mxu0 %v3060
    %3243 = vmatmul.mubr.bf16.gmra.mxu0 %v3059
    %v3244 = vpop.f32.mrf.mxu0
    %v3245 = vadd.f32 %v3112, %v3244
    %v3246 = vpop.f32.mrf.mxu0
    %v3247 = vpop.f32.mrf.mxu0
    %v3248 = vadd.f32 %v3112, %v3247
    %v3249 = vpop.f32.mrf.mxu0
    %3250 = vmatprep.mubr.bf16.mxu0 %v3062
    %3251 = vmatmul.mubr.bf16.gmra.mxu0 %v3061
    %v3252 = vpop.f32.mrf.mxu0
    %v3253 = vadd.f32 %v3112, %v3252
    %v3254 = vpop.f32.mrf.mxu0
    %v3255 = vpop.f32.mrf.mxu0
    %v3256 = vadd.f32 %v3112, %v3255
    %v3257 = vpop.f32.mrf.mxu0
    %3258 = vmatprep.mubr.bf16.mxu0 %v3064
    %3259 = vmatmul.mubr.bf16.gmra.mxu0 %v3063
    %v3260 = vpop.f32.mrf.mxu0
    %v3261 = vadd.f32 %v3112, %v3260
    %v3262 = vpop.f32.mrf.mxu0
    %v3263 = vpop.f32.mrf.mxu0
    %v3264 = vadd.f32 %v3112, %v3263
    %v3265 = vpop.f32.mrf.mxu0
    %3266 = vmatprep.mubr.bf16.mxu0 %v3066
    %3267 = vmatmul.mubr.bf16.gmra.mxu0 %v3065
    %v3268 = vpop.f32.mrf.mxu0
    %v3269 = vadd.f32 %v3112, %v3268
    %v3270 = vpop.f32.mrf.mxu0
    %v3271 = vpop.f32.mrf.mxu0
    %v3272 = vadd.f32 %v3112, %v3271
    %v3273 = vpop.f32.mrf.mxu0
    %3274 = vmatprep.mubr.bf16.mxu0 %v3068
    %3275 = vmatmul.mubr.bf16.gmra.mxu0 %v3067
    %v3276 = vpop.f32.mrf.mxu0
    %v3277 = vadd.f32 %v3112, %v3276
    %v3278 = vpop.f32.mrf.mxu0
    %v3279 = vpop.f32.mrf.mxu0
    %v3280 = vadd.f32 %v3112, %v3279
    %v3281 = vpop.f32.mrf.mxu0
    %3282 = vmatprep.mubr.bf16.mxu0 %v3070
    %3283 = vmatmul.mubr.bf16.gmra.mxu0 %v3069
    %v3284 = vpop.f32.mrf.mxu0
    %v3285 = vadd.f32 %v3112, %v3284
    %v3286 = vpop.f32.mrf.mxu0
    %v3287 = vpop.f32.mrf.mxu0
    %v3288 = vadd.f32 %v3112, %v3287
    %v3289 = vpop.f32.mrf.mxu0
    %3290 = vmatprep.mubr.bf16.mxu0 %v3072
    %3291 = vmatmul.mubr.bf16.gmra.mxu0 %v3071
    %v3292 = vpop.f32.mrf.mxu0
    %v3293 = vadd.f32 %v3112, %v3292
    %v3294 = vpop.f32.mrf.mxu0
    %v3295 = vpop.f32.mrf.mxu0
    %v3296 = vadd.f32 %v3112, %v3295
    %v3297 = vpop.f32.mrf.mxu0
    %3298 = vmatprep.mubr.bf16.mxu0 %v3074
    %3299 = vmatmul.mubr.bf16.gmra.mxu0 %v3073
    %v3300 = vpop.f32.mrf.mxu0
    %v3301 = vadd.f32 %v3112, %v3300
    %v3302 = vpop.f32.mrf.mxu0
    %v3303 = vpop.f32.mrf.mxu0
    %v3304 = vadd.f32 %v3112, %v3303
    %v3305 = vpop.f32.mrf.mxu0
    %3306 = vdwg.mxu0
    %v3307 = vmax.f32 %v3245, 0.0
    %v3308 = vmax.f32 %v3248, 0.0
    %v3309 = vmax.f32 %v3253, 0.0
    %v3310 = vmax.f32 %v3256, 0.0
    %v3311 = vmax.f32 %v3261, 0.0
    %v3312 = vmax.f32 %v3264, 0.0
    %v3313 = vmax.f32 %v3269, 0.0
    %v3314 = vmax.f32 %v3272, 0.0
    %v3315 = vmax.f32 %v3277, 0.0
    %v3316 = vmax.f32 %v3280, 0.0
    %v3317 = vmax.f32 %v3285, 0.0
    %v3318 = vmax.f32 %v3288, 0.0
    %v3319 = vmax.f32 %v3293, 0.0
    %v3320 = vmax.f32 %v3296, 0.0
    %v3321 = vmax.f32 %v3301, 0.0
    %v3322 = vmax.f32 %v3304, 0.0
    %v3323 = vpack.c.bf16 %v3308, %v3307
    %v3324 = vpack.c.bf16 %v3310, %v3309
    %v3325 = vpack.c.bf16 %v3312, %v3311
    %v3326 = vpack.c.bf16 %v3314, %v3313
    %v3327 = vpack.c.bf16 %v3316, %v3315
    %v3328 = vpack.c.bf16 %v3318, %v3317
    %v3329 = vpack.c.bf16 %v3320, %v3319
    %v3330 = vpack.c.bf16 %v3322, %v3321
    %v3331 = vld [vmem:[#allocation5] sm:$0xf]
    %v3332 = vld [vmem:[#allocation5 + $0x4] sm:$0xf]
    %v3333 = vld [vmem:[#allocation5 + $0x8] sm:$0xf]
    %v3334 = vld [vmem:[#allocation5 + $0xc] sm:$0xf]
    %v3335 = vld [vmem:[#allocation5 + $0x10] sm:$0xf]
    %v3336 = vld [vmem:[#allocation5 + $0x14] sm:$0xf]
    %v3337 = vld [vmem:[#allocation5 + $0x18] sm:$0xf]
    %v3338 = vld [vmem:[#allocation5 + $0x1c] sm:$0xf]
    %v3339 = vld [vmem:[#allocation5 + $0x20] sm:$0xf]
    %v3340 = vld [vmem:[#allocation5 + $0x24] sm:$0xf]
    %v3341 = vld [vmem:[#allocation5 + $0x28] sm:$0xf]
    %v3342 = vld [vmem:[#allocation5 + $0x2c] sm:$0xf]
    %v3343 = vld [vmem:[#allocation5 + $0x30] sm:$0xf]
    %v3344 = vld [vmem:[#allocation5 + $0x34] sm:$0xf]
    %v3345 = vld [vmem:[#allocation5 + $0x38] sm:$0xf]
    %v3346 = vld [vmem:[#allocation5 + $0x3c] sm:$0xf]
    %v3347 = vld [vmem:[%s6] sm:$0x1]
    %v3349 = vlaneseq
    %v3350 = vshrl.u32 %v3349, 7
    %v3351 = vsub.s32 0, %v3350
    %v3352 = vrot.slane %v3347, %v3351
    %v3370 = vunpack.c.l.b16 %v3331
    %v3371 = vunpack.c.l.b16 %v3332
    %v3372 = vunpack.c.l.b16 %v3333
    %v3373 = vunpack.c.l.b16 %v3334
    %v3374 = vunpack.c.l.b16 %v3335
    %v3375 = vunpack.c.l.b16 %v3336
    %v3376 = vunpack.c.l.b16 %v3337
    %v3377 = vunpack.c.l.b16 %v3338
    %v3378 = vunpack.c.l.b16 %v3339
    %v3379 = vunpack.c.l.b16 %v3340
    %v3380 = vunpack.c.l.b16 %v3341
    %v3381 = vunpack.c.l.b16 %v3342
    %v3382 = vunpack.c.l.b16 %v3343
    %v3383 = vunpack.c.l.b16 %v3344
    %v3384 = vunpack.c.l.b16 %v3345
    %v3385 = vunpack.c.l.b16 %v3346
    %v3386 = vpack.c.b16 %v3371, %v3370
    %v3387 = vpack.c.b16 %v3373, %v3372
    %v3388 = vpack.c.b16 %v3375, %v3374
    %v3389 = vpack.c.b16 %v3377, %v3376
    %v3390 = vpack.c.b16 %v3379, %v3378
    %v3391 = vpack.c.b16 %v3381, %v3380
    %v3392 = vpack.c.b16 %v3383, %v3382
    %v3393 = vpack.c.b16 %v3385, %v3384
    %3402 = vmatprep.subr.bf16.mxu0 0
    %3403 = vmatpush1.bf16.msra.mxu0 %v3393
    %3404 = vmatprep.subr.bf16.mxu0 0
    %3405 = vmatpush1.bf16.msra.mxu0 %v3392
    %3406 = vmatprep.subr.bf16.mxu0 0
    %3407 = vmatpush1.bf16.msra.mxu0 %v3391
    %3408 = vmatprep.subr.bf16.mxu0 0
    %3409 = vmatpush1.bf16.msra.mxu0 %v3390
    %3410 = vmatprep.subr.bf16.mxu0 0
    %3411 = vmatpush1.bf16.msra.mxu0 %v3389
    %3412 = vmatprep.subr.bf16.mxu0 0
    %3413 = vmatpush1.bf16.msra.mxu0 %v3388
    %3414 = vmatprep.subr.bf16.mxu0 0
    %3415 = vmatpush1.bf16.msra.mxu0 %v3387
    %3416 = vmatprep.subr.bf16.mxu0 0
    %3417 = vmatpush1.bf16.msra.mxu0 %v3386
    %3418 = vmatprep.subr.bf16.mxu0 0
    %3419 = vmatpush2.bf16.msra.mxu0 0
    %3420 = vmatprep.subr.bf16.mxu0 0
    %3421 = vmatpush2.bf16.msra.mxu0 0
    %3422 = vmatprep.subr.bf16.mxu0 0
    %3423 = vmatpush2.bf16.msra.mxu0 0
    %3424 = vmatprep.subr.bf16.mxu0 0
    %3425 = vmatpush2.bf16.msra.mxu0 0
    %3426 = vmatprep.subr.bf16.mxu0 0
    %3427 = vmatpush2.bf16.msra.mxu0 0
    %3428 = vmatprep.subr.bf16.mxu0 0
    %3429 = vmatpush2.bf16.msra.mxu0 0
    %3430 = vmatprep.subr.bf16.mxu0 0
    %3431 = vmatpush2.bf16.msra.mxu0 0
    %3432 = vmatprep.subr.bf16.mxu0 0
    %3433 = vmatpush2.bf16.msra.mxu0 0
    %3434 = vmatprep.mubr.bf16.mxu0 0
    %3435 = vmatmul.mubr.bf16.gmra.mxu0 %v3323
    %v3436 = vpop.f32.mrf.mxu0
    %v3437 = vadd.f32 %v3352, %v3436
    %v3438 = vpop.f32.mrf.mxu0
    %v3439 = vpop.f32.mrf.mxu0
    %v3440 = vadd.f32 %v3352, %v3439
    %v3441 = vpop.f32.mrf.mxu0
    %3442 = vmatprep.mubr.bf16.mxu0 0
    %3443 = vmatmul.mubr.bf16.gmra.mxu0 %v3324
    %v3444 = vpop.f32.mrf.mxu0
    %v3445 = vadd.f32 %v3352, %v3444
    %v3446 = vpop.f32.mrf.mxu0
    %v3447 = vpop.f32.mrf.mxu0
    %v3448 = vadd.f32 %v3352, %v3447
    %v3449 = vpop.f32.mrf.mxu0
    %3450 = vmatprep.mubr.bf16.mxu0 0
    %3451 = vmatmul.mubr.bf16.gmra.mxu0 %v3325
    %v3452 = vpop.f32.mrf.mxu0
    %v3453 = vadd.f32 %v3352, %v3452
    %v3454 = vpop.f32.mrf.mxu0
    %v3455 = vpop.f32.mrf.mxu0
    %v3456 = vadd.f32 %v3352, %v3455
    %v3457 = vpop.f32.mrf.mxu0
    %3458 = vmatprep.mubr.bf16.mxu0 0
    %3459 = vmatmul.mubr.bf16.gmra.mxu0 %v3326
    %v3460 = vpop.f32.mrf.mxu0
    %v3461 = vadd.f32 %v3352, %v3460
    %v3462 = vpop.f32.mrf.mxu0
    %v3463 = vpop.f32.mrf.mxu0
    %v3464 = vadd.f32 %v3352, %v3463
    %v3465 = vpop.f32.mrf.mxu0
    %3466 = vmatprep.mubr.bf16.mxu0 0
    %3467 = vmatmul.mubr.bf16.gmra.mxu0 %v3327
    %v3468 = vpop.f32.mrf.mxu0
    %v3469 = vadd.f32 %v3352, %v3468
    %v3470 = vpop.f32.mrf.mxu0
    %v3471 = vpop.f32.mrf.mxu0
    %v3472 = vadd.f32 %v3352, %v3471
    %v3473 = vpop.f32.mrf.mxu0
    %3474 = vmatprep.mubr.bf16.mxu0 0
    %3475 = vmatmul.mubr.bf16.gmra.mxu0 %v3328
    %v3476 = vpop.f32.mrf.mxu0
    %v3477 = vadd.f32 %v3352, %v3476
    %v3478 = vpop.f32.mrf.mxu0
    %v3479 = vpop.f32.mrf.mxu0
    %v3480 = vadd.f32 %v3352, %v3479
    %v3481 = vpop.f32.mrf.mxu0
    %3482 = vmatprep.mubr.bf16.mxu0 0
    %3483 = vmatmul.mubr.bf16.gmra.mxu0 %v3329
    %v3484 = vpop.f32.mrf.mxu0
    %v3485 = vadd.f32 %v3352, %v3484
    %v3486 = vpop.f32.mrf.mxu0
    %v3487 = vpop.f32.mrf.mxu0
    %v3488 = vadd.f32 %v3352, %v3487
    %v3489 = vpop.f32.mrf.mxu0
    %3490 = vmatprep.mubr.bf16.mxu0 0
    %3491 = vmatmul.mubr.bf16.gmra.mxu0 %v3330
    %v3492 = vpop.f32.mrf.mxu0
    %v3493 = vadd.f32 %v3352, %v3492
    %v3494 = vpop.f32.mrf.mxu0
    %v3495 = vpop.f32.mrf.mxu0
    %v3496 = vadd.f32 %v3352, %v3495
    %v3497 = vpop.f32.mrf.mxu0
    %3498 = vdwg.mxu0
    %v3499 = vmax.f32 %v3437, 0.0
    %v3500 = vmax.f32 %v3440, 0.0
    %v3501 = vmax.f32 %v3445, 0.0
    %v3502 = vmax.f32 %v3448, 0.0
    %v3503 = vmax.f32 %v3453, 0.0
    %v3504 = vmax.f32 %v3456, 0.0
    %v3505 = vmax.f32 %v3461, 0.0
    %v3506 = vmax.f32 %v3464, 0.0
    %v3507 = vmax.f32 %v3469, 0.0
    %v3508 = vmax.f32 %v3472, 0.0
    %v3509 = vmax.f32 %v3477, 0.0
    %v3510 = vmax.f32 %v3480, 0.0
    %v3511 = vmax.f32 %v3485, 0.0
    %v3512 = vmax.f32 %v3488, 0.0
    %v3513 = vmax.f32 %v3493, 0.0
    %v3514 = vmax.f32 %v3496, 0.0
    %v3515 = vpack.c.bf16 %v3500, %v3499
    %v3516 = vpack.c.bf16 %v3502, %v3501
    %v3517 = vpack.c.bf16 %v3504, %v3503
    %v3518 = vpack.c.bf16 %v3506, %v3505
    %v3519 = vpack.c.bf16 %v3508, %v3507
    %v3520 = vpack.c.bf16 %v3510, %v3509
    %v3521 = vpack.c.bf16 %v3512, %v3511
    %v3522 = vpack.c.bf16 %v3514, %v3513
    %v3523 = vld [vmem:[#allocation7] sm:$0xf]
    %v3524 = vld [vmem:[#allocation7 + $0x4] sm:$0xf]
    %v3525 = vld [vmem:[#allocation7 + $0x8] sm:$0xf]
    %v3526 = vld [vmem:[#allocation7 + $0xc] sm:$0xf]
    %v3527 = vld [vmem:[#allocation7 + $0x10] sm:$0xf]
    %v3528 = vld [vmem:[#allocation7 + $0x14] sm:$0xf]
    %v3529 = vld [vmem:[#allocation7 + $0x18] sm:$0xf]
    %v3530 = vld [vmem:[#allocation7 + $0x1c] sm:$0xf]
    %v3531 = vld [vmem:[#allocation7 + $0x20] sm:$0xf]
    %v3532 = vld [vmem:[#allocation7 + $0x24] sm:$0xf]
    %v3533 = vld [vmem:[#allocation7 + $0x28] sm:$0xf]
    %v3534 = vld [vmem:[#allocation7 + $0x2c] sm:$0xf]
    %v3535 = vld [vmem:[#allocation7 + $0x30] sm:$0xf]
    %v3536 = vld [vmem:[#allocation7 + $0x34] sm:$0xf]
    %v3537 = vld [vmem:[#allocation7 + $0x38] sm:$0xf]
    %v3538 = vld [vmem:[#allocation7 + $0x3c] sm:$0xf]
    %v3539 = vld [vmem:[%s8] sm:$0x1]
    %v3541 = vlaneseq
    %v3542 = vshrl.u32 %v3541, 7
    %v3543 = vsub.s32 0, %v3542
    %v3544 = vrot.slane %v3539, %v3543
    %v3562 = vunpack.c.l.b16 %v3523
    %v3563 = vunpack.c.l.b16 %v3524
    %v3564 = vunpack.c.l.b16 %v3525
    %v3565 = vunpack.c.l.b16 %v3526
    %v3566 = vunpack.c.l.b16 %v3527
    %v3567 = vunpack.c.l.b16 %v3528
    %v3568 = vunpack.c.l.b16 %v3529
    %v3569 = vunpack.c.l.b16 %v3530
    %v3570 = vunpack.c.l.b16 %v3531
    %v3571 = vunpack.c.l.b16 %v3532
    %v3572 = vunpack.c.l.b16 %v3533
    %v3573 = vunpack.c.l.b16 %v3534
    %v3574 = vunpack.c.l.b16 %v3535
    %v3575 = vunpack.c.l.b16 %v3536
    %v3576 = vunpack.c.l.b16 %v3537
    %v3577 = vunpack.c.l.b16 %v3538
    %v3578 = vpack.c.b16 %v3563, %v3562
    %v3579 = vpack.c.b16 %v3565, %v3564
    %v3580 = vpack.c.b16 %v3567, %v3566
    %v3581 = vpack.c.b16 %v3569, %v3568
    %v3582 = vpack.c.b16 %v3571, %v3570
    %v3583 = vpack.c.b16 %v3573, %v3572
    %v3584 = vpack.c.b16 %v3575, %v3574
    %v3585 = vpack.c.b16 %v3577, %v3576
    %3594 = vmatprep.subr.bf16.mxu0 0
    %3595 = vmatpush1.bf16.msra.mxu0 %v3585
    %3596 = vmatprep.subr.bf16.mxu0 0
    %3597 = vmatpush1.bf16.msra.mxu0 %v3584
    %3598 = vmatprep.subr.bf16.mxu0 0
    %3599 = vmatpush1.bf16.msra.mxu0 %v3583
    %3600 = vmatprep.subr.bf16.mxu0 0
    %3601 = vmatpush1.bf16.msra.mxu0 %v3582
    %3602 = vmatprep.subr.bf16.mxu0 0
    %3603 = vmatpush1.bf16.msra.mxu0 %v3581
    %3604 = vmatprep.subr.bf16.mxu0 0
    %3605 = vmatpush1.bf16.msra.mxu0 %v3580
    %3606 = vmatprep.subr.bf16.mxu0 0
    %3607 = vmatpush1.bf16.msra.mxu0 %v3579
    %3608 = vmatprep.subr.bf16.mxu0 0
    %3609 = vmatpush1.bf16.msra.mxu0 %v3578
    %3610 = vmatprep.subr.bf16.mxu0 0
    %3611 = vmatpush2.bf16.msra.mxu0 0
    %3612 = vmatprep.subr.bf16.mxu0 0
    %3613 = vmatpush2.bf16.msra.mxu0 0
    %3614 = vmatprep.subr.bf16.mxu0 0
    %3615 = vmatpush2.bf16.msra.mxu0 0
    %3616 = vmatprep.subr.bf16.mxu0 0
    %3617 = vmatpush2.bf16.msra.mxu0 0
    %3618 = vmatprep.subr.bf16.mxu0 0
    %3619 = vmatpush2.bf16.msra.mxu0 0
    %3620 = vmatprep.subr.bf16.mxu0 0
    %3621 = vmatpush2.bf16.msra.mxu0 0
    %3622 = vmatprep.subr.bf16.mxu0 0
    %3623 = vmatpush2.bf16.msra.mxu0 0
    %3624 = vmatprep.subr.bf16.mxu0 0
    %3625 = vmatpush2.bf16.msra.mxu0 0
    %3626 = vmatprep.mubr.bf16.mxu0 0
    %3627 = vmatmul.mubr.bf16.gmra.mxu0 %v3515
    %v3628 = vpop.f32.mrf.mxu0
    %v3629 = vadd.f32 %v3544, %v3628
    %v3630 = vpop.f32.mrf.mxu0
    %v3631 = vpop.f32.mrf.mxu0
    %v3632 = vadd.f32 %v3544, %v3631
    %v3633 = vpop.f32.mrf.mxu0
    %3634 = vmatprep.mubr.bf16.mxu0 0
    %3635 = vmatmul.mubr.bf16.gmra.mxu0 %v3516
    %v3636 = vpop.f32.mrf.mxu0
    %v3637 = vadd.f32 %v3544, %v3636
    %v3638 = vpop.f32.mrf.mxu0
    %v3639 = vpop.f32.mrf.mxu0
    %v3640 = vadd.f32 %v3544, %v3639
    %v3641 = vpop.f32.mrf.mxu0
    %3642 = vmatprep.mubr.bf16.mxu0 0
    %3643 = vmatmul.mubr.bf16.gmra.mxu0 %v3517
    %v3644 = vpop.f32.mrf.mxu0
    %v3645 = vadd.f32 %v3544, %v3644
    %v3646 = vpop.f32.mrf.mxu0
    %v3647 = vpop.f32.mrf.mxu0
    %v3648 = vadd.f32 %v3544, %v3647
    %v3649 = vpop.f32.mrf.mxu0
    %3650 = vmatprep.mubr.bf16.mxu0 0
    %3651 = vmatmul.mubr.bf16.gmra.mxu0 %v3518
    %v3652 = vpop.f32.mrf.mxu0
    %v3653 = vadd.f32 %v3544, %v3652
    %v3654 = vpop.f32.mrf.mxu0
    %v3655 = vpop.f32.mrf.mxu0
    %v3656 = vadd.f32 %v3544, %v3655
    %v3657 = vpop.f32.mrf.mxu0
    %3658 = vmatprep.mubr.bf16.mxu0 0
    %3659 = vmatmul.mubr.bf16.gmra.mxu0 %v3519
    %v3660 = vpop.f32.mrf.mxu0
    %v3661 = vadd.f32 %v3544, %v3660
    %v3662 = vpop.f32.mrf.mxu0
    %v3663 = vpop.f32.mrf.mxu0
    %v3664 = vadd.f32 %v3544, %v3663
    %v3665 = vpop.f32.mrf.mxu0
    %3666 = vmatprep.mubr.bf16.mxu0 0
    %3667 = vmatmul.mubr.bf16.gmra.mxu0 %v3520
    %v3668 = vpop.f32.mrf.mxu0
    %v3669 = vadd.f32 %v3544, %v3668
    %v3670 = vpop.f32.mrf.mxu0
    %v3671 = vpop.f32.mrf.mxu0
    %v3672 = vadd.f32 %v3544, %v3671
    %v3673 = vpop.f32.mrf.mxu0
    %3674 = vmatprep.mubr.bf16.mxu0 0
    %3675 = vmatmul.mubr.bf16.gmra.mxu0 %v3521
    %v3676 = vpop.f32.mrf.mxu0
    %v3677 = vadd.f32 %v3544, %v3676
    %v3678 = vpop.f32.mrf.mxu0
    %v3679 = vpop.f32.mrf.mxu0
    %v3680 = vadd.f32 %v3544, %v3679
    %v3681 = vpop.f32.mrf.mxu0
    %3682 = vmatprep.mubr.bf16.mxu0 0
    %3683 = vmatmul.mubr.bf16.gmra.mxu0 %v3522
    %v3684 = vpop.f32.mrf.mxu0
    %v3685 = vadd.f32 %v3544, %v3684
    %v3686 = vpop.f32.mrf.mxu0
    %v3687 = vpop.f32.mrf.mxu0
    %v3688 = vadd.f32 %v3544, %v3687
    %v3689 = vpop.f32.mrf.mxu0
    %3690 = vdwg.mxu0
    %v3691 = vunpack.c.l.bf16 %v3323
    %v3692 = vunpack.c.h.bf16 %v3323
    %v3693 = vunpack.c.l.bf16 %v3324
    %v3694 = vunpack.c.h.bf16 %v3324
    %v3695 = vunpack.c.l.bf16 %v3325
    %v3696 = vunpack.c.h.bf16 %v3325
    %v3697 = vunpack.c.l.bf16 %v3326
    %v3698 = vunpack.c.h.bf16 %v3326
    %v3699 = vunpack.c.l.bf16 %v3327
    %v3700 = vunpack.c.h.bf16 %v3327
    %v3701 = vunpack.c.l.bf16 %v3328
    %v3702 = vunpack.c.h.bf16 %v3328
    %v3703 = vunpack.c.l.bf16 %v3329
    %v3704 = vunpack.c.h.bf16 %v3329
    %v3705 = vunpack.c.l.bf16 %v3330
    %v3706 = vunpack.c.h.bf16 %v3330
    %v3707 = vadd.f32 %v3629, %v3691
    %v3708 = vadd.f32 %v3632, %v3692
    %v3709 = vadd.f32 %v3637, %v3693
    %v3710 = vadd.f32 %v3640, %v3694
    %v3711 = vadd.f32 %v3645, %v3695
    %v3712 = vadd.f32 %v3648, %v3696
    %v3713 = vadd.f32 %v3653, %v3697
    %v3714 = vadd.f32 %v3656, %v3698
    %v3715 = vadd.f32 %v3661, %v3699
    %v3716 = vadd.f32 %v3664, %v3700
    %v3717 = vadd.f32 %v3669, %v3701
    %v3718 = vadd.f32 %v3672, %v3702
    %v3719 = vadd.f32 %v3677, %v3703
    %v3720 = vadd.f32 %v3680, %v3704
    %v3721 = vadd.f32 %v3685, %v3705
    %v3722 = vadd.f32 %v3688, %v3706
    %v3723 = vmax.f32 %v3707, 0.0
    %v3724 = vmax.f32 %v3708, 0.0
    %v3725 = vmax.f32 %v3709, 0.0
    %v3726 = vmax.f32 %v3710, 0.0
    %v3727 = vmax.f32 %v3711, 0.0
    %v3728 = vmax.f32 %v3712, 0.0
    %v3729 = vmax.f32 %v3713, 0.0
    %v3730 = vmax.f32 %v3714, 0.0
    %v3731 = vmax.f32 %v3715, 0.0
    %v3732 = vmax.f32 %v3716, 0.0
    %v3733 = vmax.f32 %v3717, 0.0
    %v3734 = vmax.f32 %v3718, 0.0
    %v3735 = vmax.f32 %v3719, 0.0
    %v3736 = vmax.f32 %v3720, 0.0
    %v3737 = vmax.f32 %v3721, 0.0
    %v3738 = vmax.f32 %v3722, 0.0
    %v3739 = vpack.c.bf16 %v3724, %v3723
    %v3740 = vpack.c.bf16 %v3726, %v3725
    %v3741 = vpack.c.bf16 %v3728, %v3727
    %v3742 = vpack.c.bf16 %v3730, %v3729
    %v3743 = vpack.c.bf16 %v3732, %v3731
    %v3744 = vpack.c.bf16 %v3734, %v3733
    %v3745 = vpack.c.bf16 %v3736, %v3735
    %v3746 = vpack.c.bf16 %v3738, %v3737
    %v3747 = vld [vmem:[#allocation8] sm:$0xff]
    %v3748 = vld [vmem:[#allocation8 + $0x8] sm:$0xff]
    %v3749 = vld [vmem:[#allocation8 + $0x10] sm:$0xff]
    %v3750 = vld [vmem:[#allocation8 + $0x18] sm:$0xff]
    %v3751 = vld [vmem:[#allocation8 + $0x20] sm:$0xff]
    %v3752 = vld [vmem:[#allocation8 + $0x28] sm:$0xff]
    %v3753 = vld [vmem:[#allocation8 + $0x30] sm:$0xff]
    %v3754 = vld [vmem:[#allocation8 + $0x38] sm:$0xff]
    %v3755 = vld [vmem:[#allocation8 + $0x40] sm:$0xff]
    %v3756 = vld [vmem:[#allocation8 + $0x48] sm:$0xff]
    %v3757 = vld [vmem:[#allocation8 + $0x50] sm:$0xff]
    %v3758 = vld [vmem:[#allocation8 + $0x58] sm:$0xff]
    %v3759 = vld [vmem:[#allocation8 + $0x60] sm:$0xff]
    %v3760 = vld [vmem:[#allocation8 + $0x68] sm:$0xff]
    %v3761 = vld [vmem:[#allocation8 + $0x70] sm:$0xff]
    %v3762 = vld [vmem:[#allocation8 + $0x78] sm:$0xff]
    %v3763 = vld [vmem:[%s10] sm:$0x3]
    %v3765 = vlaneseq
    %v3766 = vshrl.u32 %v3765, 7
    %v3767 = vsub.s32 0, %v3766
    %v3768 = vrot.slane %v3763, %v3767
    %v3769 = vlaneseq
    %v3770 = vshrl.u32 %v3769, 7
    %v3771 = vsub.s32 1, %v3770
    %v3772 = vrot.slane %v3763, %v3771
    %v3791 = vunpack.c.l.b16 %v3747
    %v3792 = vunpack.c.h.b16 %v3747
    %v3793 = vunpack.c.l.b16 %v3748
    %v3794 = vunpack.c.h.b16 %v3748
    %v3795 = vunpack.c.l.b16 %v3749
    %v3796 = vunpack.c.h.b16 %v3749
    %v3797 = vunpack.c.l.b16 %v3750
    %v3798 = vunpack.c.h.b16 %v3750
    %v3799 = vunpack.c.l.b16 %v3751
    %v3800 = vunpack.c.h.b16 %v3751
    %v3801 = vunpack.c.l.b16 %v3752
    %v3802 = vunpack.c.h.b16 %v3752
    %v3803 = vunpack.c.l.b16 %v3753
    %v3804 = vunpack.c.h.b16 %v3753
    %v3805 = vunpack.c.l.b16 %v3754
    %v3806 = vunpack.c.h.b16 %v3754
    %v3807 = vunpack.c.l.b16 %v3755
    %v3808 = vunpack.c.h.b16 %v3755
    %v3809 = vunpack.c.l.b16 %v3756
    %v3810 = vunpack.c.h.b16 %v3756
    %v3811 = vunpack.c.l.b16 %v3757
    %v3812 = vunpack.c.h.b16 %v3757
    %v3813 = vunpack.c.l.b16 %v3758
    %v3814 = vunpack.c.h.b16 %v3758
    %v3815 = vunpack.c.l.b16 %v3759
    %v3816 = vunpack.c.h.b16 %v3759
    %v3817 = vunpack.c.l.b16 %v3760
    %v3818 = vunpack.c.h.b16 %v3760
    %v3819 = vunpack.c.l.b16 %v3761
    %v3820 = vunpack.c.h.b16 %v3761
    %v3821 = vunpack.c.l.b16 %v3762
    %v3822 = vunpack.c.h.b16 %v3762
    %v3823 = vpack.c.b16 %v3793, %v3791
    %v3824 = vpack.c.b16 %v3794, %v3792
    %v3825 = vpack.c.b16 %v3797, %v3795
    %v3826 = vpack.c.b16 %v3798, %v3796
    %v3827 = vpack.c.b16 %v3801, %v3799
    %v3828 = vpack.c.b16 %v3802, %v3800
    %v3829 = vpack.c.b16 %v3805, %v3803
    %v3830 = vpack.c.b16 %v3806, %v3804
    %v3831 = vpack.c.b16 %v3809, %v3807
    %v3832 = vpack.c.b16 %v3810, %v3808
    %v3833 = vpack.c.b16 %v3813, %v3811
    %v3834 = vpack.c.b16 %v3814, %v3812
    %v3835 = vpack.c.b16 %v3817, %v3815
    %v3836 = vpack.c.b16 %v3818, %v3816
    %v3837 = vpack.c.b16 %v3821, %v3819
    %v3838 = vpack.c.b16 %v3822, %v3820
    %3855 = vmatprep.subr.bf16.mxu0 %v3838
    %3856 = vmatpush1.bf16.msra.mxu0 %v3837
    %3857 = vmatprep.subr.bf16.mxu0 %v3836
    %3858 = vmatpush1.bf16.msra.mxu0 %v3835
    %3859 = vmatprep.subr.bf16.mxu0 %v3834
    %3860 = vmatpush1.bf16.msra.mxu0 %v3833
    %3861 = vmatprep.subr.bf16.mxu0 %v3832
    %3862 = vmatpush1.bf16.msra.mxu0 %v3831
    %3863 = vmatprep.subr.bf16.mxu0 %v3830
    %3864 = vmatpush1.bf16.msra.mxu0 %v3829
    %3865 = vmatprep.subr.bf16.mxu0 %v3828
    %3866 = vmatpush1.bf16.msra.mxu0 %v3827
    %3867 = vmatprep.subr.bf16.mxu0 %v3826
    %3868 = vmatpush1.bf16.msra.mxu0 %v3825
    %3869 = vmatprep.subr.bf16.mxu0 %v3824
    %3870 = vmatpush1.bf16.msra.mxu0 %v3823
    %3871 = vmatprep.subr.bf16.mxu0 0
    %3872 = vmatpush2.bf16.msra.mxu0 0
    %3873 = vmatprep.subr.bf16.mxu0 0
    %3874 = vmatpush2.bf16.msra.mxu0 0
    %3875 = vmatprep.subr.bf16.mxu0 0
    %3876 = vmatpush2.bf16.msra.mxu0 0
    %3877 = vmatprep.subr.bf16.mxu0 0
    %3878 = vmatpush2.bf16.msra.mxu0 0
    %3879 = vmatprep.subr.bf16.mxu0 0
    %3880 = vmatpush2.bf16.msra.mxu0 0
    %3881 = vmatprep.subr.bf16.mxu0 0
    %3882 = vmatpush2.bf16.msra.mxu0 0
    %3883 = vmatprep.subr.bf16.mxu0 0
    %3884 = vmatpush2.bf16.msra.mxu0 0
    %3885 = vmatprep.subr.bf16.mxu0 0
    %3886 = vmatpush2.bf16.msra.mxu0 0
    %3887 = vmatprep.mubr.bf16.mxu0 0
    %3888 = vmatmul.mubr.bf16.gmra.mxu0 %v3739
    %v3889 = vpop.f32.mrf.mxu0
    %v3890 = vadd.f32 %v3768, %v3889
    %v3891 = vpop.f32.mrf.mxu0
    %v3892 = vadd.f32 %v3772, %v3891
    %v3893 = vpop.f32.mrf.mxu0
    %v3894 = vadd.f32 %v3768, %v3893
    %v3895 = vpop.f32.mrf.mxu0
    %v3896 = vadd.f32 %v3772, %v3895
    %3897 = vmatprep.mubr.bf16.mxu0 0
    %3898 = vmatmul.mubr.bf16.gmra.mxu0 %v3740
    %v3899 = vpop.f32.mrf.mxu0
    %v3900 = vadd.f32 %v3768, %v3899
    %v3901 = vpop.f32.mrf.mxu0
    %v3902 = vadd.f32 %v3772, %v3901
    %v3903 = vpop.f32.mrf.mxu0
    %v3904 = vadd.f32 %v3768, %v3903
    %v3905 = vpop.f32.mrf.mxu0
    %v3906 = vadd.f32 %v3772, %v3905
    %3907 = vmatprep.mubr.bf16.mxu0 0
    %3908 = vmatmul.mubr.bf16.gmra.mxu0 %v3741
    %v3909 = vpop.f32.mrf.mxu0
    %v3910 = vadd.f32 %v3768, %v3909
    %v3911 = vpop.f32.mrf.mxu0
    %v3912 = vadd.f32 %v3772, %v3911
    %v3913 = vpop.f32.mrf.mxu0
    %v3914 = vadd.f32 %v3768, %v3913
    %v3915 = vpop.f32.mrf.mxu0
    %v3916 = vadd.f32 %v3772, %v3915
    %3917 = vmatprep.mubr.bf16.mxu0 0
    %3918 = vmatmul.mubr.bf16.gmra.mxu0 %v3742
    %v3919 = vpop.f32.mrf.mxu0
    %v3920 = vadd.f32 %v3768, %v3919
    %v3921 = vpop.f32.mrf.mxu0
    %v3922 = vadd.f32 %v3772, %v3921
    %v3923 = vpop.f32.mrf.mxu0
    %v3924 = vadd.f32 %v3768, %v3923
    %v3925 = vpop.f32.mrf.mxu0
    %v3926 = vadd.f32 %v3772, %v3925
    %3927 = vmatprep.mubr.bf16.mxu0 0
    %3928 = vmatmul.mubr.bf16.gmra.mxu0 %v3743
    %v3929 = vpop.f32.mrf.mxu0
    %v3930 = vadd.f32 %v3768, %v3929
    %v3931 = vpop.f32.mrf.mxu0
    %v3932 = vadd.f32 %v3772, %v3931
    %v3933 = vpop.f32.mrf.mxu0
    %v3934 = vadd.f32 %v3768, %v3933
    %v3935 = vpop.f32.mrf.mxu0
    %v3936 = vadd.f32 %v3772, %v3935
    %3937 = vmatprep.mubr.bf16.mxu0 0
    %3938 = vmatmul.mubr.bf16.gmra.mxu0 %v3744
    %v3939 = vpop.f32.mrf.mxu0
    %v3940 = vadd.f32 %v3768, %v3939
    %v3941 = vpop.f32.mrf.mxu0
    %v3942 = vadd.f32 %v3772, %v3941
    %v3943 = vpop.f32.mrf.mxu0
    %v3944 = vadd.f32 %v3768, %v3943
    %v3945 = vpop.f32.mrf.mxu0
    %v3946 = vadd.f32 %v3772, %v3945
    %3947 = vmatprep.mubr.bf16.mxu0 0
    %3948 = vmatmul.mubr.bf16.gmra.mxu0 %v3745
    %v3949 = vpop.f32.mrf.mxu0
    %v3950 = vadd.f32 %v3768, %v3949
    %v3951 = vpop.f32.mrf.mxu0
    %v3952 = vadd.f32 %v3772, %v3951
    %v3953 = vpop.f32.mrf.mxu0
    %v3954 = vadd.f32 %v3768, %v3953
    %v3955 = vpop.f32.mrf.mxu0
    %v3956 = vadd.f32 %v3772, %v3955
    %3957 = vmatprep.mubr.bf16.mxu0 0
    %3958 = vmatmul.mubr.bf16.gmra.mxu0 %v3746
    %v3959 = vpop.f32.mrf.mxu0
    %v3960 = vadd.f32 %v3768, %v3959
    %v3961 = vpop.f32.mrf.mxu0
    %v3962 = vadd.f32 %v3772, %v3961
    %v3963 = vpop.f32.mrf.mxu0
    %v3964 = vadd.f32 %v3768, %v3963
    %v3965 = vpop.f32.mrf.mxu0
    %v3966 = vadd.f32 %v3772, %v3965
    %3967 = vdwg.mxu0
    %v3968 = vunpack.c.l.bf16 %v3059
    %v3969 = vunpack.c.l.bf16 %v3060
    %v3970 = vunpack.c.h.bf16 %v3059
    %v3971 = vunpack.c.h.bf16 %v3060
    %v3972 = vunpack.c.l.bf16 %v3061
    %v3973 = vunpack.c.l.bf16 %v3062
    %v3974 = vunpack.c.h.bf16 %v3061
    %v3975 = vunpack.c.h.bf16 %v3062
    %v3976 = vunpack.c.l.bf16 %v3063
    %v3977 = vunpack.c.l.bf16 %v3064
    %v3978 = vunpack.c.h.bf16 %v3063
    %v3979 = vunpack.c.h.bf16 %v3064
    %v3980 = vunpack.c.l.bf16 %v3065
    %v3981 = vunpack.c.l.bf16 %v3066
    %v3982 = vunpack.c.h.bf16 %v3065
    %v3983 = vunpack.c.h.bf16 %v3066
    %v3984 = vunpack.c.l.bf16 %v3067
    %v3985 = vunpack.c.l.bf16 %v3068
    %v3986 = vunpack.c.h.bf16 %v3067
    %v3987 = vunpack.c.h.bf16 %v3068
    %v3988 = vunpack.c.l.bf16 %v3069
    %v3989 = vunpack.c.l.bf16 %v3070
    %v3990 = vunpack.c.h.bf16 %v3069
    %v3991 = vunpack.c.h.bf16 %v3070
    %v3992 = vunpack.c.l.bf16 %v3071
    %v3993 = vunpack.c.l.bf16 %v3072
    %v3994 = vunpack.c.h.bf16 %v3071
    %v3995 = vunpack.c.h.bf16 %v3072
    %v3996 = vunpack.c.l.bf16 %v3073
    %v3997 = vunpack.c.l.bf16 %v3074
    %v3998 = vunpack.c.h.bf16 %v3073
    %v3999 = vunpack.c.h.bf16 %v3074
    %v4000 = vadd.f32 %v3890, %v3968
    %v4001 = vadd.f32 %v3892, %v3969
    %v4002 = vadd.f32 %v3894, %v3970
    %v4003 = vadd.f32 %v3896, %v3971
    %v4004 = vadd.f32 %v3900, %v3972
    %v4005 = vadd.f32 %v3902, %v3973
    %v4006 = vadd.f32 %v3904, %v3974
    %v4007 = vadd.f32 %v3906, %v3975
    %v4008 = vadd.f32 %v3910, %v3976
    %v4009 = vadd.f32 %v3912, %v3977
    %v4010 = vadd.f32 %v3914, %v3978
    %v4011 = vadd.f32 %v3916, %v3979
    %v4012 = vadd.f32 %v3920, %v3980
    %v4013 = vadd.f32 %v3922, %v3981
    %v4014 = vadd.f32 %v3924, %v3982
    %v4015 = vadd.f32 %v3926, %v3983
    %v4016 = vadd.f32 %v3930, %v3984
    %v4017 = vadd.f32 %v3932, %v3985
    %v4018 = vadd.f32 %v3934, %v3986
    %v4019 = vadd.f32 %v3936, %v3987
    %v4020 = vadd.f32 %v3940, %v3988
    %v4021 = vadd.f32 %v3942, %v3989
    %v4022 = vadd.f32 %v3944, %v3990
    %v4023 = vadd.f32 %v3946, %v3991
    %v4024 = vadd.f32 %v3950, %v3992
    %v4025 = vadd.f32 %v3952, %v3993
    %v4026 = vadd.f32 %v3954, %v3994
    %v4027 = vadd.f32 %v3956, %v3995
    %v4028 = vadd.f32 %v3960, %v3996
    %v4029 = vadd.f32 %v3962, %v3997
    %v4030 = vadd.f32 %v3964, %v3998
    %v4031 = vadd.f32 %v3966, %v3999
    %v4032 = vmax.f32 %v4000, 0.0
    %v4033 = vmax.f32 %v4001, 0.0
    %v4034 = vmax.f32 %v4002, 0.0
    %v4035 = vmax.f32 %v4003, 0.0
    %v4036 = vmax.f32 %v4004, 0.0
    %v4037 = vmax.f32 %v4005, 0.0
    %v4038 = vmax.f32 %v4006, 0.0
    %v4039 = vmax.f32 %v4007, 0.0
    %v4040 = vmax.f32 %v4008, 0.0
    %v4041 = vmax.f32 %v4009, 0.0
    %v4042 = vmax.f32 %v4010, 0.0
    %v4043 = vmax.f32 %v4011, 0.0
    %v4044 = vmax.f32 %v4012, 0.0
    %v4045 = vmax.f32 %v4013, 0.0
    %v4046 = vmax.f32 %v4014, 0.0
    %v4047 = vmax.f32 %v4015, 0.0
    %v4048 = vmax.f32 %v4016, 0.0
    %v4049 = vmax.f32 %v4017, 0.0
    %v4050 = vmax.f32 %v4018, 0.0
    %v4051 = vmax.f32 %v4019, 0.0
    %v4052 = vmax.f32 %v4020, 0.0
    %v4053 = vmax.f32 %v4021, 0.0
    %v4054 = vmax.f32 %v4022, 0.0
    %v4055 = vmax.f32 %v4023, 0.0
    %v4056 = vmax.f32 %v4024, 0.0
    %v4057 = vmax.f32 %v4025, 0.0
    %v4058 = vmax.f32 %v4026, 0.0
    %v4059 = vmax.f32 %v4027, 0.0
    %v4060 = vmax.f32 %v4028, 0.0
    %v4061 = vmax.f32 %v4029, 0.0
    %v4062 = vmax.f32 %v4030, 0.0
    %v4063 = vmax.f32 %v4031, 0.0
    %v4064 = vpack.c.bf16 %v4034, %v4032
    %v4065 = vpack.c.bf16 %v4035, %v4033
    %v4066 = vpack.c.bf16 %v4038, %v4036
    %v4067 = vpack.c.bf16 %v4039, %v4037
    %v4068 = vpack.c.bf16 %v4042, %v4040
    %v4069 = vpack.c.bf16 %v4043, %v4041
    %v4070 = vpack.c.bf16 %v4046, %v4044
    %v4071 = vpack.c.bf16 %v4047, %v4045
    %v4072 = vpack.c.bf16 %v4050, %v4048
    %v4073 = vpack.c.bf16 %v4051, %v4049
    %v4074 = vpack.c.bf16 %v4054, %v4052
    %v4075 = vpack.c.bf16 %v4055, %v4053
    %v4076 = vpack.c.bf16 %v4058, %v4056
    %v4077 = vpack.c.bf16 %v4059, %v4057
    %v4078 = vpack.c.bf16 %v4062, %v4060
    %v4079 = vpack.c.bf16 %v4063, %v4061
    %v4080 = vld [vmem:[#allocation10] sm:$0xf]
    %v4081 = vld [vmem:[#allocation10 + $0x4] sm:$0xf]
    %v4082 = vld [vmem:[#allocation10 + $0x8] sm:$0xf]
    %v4083 = vld [vmem:[#allocation10 + $0xc] sm:$0xf]
    %v4084 = vld [vmem:[#allocation10 + $0x10] sm:$0xf]
    %v4085 = vld [vmem:[#allocation10 + $0x14] sm:$0xf]
    %v4086 = vld [vmem:[#allocation10 + $0x18] sm:$0xf]
    %v4087 = vld [vmem:[#allocation10 + $0x1c] sm:$0xf]
    %v4088 = vld [vmem:[#allocation10 + $0x20] sm:$0xf]
    %v4089 = vld [vmem:[#allocation10 + $0x24] sm:$0xf]
    %v4090 = vld [vmem:[#allocation10 + $0x28] sm:$0xf]
    %v4091 = vld [vmem:[#allocation10 + $0x2c] sm:$0xf]
    %v4092 = vld [vmem:[#allocation10 + $0x30] sm:$0xf]
    %v4093 = vld [vmem:[#allocation10 + $0x34] sm:$0xf]
    %v4094 = vld [vmem:[#allocation10 + $0x38] sm:$0xf]
    %v4095 = vld [vmem:[#allocation10 + $0x3c] sm:$0xf]
    %v4096 = vld [vmem:[#allocation10 + $0x40] sm:$0xf]
    %v4097 = vld [vmem:[#allocation10 + $0x44] sm:$0xf]
    %v4098 = vld [vmem:[#allocation10 + $0x48] sm:$0xf]
    %v4099 = vld [vmem:[#allocation10 + $0x4c] sm:$0xf]
    %v4100 = vld [vmem:[#allocation10 + $0x50] sm:$0xf]
    %v4101 = vld [vmem:[#allocation10 + $0x54] sm:$0xf]
    %v4102 = vld [vmem:[#allocation10 + $0x58] sm:$0xf]
    %v4103 = vld [vmem:[#allocation10 + $0x5c] sm:$0xf]
    %v4104 = vld [vmem:[#allocation10 + $0x60] sm:$0xf]
    %v4105 = vld [vmem:[#allocation10 + $0x64] sm:$0xf]
    %v4106 = vld [vmem:[#allocation10 + $0x68] sm:$0xf]
    %v4107 = vld [vmem:[#allocation10 + $0x6c] sm:$0xf]
    %v4108 = vld [vmem:[#allocation10 + $0x70] sm:$0xf]
    %v4109 = vld [vmem:[#allocation10 + $0x74] sm:$0xf]
    %v4110 = vld [vmem:[#allocation10 + $0x78] sm:$0xf]
    %v4111 = vld [vmem:[#allocation10 + $0x7c] sm:$0xf]
    %v4112 = vld [vmem:[%s12] sm:$0x1]
    %v4114 = vlaneseq
    %v4115 = vshrl.u32 %v4114, 7
    %v4116 = vsub.s32 0, %v4115
    %v4117 = vrot.slane %v4112, %v4116
    %v4151 = vunpack.c.l.b16 %v4080
    %v4152 = vunpack.c.l.b16 %v4081
    %v4153 = vunpack.c.l.b16 %v4082
    %v4154 = vunpack.c.l.b16 %v4083
    %v4155 = vunpack.c.l.b16 %v4084
    %v4156 = vunpack.c.l.b16 %v4085
    %v4157 = vunpack.c.l.b16 %v4086
    %v4158 = vunpack.c.l.b16 %v4087
    %v4159 = vunpack.c.l.b16 %v4088
    %v4160 = vunpack.c.l.b16 %v4089
    %v4161 = vunpack.c.l.b16 %v4090
    %v4162 = vunpack.c.l.b16 %v4091
    %v4163 = vunpack.c.l.b16 %v4092
    %v4164 = vunpack.c.l.b16 %v4093
    %v4165 = vunpack.c.l.b16 %v4094
    %v4166 = vunpack.c.l.b16 %v4095
    %v4167 = vunpack.c.l.b16 %v4096
    %v4168 = vunpack.c.l.b16 %v4097
    %v4169 = vunpack.c.l.b16 %v4098
    %v4170 = vunpack.c.l.b16 %v4099
    %v4171 = vunpack.c.l.b16 %v4100
    %v4172 = vunpack.c.l.b16 %v4101
    %v4173 = vunpack.c.l.b16 %v4102
    %v4174 = vunpack.c.l.b16 %v4103
    %v4175 = vunpack.c.l.b16 %v4104
    %v4176 = vunpack.c.l.b16 %v4105
    %v4177 = vunpack.c.l.b16 %v4106
    %v4178 = vunpack.c.l.b16 %v4107
    %v4179 = vunpack.c.l.b16 %v4108
    %v4180 = vunpack.c.l.b16 %v4109
    %v4181 = vunpack.c.l.b16 %v4110
    %v4182 = vunpack.c.l.b16 %v4111
    %v4183 = vpack.c.b16 %v4152, %v4151
    %v4184 = vpack.c.b16 %v4154, %v4153
    %v4185 = vpack.c.b16 %v4156, %v4155
    %v4186 = vpack.c.b16 %v4158, %v4157
    %v4187 = vpack.c.b16 %v4160, %v4159
    %v4188 = vpack.c.b16 %v4162, %v4161
    %v4189 = vpack.c.b16 %v4164, %v4163
    %v4190 = vpack.c.b16 %v4166, %v4165
    %v4191 = vpack.c.b16 %v4168, %v4167
    %v4192 = vpack.c.b16 %v4170, %v4169
    %v4193 = vpack.c.b16 %v4172, %v4171
    %v4194 = vpack.c.b16 %v4174, %v4173
    %v4195 = vpack.c.b16 %v4176, %v4175
    %v4196 = vpack.c.b16 %v4178, %v4177
    %v4197 = vpack.c.b16 %v4180, %v4179
    %v4198 = vpack.c.b16 %v4182, %v4181
    %4215 = vmatprep.subr.bf16.mxu0 0
    %4216 = vmatpush1.bf16.msra.mxu0 %v4190
    %4217 = vmatprep.subr.bf16.mxu0 0
    %4218 = vmatpush1.bf16.msra.mxu0 %v4189
    %4219 = vmatprep.subr.bf16.mxu0 0
    %4220 = vmatpush1.bf16.msra.mxu0 %v4188
    %4221 = vmatprep.subr.bf16.mxu0 0
    %4222 = vmatpush1.bf16.msra.mxu0 %v4187
    %4223 = vmatprep.subr.bf16.mxu0 0
    %4224 = vmatpush1.bf16.msra.mxu0 %v4186
    %4225 = vmatprep.subr.bf16.mxu0 0
    %4226 = vmatpush1.bf16.msra.mxu0 %v4185
    %4227 = vmatprep.subr.bf16.mxu0 0
    %4228 = vmatpush1.bf16.msra.mxu0 %v4184
    %4229 = vmatprep.subr.bf16.mxu0 0
    %4230 = vmatpush1.bf16.msra.mxu0 %v4183
    %4231 = vmatprep.subr.bf16.mxu0 0
    %4232 = vmatpush2.bf16.msra.mxu0 %v4198
    %4233 = vmatprep.subr.bf16.mxu0 0
    %4234 = vmatpush2.bf16.msra.mxu0 %v4197
    %4235 = vmatprep.subr.bf16.mxu0 0
    %4236 = vmatpush2.bf16.msra.mxu0 %v4196
    %4237 = vmatprep.subr.bf16.mxu0 0
    %4238 = vmatpush2.bf16.msra.mxu0 %v4195
    %4239 = vmatprep.subr.bf16.mxu0 0
    %4240 = vmatpush2.bf16.msra.mxu0 %v4194
    %4241 = vmatprep.subr.bf16.mxu0 0
    %4242 = vmatpush2.bf16.msra.mxu0 %v4193
    %4243 = vmatprep.subr.bf16.mxu0 0
    %4244 = vmatpush2.bf16.msra.mxu0 %v4192
    %4245 = vmatprep.subr.bf16.mxu0 0
    %4246 = vmatpush2.bf16.msra.mxu0 %v4191
    %4247 = vmatprep.mubr.bf16.mxu0 %v4065
    %4248 = vmatmul.mubr.bf16.gmra.mxu0 %v4064
    %v4249 = vpop.f32.mrf.mxu0
    %v4250 = vadd.f32 %v4117, %v4249
    %v4251 = vpop.f32.mrf.mxu0
    %v4252 = vpop.f32.mrf.mxu0
    %v4253 = vadd.f32 %v4117, %v4252
    %v4254 = vpop.f32.mrf.mxu0
    %4255 = vmatprep.mubr.bf16.mxu0 %v4067
    %4256 = vmatmul.mubr.bf16.gmra.mxu0 %v4066
    %v4257 = vpop.f32.mrf.mxu0
    %v4258 = vadd.f32 %v4117, %v4257
    %v4259 = vpop.f32.mrf.mxu0
    %v4260 = vpop.f32.mrf.mxu0
    %v4261 = vadd.f32 %v4117, %v4260
    %v4262 = vpop.f32.mrf.mxu0
    %4263 = vmatprep.mubr.bf16.mxu0 %v4069
    %4264 = vmatmul.mubr.bf16.gmra.mxu0 %v4068
    %v4265 = vpop.f32.mrf.mxu0
    %v4266 = vadd.f32 %v4117, %v4265
    %v4267 = vpop.f32.mrf.mxu0
    %v4268 = vpop.f32.mrf.mxu0
    %v4269 = vadd.f32 %v4117, %v4268
    %v4270 = vpop.f32.mrf.mxu0
    %4271 = vmatprep.mubr.bf16.mxu0 %v4071
    %4272 = vmatmul.mubr.bf16.gmra.mxu0 %v4070
    %v4273 = vpop.f32.mrf.mxu0
    %v4274 = vadd.f32 %v4117, %v4273
    %v4275 = vpop.f32.mrf.mxu0
    %v4276 = vpop.f32.mrf.mxu0
    %v4277 = vadd.f32 %v4117, %v4276
    %v4278 = vpop.f32.mrf.mxu0
    %4279 = vmatprep.mubr.bf16.mxu0 %v4073
    %4280 = vmatmul.mubr.bf16.gmra.mxu0 %v4072
    %v4281 = vpop.f32.mrf.mxu0
    %v4282 = vadd.f32 %v4117, %v4281
    %v4283 = vpop.f32.mrf.mxu0
    %v4284 = vpop.f32.mrf.mxu0
    %v4285 = vadd.f32 %v4117, %v4284
    %v4286 = vpop.f32.mrf.mxu0
    %4287 = vmatprep.mubr.bf16.mxu0 %v4075
    %4288 = vmatmul.mubr.bf16.gmra.mxu0 %v4074
    %v4289 = vpop.f32.mrf.mxu0
    %v4290 = vadd.f32 %v4117, %v4289
    %v4291 = vpop.f32.mrf.mxu0
    %v4292 = vpop.f32.mrf.mxu0
    %v4293 = vadd.f32 %v4117, %v4292
    %v4294 = vpop.f32.mrf.mxu0
    %4295 = vmatprep.mubr.bf16.mxu0 %v4077
    %4296 = vmatmul.mubr.bf16.gmra.mxu0 %v4076
    %v4297 = vpop.f32.mrf.mxu0
    %v4298 = vadd.f32 %v4117, %v4297
    %v4299 = vpop.f32.mrf.mxu0
    %v4300 = vpop.f32.mrf.mxu0
    %v4301 = vadd.f32 %v4117, %v4300
    %v4302 = vpop.f32.mrf.mxu0
    %4303 = vmatprep.mubr.bf16.mxu0 %v4079
    %4304 = vmatmul.mubr.bf16.gmra.mxu0 %v4078
    %v4305 = vpop.f32.mrf.mxu0
    %v4306 = vadd.f32 %v4117, %v4305
    %v4307 = vpop.f32.mrf.mxu0
    %v4308 = vpop.f32.mrf.mxu0
    %v4309 = vadd.f32 %v4117, %v4308
    %v4310 = vpop.f32.mrf.mxu0
    %4311 = vdwg.mxu0
    %4312 = vst [vmem:[%s13] sm:$0xff] %v4250
    %4313 = vst [vmem:[%s13 + $0x8] sm:$0xff] %v4253
    %4314 = vst [vmem:[%s13 + $0x10] sm:$0xff] %v4258
    %4315 = vst [vmem:[%s13 + $0x18] sm:$0xff] %v4261
    %4316 = vst [vmem:[%s13 + $0x20] sm:$0xff] %v4266
    %4317 = vst [vmem:[%s13 + $0x28] sm:$0xff] %v4269
    %4318 = vst [vmem:[%s13 + $0x30] sm:$0xff] %v4274
    %4319 = vst [vmem:[%s13 + $0x38] sm:$0xff] %v4277
    %4320 = vst [vmem:[%s13 + $0x40] sm:$0xff] %v4282
    %4321 = vst [vmem:[%s13 + $0x48] sm:$0xff] %v4285
    %4322 = vst [vmem:[%s13 + $0x50] sm:$0xff] %v4290
    %4323 = vst [vmem:[%s13 + $0x58] sm:$0xff] %v4293
    %4324 = vst [vmem:[%s13 + $0x60] sm:$0xff] %v4298
    %4325 = vst [vmem:[%s13 + $0x68] sm:$0xff] %v4301
    %4326 = vst [vmem:[%s13 + $0x70] sm:$0xff] %v4306
    %4327 = vst [vmem:[%s13 + $0x78] sm:$0xff] %v4309
    // Predicated region
    $region74: #{dqn_forward.1} parent=1 // pred_check
      _
    $region75: #{dqn_forward.1} parent=1 // pred_check_branch
      %4329 = sbr.rel (0) target = $region77
    $region76: #{dqn_forward.1} parent=1 // pred_region
      _
    $region77: #{dqn_forward.1} parent=1 // pred_fallthru
      _
    // Predicated region
    $region78: #{dqn_forward.1} parent=1 // pred_check
      _
    $region79: #{dqn_forward.1} parent=1 // pred_check_branch
      %4331 = sbr.rel (0) target = $region81
    $region80: #{dqn_forward.1} parent=1 // pred_region
      _
    $region81: #{dqn_forward.1} parent=1 // pred_fallthru
      _
    %4332 = vsyncpa [#allocation4], 1
    %4333 = vsyncpa [#allocation6], 1
    %4334 = vsyncpa [#allocation9], 1

</llo_original>
